<compile_context>
chip_gen: v7x
topology: tpu7x:2x2x1
jax: 0.10.0
libtpu: 0.0.40
codegen_flags: <defaults>
</compile_context>

<pallas_src>
import functools

import jax
import jax.numpy as jnp
import numpy as np
from jax.experimental import pallas as pl
from jax.experimental.pallas import tpu as pltpu


def _attention_kernel(x_ref, wqkv_ref, wout_ref, bout_ref, o_ref,
                      *, heads: int, dim_head: int):
    """Fused RMSNorm + 1x1-conv QKV + MHA + 1x1-conv out for one batch element.

    Ref shapes (per grid step, batch dim squeezed):
      x_ref:    (C, N)                channels-first, N = H*W lane-dense
      wqkv_ref: (3*heads*dim_head, C) g*sqrt(C) and 1/sqrt(d) already folded in
      wout_ref: (C, heads*dim_head)
      bout_ref: (C, 1)
      o_ref:    (C, N)
    """
    x = x_ref[...]                                        # (C, N) f32
    c, n = x.shape
    hid = heads * dim_head

    # ---- RMSNorm over channels (sublane reduce). g * sqrt(C) is folded into
    #      wqkv in the wrapper, so only the (1, N) inverse-norm multiply remains.
    sq = jnp.sum(x * x, axis=0, keepdims=True)            # (1, N)
    xn = x * jax.lax.rsqrt(jnp.maximum(sq, 1e-24))        # == x / max(||x||, 1e-12)

    wqkv = wqkv_ref[...]                                  # (3*hid, C)
    wout = wout_ref[...]                                  # (C, hid)

    y = jnp.zeros((c, n), dtype=jnp.float32)              # (C, N) out-proj accumulator

    # Static 4-head loop; per-head working set is dominated by one (N, N) score
    # tile. Row slices of wqkv are free sublane slices.
    # TODO(synk): for many heads / large N, promote heads to an "arbitrary" grid
    # axis with a resident output block (pl.when init/finalize) to bound live
    # ranges explicitly.
    for h in range(heads):
        q0 = h * dim_head

        # Per-head on-demand QKV projection on the MXU (K = C = 4).
        qh = jnp.dot(wqkv[q0:q0 + dim_head, :], xn,
                     preferred_element_type=jnp.float32)                  # (d, N)
        kh = jnp.dot(wqkv[hid + q0:hid + q0 + dim_head, :], xn,
                     preferred_element_type=jnp.float32)                  # (d, N)
        vh = jnp.dot(wqkv[2 * hid + q0:2 * hid + q0 + dim_head, :], xn,
                     preferred_element_type=jnp.float32)                  # (d, N)

        # Small (d, N) -> (N, d) transposes (8 vregs each through the XLU); the
        # (N, N) tile itself is never transposed. bf16 feeds the bf16 MXU.
        qh_t = jnp.transpose(qh).astype(jnp.bfloat16)                     # (N, d)
        vh_t = jnp.transpose(vh).astype(jnp.bfloat16)                     # (N, d)

        # Scores: the 1/sqrt(d) scale is already folded into the q rows of wqkv.
        sim = jnp.dot(qh_t, kh.astype(jnp.bfloat16),
                      preferred_element_type=jnp.float32)                 # (N, N)

        m = jnp.max(sim, axis=-1, keepdims=True)                          # (N, 1)
        p = jnp.exp(sim - m)                                              # (N, N)
        inv_denom = pl.reciprocal(jnp.sum(p, axis=-1, keepdims=True),
                                  approx=True)                            # (N, 1)

        # Unnormalized attn @ V in bf16; softmax normalization deferred to the
        # small (N, d) result instead of the (N, N) probability tile.
        oh_t = jnp.dot(p.astype(jnp.bfloat16), vh_t,
                       preferred_element_type=jnp.float32)                # (N, d)
        oh_t = oh_t * inv_denom                                           # (N, d)

        # Per-head out-projection accumulation, channels-first (no head concat).
        oh = jnp.transpose(oh_t)                                          # (d, N)
        y = y + jnp.dot(wout[:, q0:q0 + dim_head], oh,
                        preferred_element_type=jnp.float32)               # (C, N)

    o_ref[...] = (y + bout_ref[...]).astype(o_ref.dtype)


def attention_forward(x_nchw, g, wqkv, wout, bout, *, heads: int, dim_head: int):
    """x_nchw: (B, C, H, W) float32.  Returns (B, C, H, W)."""
    b, c, h, w = x_nchw.shape
    n = h * w
    hid = heads * dim_head

    # NCHW flattened IS the channels-first token layout (B, C, N): no transpose,
    # and the token axis (N = 256 = 2*128) is lane-dense for both input and output.
    x_flat = x_nchw.reshape(b, c, n)

    # Parameter folds (tiny one-off wrapper ops on the (3*hid, C) weight):
    #   * RMSNorm's per-channel g * sqrt(C) factor folds into the wqkv columns,
    #   * the 1/sqrt(dim_head) attention scale folds into the q rows,
    # so the kernel never multiplies a full (C, N) or (N, N) tile by either.
    g_fold = g.reshape(-1) * (float(c) ** 0.5)                      # (C,)
    wqkv_eff = wqkv * g_fold[None, :]
    wqkv_eff = wqkv_eff.at[:hid].multiply(float(dim_head) ** -0.5)

    bout2 = bout.reshape(c, 1)

    kernel = functools.partial(_attention_kernel, heads=heads, dim_head=dim_head)

    y_flat = pl.pallas_call(
        kernel,
        out_shape=jax.ShapeDtypeStruct((b, c, n), jnp.float32),
        grid_spec=pltpu.PrefetchScalarGridSpec(
            num_scalar_prefetch=0,
            grid=(b,),
            in_specs=[
                pl.BlockSpec((pl.Squeezed(), c, n), lambda i: (i, 0, 0)),  # x
                pl.BlockSpec((3 * hid, c), lambda i: (0, 0)),              # wqkv (folded)
                pl.BlockSpec((c, hid), lambda i: (0, 0)),                  # wout
                pl.BlockSpec((c, 1), lambda i: (0, 0)),                    # bout
            ],
            out_specs=pl.BlockSpec((pl.Squeezed(), c, n), lambda i: (i, 0, 0)),
        ),
        compiler_params=pltpu.CompilerParams(
            dimension_semantics=("parallel",),
            # Working set is ~1.5 MiB (one (N,N) f32 score tile + its bf16 copy +
            # small per-head tensors + double-buffered 4 KiB x/out blocks); 16 MiB
            # leaves ample headroom and stays at <= 1/4 of v7x physical VMEM.
            vmem_limit_bytes=16 * 1024 * 1024,
        ),
    )(x_flat, wqkv_eff, wout, bout2)

    # TODO(synk): for large spatial sizes (N >~ 1.5-2K, especially v7x's 64 MiB
    # VMEM) replace the per-head (N, N) score tile with a KV-tiled online-softmax
    # (flash) loop, and when B is 1/odd add a second "parallel" grid axis (query
    # tiles) so both v7x TensorCores stay busy.

    # (B, C, N) -> NCHW is just a reshape (no data movement).
    return y_flat.reshape(b, c, h, w)


def attention_reference(x, g, wqkv, wout, bout, *, heads: int, dim_head: int):
    """Pure-JAX reference mirroring the PyTorch module (exact f32 math)."""
    b, c, h, w = x.shape
    l2 = jnp.sqrt(jnp.sum(x * x, axis=1, keepdims=True))
    xn = x / jnp.maximum(l2, 1e-12) * g.reshape(1, c, 1, 1) * (float(c) ** 0.5)
    qkv = jnp.einsum('bchw,oc->bohw', xn, wqkv)
    q, k, v = jnp.split(qkv, 3, axis=1)

    def to_heads(a):
        return a.reshape(b, heads, dim_head, h * w).transpose(0, 1, 3, 2)

    q, k, v = to_heads(q), to_heads(k), to_heads(v)
    scale = float(dim_head) ** -0.5
    sim = jnp.einsum('bhid,bhjd->bhij', q, k) * scale
    attn = jax.nn.softmax(sim, axis=-1)
    out = jnp.einsum('bhij,bhjd->bhid', attn, v)
    out = out.transpose(0, 1, 3, 2).reshape(b, heads * dim_head, h, w)
    return jnp.einsum('bchw,oc->bohw', out, wout) + bout.reshape(1, -1, 1, 1)


if __name__ == "__main__":
    # Module config (matches Attention(dim=4, heads=4, dim_head=32))
    dim = 4
    heads = 4
    dim_head = 32
    hidden = heads * dim_head

    B, H, W = 2, 16, 16

    key = jax.random.PRNGKey(0)
    kx, kg, kqkv, kwout, kbout = jax.random.split(key, 5)

    x = jax.random.normal(kx, (B, dim, H, W), dtype=jnp.float32)

    # Parameters (deterministic init; conv 1x1 weights squeezed to 2-D).
    # g is non-trivial so the wrapper-side g fold is actually exercised.
    g = 1.0 + 0.1 * jax.random.normal(kg, (dim,), jnp.float32)             # RMSNorm.g
    wqkv = 0.05 * jax.random.normal(kqkv, (3 * hidden, dim), jnp.float32)  # to_qkv.weight
    wout = 0.05 * jax.random.normal(kwout, (dim, hidden), jnp.float32)     # to_out.weight
    bout = 0.05 * jax.random.normal(kbout, (dim,), jnp.float32)            # to_out.bias

    y = attention_forward(x, g, wqkv, wout, bout, heads=heads, dim_head=dim_head)
    y = jax.block_until_ready(y)

    y_ref = attention_reference(x, g, wqkv, wout, bout, heads=heads, dim_head=dim_head)
    # bf16 MXU inputs (q/k/v and the unnormalized softmax probabilities) plus the
    # EUP approx-reciprocal denominator give ~1e-3-level deviations vs the exact
    # f32 reference.
    np.testing.assert_allclose(np.asarray(y), np.asarray(y_ref), rtol=1e-2, atol=1e-2)

    print("KERNEL_OK")
</pallas_src>

<mosaic_0001>
module attributes {stable_mosaic.version = 11 : i64} {
  func.func @_attention_kernel(%arg0: i32, %arg1: memref<1x4x256xf32, #tpu.memory_space<vmem>>, %arg2: memref<384x4xf32, #tpu.memory_space<vmem>>, %arg3: memref<4x128xf32, #tpu.memory_space<vmem>>, %arg4: memref<4x1xf32, #tpu.memory_space<vmem>>, %arg5: memref<1x4x256xf32, #tpu.memory_space<vmem>>) attributes {dimension_semantics = [#tpu.dimension_semantics<parallel>], iteration_bounds = array<i64: 2>, scalar_prefetch = 0 : i64, scratch_operands = 0 : i64, tpu.core_type = #tpu.core_type<tc>, window_params = [{transform_indices = @transform_0, window_bounds = array<i64: 1, 4, 256>}, {pipeline_mode = #tpu.pipeline_mode<synchronous>, transform_indices = @transform_1, window_bounds = array<i64: 384, 4>}, {pipeline_mode = #tpu.pipeline_mode<synchronous>, transform_indices = @transform_2, window_bounds = array<i64: 4, 128>}, {pipeline_mode = #tpu.pipeline_mode<synchronous>, transform_indices = @transform_3, window_bounds = array<i64: 4, 1>}, {transform_indices = @transform_4, window_bounds = array<i64: 1, 4, 256>}]} {
    %c0 = arith.constant 0 : index
    %c0_0 = arith.constant 0 : index
    %c0_1 = arith.constant 0 : index
    %0 = vector.load %arg1[%c0, %c0_0, %c0_1] : memref<1x4x256xf32, #tpu.memory_space<vmem>>, vector<1x4x256xf32>
    %1 = vector.shape_cast %0 : vector<1x4x256xf32> to vector<4x256xf32>
    %2 = arith.mulf %1, %1 : vector<4x256xf32>
    %cst = arith.constant dense<0.000000e+00> : vector<256xf32>
    %3 = vector.multi_reduction <add>, %2, %cst [0] : vector<4x256xf32> to vector<256xf32>
    %4 = vector.shape_cast %3 : vector<256xf32> to vector<1x256xf32>
    %cst_2 = arith.constant 1.000000e-24 : f32
    %5 = vector.broadcast %cst_2 : f32 to vector<1x256xf32>
    %6 = arith.maximumf %4, %5 : vector<1x256xf32>
    %7 = math.rsqrt %6 : vector<1x256xf32>
    %8 = vector.broadcast %7 : vector<1x256xf32> to vector<4x256xf32>
    %9 = arith.mulf %1, %8 : vector<4x256xf32>
    %c0_3 = arith.constant 0 : index
    %c0_4 = arith.constant 0 : index
    %10 = vector.load %arg2[%c0_3, %c0_4] : memref<384x4xf32, #tpu.memory_space<vmem>>, vector<384x4xf32>
    %c0_5 = arith.constant 0 : index
    %c0_6 = arith.constant 0 : index
    %11 = vector.load %arg3[%c0_5, %c0_6] : memref<4x128xf32, #tpu.memory_space<vmem>>, vector<4x128xf32>
    %cst_7 = arith.constant 0.000000e+00 : f32
    %12 = vector.broadcast %cst_7 : f32 to vector<4x256xf32>
    %13 = vector.extract_strided_slice %10 {offsets = [0, 0], sizes = [32, 4], strides = [1, 1]} : vector<384x4xf32> to vector<32x4xf32>
    %cst_8 = arith.constant dense<0.000000e+00> : vector<32x256xf32>
    %14 = tpu.matmul %13, %9, %cst_8 {dimension_numbers = #tpu.dot_dimension_numbers<[1], [0], [0], [1], [0, 0, 1, 1], [], []>} : vector<32x4xf32>, vector<4x256xf32>, vector<32x256xf32> -> vector<32x256xf32>
    %15 = vector.extract_strided_slice %10 {offsets = [128, 0], sizes = [32, 4], strides = [1, 1]} : vector<384x4xf32> to vector<32x4xf32>
    %cst_9 = arith.constant dense<0.000000e+00> : vector<32x256xf32>
    %16 = tpu.matmul %15, %9, %cst_9 {dimension_numbers = #tpu.dot_dimension_numbers<[1], [0], [0], [1], [0, 0, 1, 1], [], []>} : vector<32x4xf32>, vector<4x256xf32>, vector<32x256xf32> -> vector<32x256xf32>
    %17 = vector.extract_strided_slice %10 {offsets = [256, 0], sizes = [32, 4], strides = [1, 1]} : vector<384x4xf32> to vector<32x4xf32>
    %cst_10 = arith.constant dense<0.000000e+00> : vector<32x256xf32>
    %18 = tpu.matmul %17, %9, %cst_10 {dimension_numbers = #tpu.dot_dimension_numbers<[1], [0], [0], [1], [0, 0, 1, 1], [], []>} : vector<32x4xf32>, vector<4x256xf32>, vector<32x256xf32> -> vector<32x256xf32>
    %19 = tpu.transpose %14, [1, 0] : vector<32x256xf32> -> vector<256x32xf32>
    %20 = arith.truncf %19 : vector<256x32xf32> to vector<256x32xbf16>
    %21 = tpu.transpose %18, [1, 0] : vector<32x256xf32> -> vector<256x32xf32>
    %22 = arith.truncf %21 : vector<256x32xf32> to vector<256x32xbf16>
    %23 = arith.truncf %16 : vector<32x256xf32> to vector<32x256xbf16>
    %cst_11 = arith.constant dense<0.000000e+00> : vector<256x256xf32>
    %24 = tpu.matmul %20, %23, %cst_11 {dimension_numbers = #tpu.dot_dimension_numbers<[1], [0], [0], [1], [0, 0, 1, 1], [], []>} : vector<256x32xbf16>, vector<32x256xbf16>, vector<256x256xf32> -> vector<256x256xf32>
    %cst_12 = arith.constant dense<0xFF800000> : vector<256xf32>
    %25 = vector.multi_reduction <maximumf>, %24, %cst_12 [1] : vector<256x256xf32> to vector<256xf32>
    %26 = vector.shape_cast %25 : vector<256xf32> to vector<256x1xf32>
    %27 = vector.broadcast %26 : vector<256x1xf32> to vector<256x256xf32>
    %28 = arith.subf %24, %27 : vector<256x256xf32>
    %29 = math.exp %28 : vector<256x256xf32>
    %cst_13 = arith.constant dense<0.000000e+00> : vector<256xf32>
    %30 = vector.multi_reduction <add>, %29, %cst_13 [1] : vector<256x256xf32> to vector<256xf32>
    %31 = vector.shape_cast %30 : vector<256xf32> to vector<256x1xf32>
    %32 = tpu.reciprocal %31 {approx = true} : vector<256x1xf32> -> vector<256x1xf32>
    %33 = arith.truncf %29 : vector<256x256xf32> to vector<256x256xbf16>
    %cst_14 = arith.constant dense<0.000000e+00> : vector<256x32xf32>
    %34 = tpu.matmul %33, %22, %cst_14 {dimension_numbers = #tpu.dot_dimension_numbers<[1], [0], [0], [1], [0, 0, 1, 1], [], []>} : vector<256x256xbf16>, vector<256x32xbf16>, vector<256x32xf32> -> vector<256x32xf32>
    %35 = vector.broadcast %32 : vector<256x1xf32> to vector<256x32xf32>
    %36 = arith.mulf %34, %35 : vector<256x32xf32>
    %37 = tpu.transpose %36, [1, 0] : vector<256x32xf32> -> vector<32x256xf32>
    %38 = vector.extract_strided_slice %11 {offsets = [0, 0], sizes = [4, 32], strides = [1, 1]} : vector<4x128xf32> to vector<4x32xf32>
    %cst_15 = arith.constant dense<0.000000e+00> : vector<4x256xf32>
    %39 = tpu.matmul %38, %37, %cst_15 {dimension_numbers = #tpu.dot_dimension_numbers<[1], [0], [0], [1], [0, 0, 1, 1], [], []>} : vector<4x32xf32>, vector<32x256xf32>, vector<4x256xf32> -> vector<4x256xf32>
    %40 = arith.addf %12, %39 : vector<4x256xf32>
    %41 = vector.extract_strided_slice %10 {offsets = [32, 0], sizes = [32, 4], strides = [1, 1]} : vector<384x4xf32> to vector<32x4xf32>
    %cst_16 = arith.constant dense<0.000000e+00> : vector<32x256xf32>
    %42 = tpu.matmul %41, %9, %cst_16 {dimension_numbers = #tpu.dot_dimension_numbers<[1], [0], [0], [1], [0, 0, 1, 1], [], []>} : vector<32x4xf32>, vector<4x256xf32>, vector<32x256xf32> -> vector<32x256xf32>
    %43 = vector.extract_strided_slice %10 {offsets = [160, 0], sizes = [32, 4], strides = [1, 1]} : vector<384x4xf32> to vector<32x4xf32>
    %cst_17 = arith.constant dense<0.000000e+00> : vector<32x256xf32>
    %44 = tpu.matmul %43, %9, %cst_17 {dimension_numbers = #tpu.dot_dimension_numbers<[1], [0], [0], [1], [0, 0, 1, 1], [], []>} : vector<32x4xf32>, vector<4x256xf32>, vector<32x256xf32> -> vector<32x256xf32>
    %45 = vector.extract_strided_slice %10 {offsets = [288, 0], sizes = [32, 4], strides = [1, 1]} : vector<384x4xf32> to vector<32x4xf32>
    %cst_18 = arith.constant dense<0.000000e+00> : vector<32x256xf32>
    %46 = tpu.matmul %45, %9, %cst_18 {dimension_numbers = #tpu.dot_dimension_numbers<[1], [0], [0], [1], [0, 0, 1, 1], [], []>} : vector<32x4xf32>, vector<4x256xf32>, vector<32x256xf32> -> vector<32x256xf32>
    %47 = tpu.transpose %42, [1, 0] : vector<32x256xf32> -> vector<256x32xf32>
    %48 = arith.truncf %47 : vector<256x32xf32> to vector<256x32xbf16>
    %49 = tpu.transpose %46, [1, 0] : vector<32x256xf32> -> vector<256x32xf32>
    %50 = arith.truncf %49 : vector<256x32xf32> to vector<256x32xbf16>
    %51 = arith.truncf %44 : vector<32x256xf32> to vector<32x256xbf16>
    %cst_19 = arith.constant dense<0.000000e+00> : vector<256x256xf32>
    %52 = tpu.matmul %48, %51, %cst_19 {dimension_numbers = #tpu.dot_dimension_numbers<[1], [0], [0], [1], [0, 0, 1, 1], [], []>} : vector<256x32xbf16>, vector<32x256xbf16>, vector<256x256xf32> -> vector<256x256xf32>
    %cst_20 = arith.constant dense<0xFF800000> : vector<256xf32>
    %53 = vector.multi_reduction <maximumf>, %52, %cst_20 [1] : vector<256x256xf32> to vector<256xf32>
    %54 = vector.shape_cast %53 : vector<256xf32> to vector<256x1xf32>
    %55 = vector.broadcast %54 : vector<256x1xf32> to vector<256x256xf32>
    %56 = arith.subf %52, %55 : vector<256x256xf32>
    %57 = math.exp %56 : vector<256x256xf32>
    %cst_21 = arith.constant dense<0.000000e+00> : vector<256xf32>
    %58 = vector.multi_reduction <add>, %57, %cst_21 [1] : vector<256x256xf32> to vector<256xf32>
    %59 = vector.shape_cast %58 : vector<256xf32> to vector<256x1xf32>
    %60 = tpu.reciprocal %59 {approx = true} : vector<256x1xf32> -> vector<256x1xf32>
    %61 = arith.truncf %57 : vector<256x256xf32> to vector<256x256xbf16>
    %cst_22 = arith.constant dense<0.000000e+00> : vector<256x32xf32>
    %62 = tpu.matmul %61, %50, %cst_22 {dimension_numbers = #tpu.dot_dimension_numbers<[1], [0], [0], [1], [0, 0, 1, 1], [], []>} : vector<256x256xbf16>, vector<256x32xbf16>, vector<256x32xf32> -> vector<256x32xf32>
    %63 = vector.broadcast %60 : vector<256x1xf32> to vector<256x32xf32>
    %64 = arith.mulf %62, %63 : vector<256x32xf32>
    %65 = tpu.transpose %64, [1, 0] : vector<256x32xf32> -> vector<32x256xf32>
    %66 = vector.extract_strided_slice %11 {offsets = [0, 32], sizes = [4, 32], strides = [1, 1]} : vector<4x128xf32> to vector<4x32xf32>
    %cst_23 = arith.constant dense<0.000000e+00> : vector<4x256xf32>
    %67 = tpu.matmul %66, %65, %cst_23 {dimension_numbers = #tpu.dot_dimension_numbers<[1], [0], [0], [1], [0, 0, 1, 1], [], []>} : vector<4x32xf32>, vector<32x256xf32>, vector<4x256xf32> -> vector<4x256xf32>
    %68 = arith.addf %40, %67 : vector<4x256xf32>
    %69 = vector.extract_strided_slice %10 {offsets = [64, 0], sizes = [32, 4], strides = [1, 1]} : vector<384x4xf32> to vector<32x4xf32>
    %cst_24 = arith.constant dense<0.000000e+00> : vector<32x256xf32>
    %70 = tpu.matmul %69, %9, %cst_24 {dimension_numbers = #tpu.dot_dimension_numbers<[1], [0], [0], [1], [0, 0, 1, 1], [], []>} : vector<32x4xf32>, vector<4x256xf32>, vector<32x256xf32> -> vector<32x256xf32>
    %71 = vector.extract_strided_slice %10 {offsets = [192, 0], sizes = [32, 4], strides = [1, 1]} : vector<384x4xf32> to vector<32x4xf32>
    %cst_25 = arith.constant dense<0.000000e+00> : vector<32x256xf32>
    %72 = tpu.matmul %71, %9, %cst_25 {dimension_numbers = #tpu.dot_dimension_numbers<[1], [0], [0], [1], [0, 0, 1, 1], [], []>} : vector<32x4xf32>, vector<4x256xf32>, vector<32x256xf32> -> vector<32x256xf32>
    %73 = vector.extract_strided_slice %10 {offsets = [320, 0], sizes = [32, 4], strides = [1, 1]} : vector<384x4xf32> to vector<32x4xf32>
    %cst_26 = arith.constant dense<0.000000e+00> : vector<32x256xf32>
    %74 = tpu.matmul %73, %9, %cst_26 {dimension_numbers = #tpu.dot_dimension_numbers<[1], [0], [0], [1], [0, 0, 1, 1], [], []>} : vector<32x4xf32>, vector<4x256xf32>, vector<32x256xf32> -> vector<32x256xf32>
    %75 = tpu.transpose %70, [1, 0] : vector<32x256xf32> -> vector<256x32xf32>
    %76 = arith.truncf %75 : vector<256x32xf32> to vector<256x32xbf16>
    %77 = tpu.transpose %74, [1, 0] : vector<32x256xf32> -> vector<256x32xf32>
    %78 = arith.truncf %77 : vector<256x32xf32> to vector<256x32xbf16>
    %79 = arith.truncf %72 : vector<32x256xf32> to vector<32x256xbf16>
    %cst_27 = arith.constant dense<0.000000e+00> : vector<256x256xf32>
    %80 = tpu.matmul %76, %79, %cst_27 {dimension_numbers = #tpu.dot_dimension_numbers<[1], [0], [0], [1], [0, 0, 1, 1], [], []>} : vector<256x32xbf16>, vector<32x256xbf16>, vector<256x256xf32> -> vector<256x256xf32>
    %cst_28 = arith.constant dense<0xFF800000> : vector<256xf32>
    %81 = vector.multi_reduction <maximumf>, %80, %cst_28 [1] : vector<256x256xf32> to vector<256xf32>
    %82 = vector.shape_cast %81 : vector<256xf32> to vector<256x1xf32>
    %83 = vector.broadcast %82 : vector<256x1xf32> to vector<256x256xf32>
    %84 = arith.subf %80, %83 : vector<256x256xf32>
    %85 = math.exp %84 : vector<256x256xf32>
    %cst_29 = arith.constant dense<0.000000e+00> : vector<256xf32>
    %86 = vector.multi_reduction <add>, %85, %cst_29 [1] : vector<256x256xf32> to vector<256xf32>
    %87 = vector.shape_cast %86 : vector<256xf32> to vector<256x1xf32>
    %88 = tpu.reciprocal %87 {approx = true} : vector<256x1xf32> -> vector<256x1xf32>
    %89 = arith.truncf %85 : vector<256x256xf32> to vector<256x256xbf16>
    %cst_30 = arith.constant dense<0.000000e+00> : vector<256x32xf32>
    %90 = tpu.matmul %89, %78, %cst_30 {dimension_numbers = #tpu.dot_dimension_numbers<[1], [0], [0], [1], [0, 0, 1, 1], [], []>} : vector<256x256xbf16>, vector<256x32xbf16>, vector<256x32xf32> -> vector<256x32xf32>
    %91 = vector.broadcast %88 : vector<256x1xf32> to vector<256x32xf32>
    %92 = arith.mulf %90, %91 : vector<256x32xf32>
    %93 = tpu.transpose %92, [1, 0] : vector<256x32xf32> -> vector<32x256xf32>
    %94 = vector.extract_strided_slice %11 {offsets = [0, 64], sizes = [4, 32], strides = [1, 1]} : vector<4x128xf32> to vector<4x32xf32>
    %cst_31 = arith.constant dense<0.000000e+00> : vector<4x256xf32>
    %95 = tpu.matmul %94, %93, %cst_31 {dimension_numbers = #tpu.dot_dimension_numbers<[1], [0], [0], [1], [0, 0, 1, 1], [], []>} : vector<4x32xf32>, vector<32x256xf32>, vector<4x256xf32> -> vector<4x256xf32>
    %96 = arith.addf %68, %95 : vector<4x256xf32>
    %97 = vector.extract_strided_slice %10 {offsets = [96, 0], sizes = [32, 4], strides = [1, 1]} : vector<384x4xf32> to vector<32x4xf32>
    %cst_32 = arith.constant dense<0.000000e+00> : vector<32x256xf32>
    %98 = tpu.matmul %97, %9, %cst_32 {dimension_numbers = #tpu.dot_dimension_numbers<[1], [0], [0], [1], [0, 0, 1, 1], [], []>} : vector<32x4xf32>, vector<4x256xf32>, vector<32x256xf32> -> vector<32x256xf32>
    %99 = vector.extract_strided_slice %10 {offsets = [224, 0], sizes = [32, 4], strides = [1, 1]} : vector<384x4xf32> to vector<32x4xf32>
    %cst_33 = arith.constant dense<0.000000e+00> : vector<32x256xf32>
    %100 = tpu.matmul %99, %9, %cst_33 {dimension_numbers = #tpu.dot_dimension_numbers<[1], [0], [0], [1], [0, 0, 1, 1], [], []>} : vector<32x4xf32>, vector<4x256xf32>, vector<32x256xf32> -> vector<32x256xf32>
    %101 = vector.extract_strided_slice %10 {offsets = [352, 0], sizes = [32, 4], strides = [1, 1]} : vector<384x4xf32> to vector<32x4xf32>
    %cst_34 = arith.constant dense<0.000000e+00> : vector<32x256xf32>
    %102 = tpu.matmul %101, %9, %cst_34 {dimension_numbers = #tpu.dot_dimension_numbers<[1], [0], [0], [1], [0, 0, 1, 1], [], []>} : vector<32x4xf32>, vector<4x256xf32>, vector<32x256xf32> -> vector<32x256xf32>
    %103 = tpu.transpose %98, [1, 0] : vector<32x256xf32> -> vector<256x32xf32>
    %104 = arith.truncf %103 : vector<256x32xf32> to vector<256x32xbf16>
    %105 = tpu.transpose %102, [1, 0] : vector<32x256xf32> -> vector<256x32xf32>
    %106 = arith.truncf %105 : vector<256x32xf32> to vector<256x32xbf16>
    %107 = arith.truncf %100 : vector<32x256xf32> to vector<32x256xbf16>
    %cst_35 = arith.constant dense<0.000000e+00> : vector<256x256xf32>
    %108 = tpu.matmul %104, %107, %cst_35 {dimension_numbers = #tpu.dot_dimension_numbers<[1], [0], [0], [1], [0, 0, 1, 1], [], []>} : vector<256x32xbf16>, vector<32x256xbf16>, vector<256x256xf32> -> vector<256x256xf32>
    %cst_36 = arith.constant dense<0xFF800000> : vector<256xf32>
    %109 = vector.multi_reduction <maximumf>, %108, %cst_36 [1] : vector<256x256xf32> to vector<256xf32>
    %110 = vector.shape_cast %109 : vector<256xf32> to vector<256x1xf32>
    %111 = vector.broadcast %110 : vector<256x1xf32> to vector<256x256xf32>
    %112 = arith.subf %108, %111 : vector<256x256xf32>
    %113 = math.exp %112 : vector<256x256xf32>
    %cst_37 = arith.constant dense<0.000000e+00> : vector<256xf32>
    %114 = vector.multi_reduction <add>, %113, %cst_37 [1] : vector<256x256xf32> to vector<256xf32>
    %115 = vector.shape_cast %114 : vector<256xf32> to vector<256x1xf32>
    %116 = tpu.reciprocal %115 {approx = true} : vector<256x1xf32> -> vector<256x1xf32>
    %117 = arith.truncf %113 : vector<256x256xf32> to vector<256x256xbf16>
    %cst_38 = arith.constant dense<0.000000e+00> : vector<256x32xf32>
    %118 = tpu.matmul %117, %106, %cst_38 {dimension_numbers = #tpu.dot_dimension_numbers<[1], [0], [0], [1], [0, 0, 1, 1], [], []>} : vector<256x256xbf16>, vector<256x32xbf16>, vector<256x32xf32> -> vector<256x32xf32>
    %119 = vector.broadcast %116 : vector<256x1xf32> to vector<256x32xf32>
    %120 = arith.mulf %118, %119 : vector<256x32xf32>
    %121 = tpu.transpose %120, [1, 0] : vector<256x32xf32> -> vector<32x256xf32>
    %122 = vector.extract_strided_slice %11 {offsets = [0, 96], sizes = [4, 32], strides = [1, 1]} : vector<4x128xf32> to vector<4x32xf32>
    %cst_39 = arith.constant dense<0.000000e+00> : vector<4x256xf32>
    %123 = tpu.matmul %122, %121, %cst_39 {dimension_numbers = #tpu.dot_dimension_numbers<[1], [0], [0], [1], [0, 0, 1, 1], [], []>} : vector<4x32xf32>, vector<32x256xf32>, vector<4x256xf32> -> vector<4x256xf32>
    %124 = arith.addf %96, %123 : vector<4x256xf32>
    %c0_40 = arith.constant 0 : index
    %c0_41 = arith.constant 0 : index
    %125 = vector.load %arg4[%c0_40, %c0_41] : memref<4x1xf32, #tpu.memory_space<vmem>>, vector<4x1xf32>
    %126 = vector.broadcast %125 : vector<4x1xf32> to vector<4x256xf32>
    %127 = arith.addf %124, %126 : vector<4x256xf32>
    %c0_42 = arith.constant 0 : index
    %c0_43 = arith.constant 0 : index
    %c0_44 = arith.constant 0 : index
    %128 = vector.load %arg5[%c0_42, %c0_43, %c0_44] : memref<1x4x256xf32, #tpu.memory_space<vmem>>, vector<1x4x256xf32>
    %129 = vector.shape_cast %128 : vector<1x4x256xf32> to vector<4x256xf32>
    %130 = vector.shape_cast %127 : vector<4x256xf32> to vector<1x4x256xf32>
    tpu.vector_store %arg5[%c0_42, %c0_43, %c0_44], %130 {strides = array<i32>} : memref<1x4x256xf32, #tpu.memory_space<vmem>>, vector<1x4x256xf32>,
    return
  }
  func.func @transform_0(%arg0: i32) -> (i32, i32, i32) {
    %c0_i32 = arith.constant 0 : i32
    %c0_i32_0 = arith.constant 0 : i32
    %c0_i32_1 = arith.constant 0 : i32
    return %arg0, %c0_i32, %c0_i32_0 : i32, i32, i32
  }
  func.func @transform_1(%arg0: i32) -> (i32, i32) {
    %c0_i32 = arith.constant 0 : i32
    %c0_i32_0 = arith.constant 0 : i32
    %c0_i32_1 = arith.constant 0 : i32
    return %c0_i32, %c0_i32_0 : i32, i32
  }
  func.func @transform_2(%arg0: i32) -> (i32, i32) {
    %c0_i32 = arith.constant 0 : i32
    %c0_i32_0 = arith.constant 0 : i32
    %c0_i32_1 = arith.constant 0 : i32
    return %c0_i32, %c0_i32_0 : i32, i32
  }
  func.func @transform_3(%arg0: i32) -> (i32, i32) {
    %c0_i32 = arith.constant 0 : i32
    %c0_i32_0 = arith.constant 0 : i32
    %c0_i32_1 = arith.constant 0 : i32
    return %c0_i32, %c0_i32_0 : i32, i32
  }
  func.func @transform_4(%arg0: i32) -> (i32, i32, i32) {
    %c0_i32 = arith.constant 0 : i32
    %c0_i32_0 = arith.constant 0 : i32
    %c0_i32_1 = arith.constant 0 : i32
    return %arg0, %c0_i32, %c0_i32_0 : i32, i32, i32
  }
}

</mosaic_0001>

<llo_original>
// kernel: tpu_custom_call.1
$region0: #{tpu_custom_call.1}
  #allocation0 [shape = 'u32[]', space=smem, size = 0x4, offset = 0x4, fixed_abs, tag = 'smem constant byte address 0x4 - core index']
  #allocation1 [shape = 'u32[144,128]{1,0:T(1,128)}', space=vmem, size = 0x12000, scoped, tag = 'internal scratch']
  %s0 = inlined_call_operand.vmem [shape: f32[2,4,256], index: 0, kind: input, shape index: {}]
  %s1 = inlined_call_operand.vmem [shape: f32[384,4], index: 1, kind: input, shape index: {}]
  %s2 = inlined_call_operand.vmem [shape: f32[4,128], index: 2, kind: input, shape index: {}]
  %s3 = inlined_call_operand.vmem [shape: f32[4,1], index: 3, kind: input, shape index: {}]
  %s4 = inlined_call_operand.hbm [shape: f32[2,4,256], index: 4, kind: output, shape index: {}]
  %s5 = sld [smem:[#allocation0]]
  $region49: #{tpu_custom_call.1} parent=0
    _
  %s7 = ssub.s32 1, %s5
  %s8 = scalar_select 0, %s7, %s5
  $region1: #{tpu_custom_call.1} parent=0
    #allocation2 [shape = 'u8[8192]{0}', space=vmem, size = 0x2000, scoped, tag = 'output window, operand 0']
    #allocation3 [shape = 's32[2]{0}', space=sflag, size = 0x8, scoped, tag = 'scoped memory for tpu_custom_call.1']
    %9 = vsyncpa [#allocation3], 0
    %s10 = scalar_lea.sflag [#allocation3], 1
    %11 = vsyncpa %s10, 0
    loop: start=0, step=1, limit=4
    $region2: #{tpu_custom_call.1} parent=1 // loop_pre_header
      _
    $region3: #{tpu_custom_call.1} parent=1 // loop_header
      %s13 = sphi 0, %s17
      %p14 = scmp.ge.s32.totalorder %s13, 4
      %s23 = sphi 0, %s25
      %s26 = sphi 0, %s23
      %s27 = sphi 0, %s26
      %s43 = sphi 0, %s27
      %s47 = sphi 0, %s47
      %s49 = sphi 0, %s47
      %s50 = sphi 0, %s49
      %s64 = sphi 0, %s50
      %s68 = sphi 0, %s68
      %s70 = sphi 0, %s68
      %s71 = sphi 0, %s70
      %s85 = sphi 0, %s71
      %s89 = sphi 0, %s89
      %s91 = sphi 0, %s89
      %s92 = sphi 0, %s91
      %s106 = sphi 0, %s92
      %s112 = sphi 0, %s114
      %s115 = sphi 0, %s112
      %s116 = sphi 0, %s115
      %s132 = sphi 0, %s116
    $region4: #{tpu_custom_call.1} parent=1 // loop_header_branch
      %16 = sbr.rel (%p14) target = $region8
    $region5: #{tpu_custom_call.1} parent=1 // loop_body
      %s18 = ssub.s32 %s13, 1
      %s19 = ssub.s32 %s13, 2
      %s20 = sadd.s32 %s13, 1
      %s21 = ssub.s32 %s13, %s20
      %p22 = scmp.eq.s32.totalorder %s21, 0
      %s24 = sadd.s32 %s23, 1
      %s25 = scalar_select %p22, %s23, %s24
      %p28 = pneg %p22
      %p29 = scmp.eq.s32.totalorder %s13, 1
      %p30 = por %p28, %p29
      %p31 = scmp.ne.s32.totalorder %s23, %s26
      %p32 = scmp.eq.s32.totalorder %s13, 0
      %p33 = por %p31, %p32
      %p34 = scmp.ne.s32.totalorder %s23, %s26
      %p35 = scmp.eq.s32.totalorder %s18, 1
      %p36 = por %p34, %p35
      %p37 = scmp.ne.s32.totalorder %s26, %s27
      %p38 = scmp.eq.s32.totalorder %s18, 0
      %p39 = por %p37, %p38
      %p40 = scmp.ne.s32.totalorder %s26, %s27
      %p41 = scmp.eq.s32.totalorder %s19, 1
      %p42 = por %p40, %p41
      %p44 = scmp.ne.s32.totalorder %s27, %s43
      %p45 = scmp.eq.s32.totalorder %s19, 0
      %p46 = por %p44, %p45
      %s48 = sadd.s32 %s47, 1
      %p51 = scmp.eq.s32.totalorder %s13, 1
      %p52 = scmp.ne.s32.totalorder %s47, %s49
      %p53 = scmp.eq.s32.totalorder %s13, 0
      %p54 = por %p52, %p53
      %p55 = scmp.ne.s32.totalorder %s47, %s49
      %p56 = scmp.eq.s32.totalorder %s18, 1
      %p57 = por %p55, %p56
      %p58 = scmp.ne.s32.totalorder %s49, %s50
      %p59 = scmp.eq.s32.totalorder %s18, 0
      %p60 = por %p58, %p59
      %p61 = scmp.ne.s32.totalorder %s49, %s50
      %p62 = scmp.eq.s32.totalorder %s19, 1
      %p63 = por %p61, %p62
      %p65 = scmp.ne.s32.totalorder %s50, %s64
      %p66 = scmp.eq.s32.totalorder %s19, 0
      %p67 = por %p65, %p66
      %s69 = sadd.s32 %s68, 1
      %p72 = scmp.eq.s32.totalorder %s13, 1
      %p73 = scmp.ne.s32.totalorder %s68, %s70
      %p74 = scmp.eq.s32.totalorder %s13, 0
      %p75 = por %p73, %p74
      %p76 = scmp.ne.s32.totalorder %s68, %s70
      %p77 = scmp.eq.s32.totalorder %s18, 1
      %p78 = por %p76, %p77
      %p79 = scmp.ne.s32.totalorder %s70, %s71
      %p80 = scmp.eq.s32.totalorder %s18, 0
      %p81 = por %p79, %p80
      %p82 = scmp.ne.s32.totalorder %s70, %s71
      %p83 = scmp.eq.s32.totalorder %s19, 1
      %p84 = por %p82, %p83
      %p86 = scmp.ne.s32.totalorder %s71, %s85
      %p87 = scmp.eq.s32.totalorder %s19, 0
      %p88 = por %p86, %p87
      %s90 = sadd.s32 %s89, 1
      %p93 = scmp.eq.s32.totalorder %s13, 1
      %p94 = scmp.ne.s32.totalorder %s89, %s91
      %p95 = scmp.eq.s32.totalorder %s13, 0
      %p96 = por %p94, %p95
      %p97 = scmp.ne.s32.totalorder %s89, %s91
      %p98 = scmp.eq.s32.totalorder %s18, 1
      %p99 = por %p97, %p98
      %p100 = scmp.ne.s32.totalorder %s91, %s92
      %p101 = scmp.eq.s32.totalorder %s18, 0
      %p102 = por %p100, %p101
      %p103 = scmp.ne.s32.totalorder %s91, %s92
      %p104 = scmp.eq.s32.totalorder %s19, 1
      %p105 = por %p103, %p104
      %p107 = scmp.ne.s32.totalorder %s92, %s106
      %p108 = scmp.eq.s32.totalorder %s19, 0
      %p109 = por %p107, %p108
      %s110 = ssub.s32 %s13, %s20
      %p111 = scmp.eq.s32.totalorder %s110, 0
      %s113 = sadd.s32 %s112, 1
      %s114 = scalar_select %p111, %s112, %s113
      %p117 = pneg %p111
      %p118 = scmp.eq.s32.totalorder %s13, 1
      %p119 = por %p117, %p118
      %p120 = scmp.ne.s32.totalorder %s112, %s115
      %p121 = scmp.eq.s32.totalorder %s13, 0
      %p122 = por %p120, %p121
      %p123 = scmp.ne.s32.totalorder %s112, %s115
      %p124 = scmp.eq.s32.totalorder %s18, 1
      %p125 = por %p123, %p124
      %p126 = scmp.ne.s32.totalorder %s115, %s116
      %p127 = scmp.eq.s32.totalorder %s18, 0
      %p128 = por %p126, %p127
      %p129 = scmp.ne.s32.totalorder %s115, %s116
      %p130 = scmp.eq.s32.totalorder %s19, 1
      %p131 = por %p129, %p130
      %p133 = scmp.ne.s32.totalorder %s116, %s132
      %p134 = scmp.eq.s32.totalorder %s19, 0
      %p135 = por %p133, %p134
      %p136 = scmp.le.s32.totalorder 1, %s13
      %p137 = scmp.lt.s32.totalorder %s13, 3
      %p138 = pnand %p136, %p137
      %p139 = pneg %p138
      // Predicated region
      $region9: #{tpu_custom_call.1} parent=5 // pred_check
        _
      $region10: #{tpu_custom_call.1} parent=5 // pred_check_branch
        %141 = sbr.rel (%p138) target = $region12
      $region11: #{tpu_custom_call.1} parent=5 // pred_region
        %s142 = ssub.s32 %s13, 1
        // Predicated region
        $region13: #{tpu_custom_call.1} parent=11 // pred_check
          %p143 = pneg %p60
        $region14: #{tpu_custom_call.1} parent=11 // pred_check_branch
          %145 = sbr.rel (%p143) target = $region16
        $region15: #{tpu_custom_call.1} parent=11 // pred_region
          _
        $region16: #{tpu_custom_call.1} parent=11 // pred_fallthru
          _
        // Predicated region
        $region17: #{tpu_custom_call.1} parent=11 // pred_check
          %p146 = pneg %p81
        $region18: #{tpu_custom_call.1} parent=11 // pred_check_branch
          %148 = sbr.rel (%p146) target = $region20
        $region19: #{tpu_custom_call.1} parent=11 // pred_region
          _
        $region20: #{tpu_custom_call.1} parent=11 // pred_fallthru
          _
        // Predicated region
        $region21: #{tpu_custom_call.1} parent=11 // pred_check
          %p149 = pneg %p102
        $region22: #{tpu_custom_call.1} parent=11 // pred_check_branch
          %151 = sbr.rel (%p149) target = $region24
        $region23: #{tpu_custom_call.1} parent=11 // pred_region
          _
        $region24: #{tpu_custom_call.1} parent=11 // pred_fallthru
          _
      $region12: #{tpu_custom_call.1} parent=5 // pred_fallthru
        _
      %p152 = scmp.lt.s32.totalorder %s13, 2
      // Predicated region
      $region25: #{tpu_custom_call.1} parent=5 // pred_check
        %p153 = pneg %p152
      $region26: #{tpu_custom_call.1} parent=5 // pred_check_branch
        %155 = sbr.rel (%p153) target = $region28
      $region27: #{tpu_custom_call.1} parent=5 // pred_region
        // Predicated region
        $region29: #{tpu_custom_call.1} parent=27 // pred_check
          %p156 = pneg %p33
        $region30: #{tpu_custom_call.1} parent=27 // pred_check_branch
          %158 = sbr.rel (%p156) target = $region32
        $region31: #{tpu_custom_call.1} parent=27 // pred_region
          %p159 = scmp.lt.s32.totalorder %s13, 1
          %s160 = scalar_select %p159, %s13, 1
          %s161 = smul.addr %s160, 2
          %s162 = smul.addr %s161, 4
          %s163 = scalar_lea.vmem %s0, %s162
        $region32: #{tpu_custom_call.1} parent=27 // pred_fallthru
          _
      $region28: #{tpu_custom_call.1} parent=5 // pred_fallthru
        _
      %p164 = scmp.le.s32.totalorder 1, %s13
      %p165 = scmp.lt.s32.totalorder %s13, 3
      %p166 = pnand %p164, %p165
      %p167 = pneg %p166
      // Predicated region
      $region33: #{tpu_custom_call.1} parent=5 // pred_check
        _
      $region34: #{tpu_custom_call.1} parent=5 // pred_check_branch
        %169 = sbr.rel (%p166) target = $region36
      $region35: #{tpu_custom_call.1} parent=5 // pred_region
        %s170 = ssub.s32 %s13, 1
        %p171 = scmp.lt.s32.totalorder %s18, 1
        %s172 = scalar_select %p171, %s18, 1
        %s173 = smul.addr %s172, 2
        %s174 = smul.addr %s173, 4
        %s175 = scalar_lea.vmem %s0, %s174
        %p176 = pneg %p39
        %p177 = pneg %p36
        %p178 = pneg %p60
        %p179 = pneg %p57
        %p180 = pneg %p81
        %p181 = pneg %p78
        %p182 = pneg %p102
        %p183 = pneg %p99
        %p184 = pneg %p128
        %p185 = pneg %p125
        %s186 = sand.u32 %s115, 1
        %s187 = scalar_lea.sflag [#allocation3], %s186
        %s188 = sand.u32 %s115, 1
        %s189 = smul.addr %s188, 8
        %s190 = scalar_lea.vmem [#allocation2], %s189
        %p191 = scmp.lt.s32.totalorder %s18, 1
        %s192 = scalar_select %p191, %s18, 1
        %s193 = smul.addr %s192, 2
        %s194 = smul.addr %s193, 4
        %s195 = scalar_lea.vmem %s0, %s194
        %v197 = vld [vmem:[%s195] sm:$0xff]
        %v198 = vmul.f32 %v197, %v197
        %v200 = vcombine.high %v198, %v198
        %vm202 = vcmask 1043456
        %v203 = vsel %vm202, %v198, 0.0
        %v204 = vrot.slane %v203, 4
        %v205 = vadd.f32 %v203, %v204
        %v206 = vrot.slane %v205, 2
        %v207 = vadd.f32 %v205, %v206
        %v208 = vrot.slane %v207, 1
        %v209 = vadd.f32 %v207, %v208
        %v210 = vsel %vm202, %v200, 0.0
        %v211 = vrot.slane %v210, 4
        %v212 = vadd.f32 %v210, %v211
        %v213 = vrot.slane %v212, 2
        %v214 = vadd.f32 %v212, %v213
        %v215 = vrot.slane %v214, 1
        %v216 = vadd.f32 %v214, %v215
        %v217 = vmax.f32 %v209, 1e-24
        %v218 = vmax.f32 %v216, 1e-24
        %v219 = vrsqrt.pop %v217
        %v220 = vrsqrt.pop %v218
        %v223 = vcombine.low %v219, %v220
        %v225 = vmul.f32 %v197, %v223
        %v226 = vld [vmem:[%s1] sm:$0xff]
        %v227 = vld [vmem:[%s1 + $0x8] sm:$0xff]
        %v228 = vld [vmem:[%s1 + $0x10] sm:$0xff]
        %v229 = vld [vmem:[%s1 + $0x18] sm:$0xff]
        %v230 = vld [vmem:[%s1 + $0x20] sm:$0xff]
        %v231 = vld [vmem:[%s1 + $0x28] sm:$0xff]
        %v232 = vld [vmem:[%s1 + $0x30] sm:$0xff]
        %v233 = vld [vmem:[%s1 + $0x38] sm:$0xff]
        %v234 = vld [vmem:[%s1 + $0x40] sm:$0xff]
        %v235 = vld [vmem:[%s1 + $0x48] sm:$0xff]
        %v236 = vld [vmem:[%s1 + $0x50] sm:$0xff]
        %v237 = vld [vmem:[%s1 + $0x58] sm:$0xff]
        %v238 = vld [vmem:[%s1 + $0x60] sm:$0xff]
        %v239 = vld [vmem:[%s1 + $0x68] sm:$0xff]
        %v240 = vld [vmem:[%s1 + $0x70] sm:$0xff]
        %v241 = vld [vmem:[%s1 + $0x78] sm:$0xff]
        %v242 = vld [vmem:[%s1 + $0x80] sm:$0xff]
        %v243 = vld [vmem:[%s1 + $0x88] sm:$0xff]
        %v244 = vld [vmem:[%s1 + $0x90] sm:$0xff]
        %v245 = vld [vmem:[%s1 + $0x98] sm:$0xff]
        %v246 = vld [vmem:[%s1 + $0xa0] sm:$0xff]
        %v247 = vld [vmem:[%s1 + $0xa8] sm:$0xff]
        %v248 = vld [vmem:[%s1 + $0xb0] sm:$0xff]
        %v249 = vld [vmem:[%s1 + $0xb8] sm:$0xff]
        %v250 = vld [vmem:[%s1 + $0xc0] sm:$0xff]
        %v251 = vld [vmem:[%s1 + $0xc8] sm:$0xff]
        %v252 = vld [vmem:[%s1 + $0xd0] sm:$0xff]
        %v253 = vld [vmem:[%s1 + $0xd8] sm:$0xff]
        %v254 = vld [vmem:[%s1 + $0xe0] sm:$0xff]
        %v255 = vld [vmem:[%s1 + $0xe8] sm:$0xff]
        %v256 = vld [vmem:[%s1 + $0xf0] sm:$0xff]
        %v257 = vld [vmem:[%s1 + $0xf8] sm:$0xff]
        %v258 = vld [vmem:[%s1 + $0x100] sm:$0xff]
        %v259 = vld [vmem:[%s1 + $0x108] sm:$0xff]
        %v260 = vld [vmem:[%s1 + $0x110] sm:$0xff]
        %v261 = vld [vmem:[%s1 + $0x118] sm:$0xff]
        %v262 = vld [vmem:[%s1 + $0x120] sm:$0xff]
        %v263 = vld [vmem:[%s1 + $0x128] sm:$0xff]
        %v264 = vld [vmem:[%s1 + $0x130] sm:$0xff]
        %v265 = vld [vmem:[%s1 + $0x138] sm:$0xff]
        %v266 = vld [vmem:[%s1 + $0x140] sm:$0xff]
        %v267 = vld [vmem:[%s1 + $0x148] sm:$0xff]
        %v268 = vld [vmem:[%s1 + $0x150] sm:$0xff]
        %v269 = vld [vmem:[%s1 + $0x158] sm:$0xff]
        %v270 = vld [vmem:[%s1 + $0x160] sm:$0xff]
        %v271 = vld [vmem:[%s1 + $0x168] sm:$0xff]
        %v272 = vld [vmem:[%s1 + $0x170] sm:$0xff]
        %v273 = vld [vmem:[%s1 + $0x178] sm:$0xff]
        %v274 = vld [vmem:[%s2] sm:$0xf]
        %v276 = vcombine.high %v225, %v225
        %vm277 = vcmask 31744
        %v279 = vsel %vm277, %v226, 0
        %v282 = vsel %vm277, %v227, 0
        %v285 = vsel %vm277, %v228, 0
        %v288 = vsel %vm277, %v229, 0
        %v290 = vsel %vm202, %v225, 0
        %v292 = vsel %vm202, %v276, 0
        %294 = vmatprep.subr.mxu0 %v292
        %295 = vmatpush1.msra.mxu0 %v290
        %296 = vmatprep.subr.mxu0 0.0
        %297 = vmatpush1.msra.mxu0 0.0
        %298 = vmatprep.subr.mxu0 0.0
        %299 = vmatpush1.msra.mxu0 0.0
        %300 = vmatprep.subr.mxu0 0.0
        %301 = vmatpush1.msra.mxu0 0.0
        %302 = vmatprep.subr.mxu0 0.0
        %303 = vmatpush1.msra.mxu0 0.0
        %304 = vmatprep.subr.mxu0 0.0
        %305 = vmatpush1.msra.mxu0 0.0
        %306 = vmatprep.subr.mxu0 0.0
        %307 = vmatpush1.msra.mxu0 0.0
        %308 = vmatprep.subr.mxu0 0.0
        %309 = vmatpush1.msra.mxu0 0.0
        %310 = vmatprep.subr.mxu0 0.0
        %311 = vmatpush1.msra.mxu0 0.0
        %312 = vmatprep.subr.mxu0 0.0
        %313 = vmatpush1.msra.mxu0 0.0
        %314 = vmatprep.subr.mxu0 0.0
        %315 = vmatpush1.msra.mxu0 0.0
        %316 = vmatprep.subr.mxu0 0.0
        %317 = vmatpush1.msra.mxu0 0.0
        %318 = vmatprep.subr.mxu0 0.0
        %319 = vmatpush1.msra.mxu0 0.0
        %320 = vmatprep.subr.mxu0 0.0
        %321 = vmatpush1.msra.mxu0 0.0
        %322 = vmatprep.subr.mxu0 0.0
        %323 = vmatpush1.msra.mxu0 0.0
        %324 = vmatprep.subr.mxu0 0.0
        %325 = vmatpush1.msra.mxu0 0.0
        %326 = vmatprep.subr.mxu0 0.0
        %327 = vmatpush1.msra.mxu0 0.0
        %328 = vmatprep.subr.mxu0 0.0
        %329 = vmatpush1.msra.mxu0 0.0
        %330 = vmatprep.subr.mxu0 0.0
        %331 = vmatpush1.msra.mxu0 0.0
        %332 = vmatprep.subr.mxu0 0.0
        %333 = vmatpush1.msra.mxu0 0.0
        %334 = vmatprep.subr.mxu0 0.0
        %335 = vmatpush1.msra.mxu0 0.0
        %336 = vmatprep.subr.mxu0 0.0
        %337 = vmatpush1.msra.mxu0 0.0
        %338 = vmatprep.subr.mxu0 0.0
        %339 = vmatpush1.msra.mxu0 0.0
        %340 = vmatprep.subr.mxu0 0.0
        %341 = vmatpush1.msra.mxu0 0.0
        %342 = vmatprep.subr.mxu0 0.0
        %343 = vmatpush1.msra.mxu0 0.0
        %344 = vmatprep.subr.mxu0 0.0
        %345 = vmatpush1.msra.mxu0 0.0
        %346 = vmatprep.subr.mxu0 0.0
        %347 = vmatpush1.msra.mxu0 0.0
        %348 = vmatprep.subr.mxu0 0.0
        %349 = vmatpush1.msra.mxu0 0.0
        %350 = vmatprep.subr.mxu0 0.0
        %351 = vmatpush1.msra.mxu0 0.0
        %352 = vmatprep.subr.mxu0 0.0
        %353 = vmatpush1.msra.mxu0 0.0
        %354 = vmatprep.subr.mxu0 0.0
        %355 = vmatpush1.msra.mxu0 0.0
        %356 = vmatprep.subr.mxu0 0.0
        %357 = vmatpush1.msra.mxu0 0.0
        %358 = vmatprep.mubr.f32.mxu0 0.0
        %359 = vmatmul.mubr.f32.gmra.mrb[0].mxu0 %v279
        %v360 = vpop.f32.mrb[0].mxu0
        %v361 = vadd.f32 0.0, %v360
        %v362 = vpop.f32.mrb[0].mxu0
        %v363 = vadd.f32 0.0, %v362
        %364 = vmatprep.mubr.f32.mxu0 0.0
        %365 = vmatmul.mubr.f32.gmra.mrb[0].mxu0 %v282
        %v366 = vpop.f32.mrb[0].mxu0
        %v367 = vadd.f32 0.0, %v366
        %v368 = vpop.f32.mrb[0].mxu0
        %v369 = vadd.f32 0.0, %v368
        %370 = vmatprep.mubr.f32.mxu0 0.0
        %371 = vmatmul.mubr.f32.gmra.mrb[0].mxu0 %v285
        %v372 = vpop.f32.mrb[0].mxu0
        %v373 = vadd.f32 0.0, %v372
        %v374 = vpop.f32.mrb[0].mxu0
        %v375 = vadd.f32 0.0, %v374
        %376 = vmatprep.mubr.f32.mxu0 0.0
        %377 = vmatmul.mubr.f32.gmra.mrb[0].mxu0 %v288
        %v378 = vpop.f32.mrb[0].mxu0
        %v379 = vadd.f32 0.0, %v378
        %v380 = vpop.f32.mrb[0].mxu0
        %v381 = vadd.f32 0.0, %v380
        %382 = vdwg.mxu0
        %v384 = vsel %vm277, %v242, 0
        %v387 = vsel %vm277, %v243, 0
        %v390 = vsel %vm277, %v244, 0
        %v393 = vsel %vm277, %v245, 0
        %395 = vmatprep.subr.mxu0 %v292
        %396 = vmatpush1.msra.mxu0 %v290
        %397 = vmatprep.subr.mxu0 0.0
        %398 = vmatpush1.msra.mxu0 0.0
        %399 = vmatprep.subr.mxu0 0.0
        %400 = vmatpush1.msra.mxu0 0.0
        %401 = vmatprep.subr.mxu0 0.0
        %402 = vmatpush1.msra.mxu0 0.0
        %403 = vmatprep.subr.mxu0 0.0
        %404 = vmatpush1.msra.mxu0 0.0
        %405 = vmatprep.subr.mxu0 0.0
        %406 = vmatpush1.msra.mxu0 0.0
        %407 = vmatprep.subr.mxu0 0.0
        %408 = vmatpush1.msra.mxu0 0.0
        %409 = vmatprep.subr.mxu0 0.0
        %410 = vmatpush1.msra.mxu0 0.0
        %411 = vmatprep.subr.mxu0 0.0
        %412 = vmatpush1.msra.mxu0 0.0
        %413 = vmatprep.subr.mxu0 0.0
        %414 = vmatpush1.msra.mxu0 0.0
        %415 = vmatprep.subr.mxu0 0.0
        %416 = vmatpush1.msra.mxu0 0.0
        %417 = vmatprep.subr.mxu0 0.0
        %418 = vmatpush1.msra.mxu0 0.0
        %419 = vmatprep.subr.mxu0 0.0
        %420 = vmatpush1.msra.mxu0 0.0
        %421 = vmatprep.subr.mxu0 0.0
        %422 = vmatpush1.msra.mxu0 0.0
        %423 = vmatprep.subr.mxu0 0.0
        %424 = vmatpush1.msra.mxu0 0.0
        %425 = vmatprep.subr.mxu0 0.0
        %426 = vmatpush1.msra.mxu0 0.0
        %427 = vmatprep.subr.mxu0 0.0
        %428 = vmatpush1.msra.mxu0 0.0
        %429 = vmatprep.subr.mxu0 0.0
        %430 = vmatpush1.msra.mxu0 0.0
        %431 = vmatprep.subr.mxu0 0.0
        %432 = vmatpush1.msra.mxu0 0.0
        %433 = vmatprep.subr.mxu0 0.0
        %434 = vmatpush1.msra.mxu0 0.0
        %435 = vmatprep.subr.mxu0 0.0
        %436 = vmatpush1.msra.mxu0 0.0
        %437 = vmatprep.subr.mxu0 0.0
        %438 = vmatpush1.msra.mxu0 0.0
        %439 = vmatprep.subr.mxu0 0.0
        %440 = vmatpush1.msra.mxu0 0.0
        %441 = vmatprep.subr.mxu0 0.0
        %442 = vmatpush1.msra.mxu0 0.0
        %443 = vmatprep.subr.mxu0 0.0
        %444 = vmatpush1.msra.mxu0 0.0
        %445 = vmatprep.subr.mxu0 0.0
        %446 = vmatpush1.msra.mxu0 0.0
        %447 = vmatprep.subr.mxu0 0.0
        %448 = vmatpush1.msra.mxu0 0.0
        %449 = vmatprep.subr.mxu0 0.0
        %450 = vmatpush1.msra.mxu0 0.0
        %451 = vmatprep.subr.mxu0 0.0
        %452 = vmatpush1.msra.mxu0 0.0
        %453 = vmatprep.subr.mxu0 0.0
        %454 = vmatpush1.msra.mxu0 0.0
        %455 = vmatprep.subr.mxu0 0.0
        %456 = vmatpush1.msra.mxu0 0.0
        %457 = vmatprep.subr.mxu0 0.0
        %458 = vmatpush1.msra.mxu0 0.0
        %459 = vmatprep.mubr.f32.mxu0 0.0
        %460 = vmatmul.mubr.f32.gmra.mrb[0].mxu0 %v384
        %v461 = vpop.f32.mrb[0].mxu0
        %v462 = vadd.f32 0.0, %v461
        %v463 = vpop.f32.mrb[0].mxu0
        %v464 = vadd.f32 0.0, %v463
        %465 = vmatprep.mubr.f32.mxu0 0.0
        %466 = vmatmul.mubr.f32.gmra.mrb[0].mxu0 %v387
        %v467 = vpop.f32.mrb[0].mxu0
        %v468 = vadd.f32 0.0, %v467
        %v469 = vpop.f32.mrb[0].mxu0
        %v470 = vadd.f32 0.0, %v469
        %471 = vmatprep.mubr.f32.mxu0 0.0
        %472 = vmatmul.mubr.f32.gmra.mrb[0].mxu0 %v390
        %v473 = vpop.f32.mrb[0].mxu0
        %v474 = vadd.f32 0.0, %v473
        %v475 = vpop.f32.mrb[0].mxu0
        %v476 = vadd.f32 0.0, %v475
        %477 = vmatprep.mubr.f32.mxu0 0.0
        %478 = vmatmul.mubr.f32.gmra.mrb[0].mxu0 %v393
        %v479 = vpop.f32.mrb[0].mxu0
        %v480 = vadd.f32 0.0, %v479
        %v481 = vpop.f32.mrb[0].mxu0
        %v482 = vadd.f32 0.0, %v481
        %483 = vdwg.mxu0
        %v485 = vsel %vm277, %v258, 0
        %v488 = vsel %vm277, %v259, 0
        %v491 = vsel %vm277, %v260, 0
        %v494 = vsel %vm277, %v261, 0
        %496 = vmatprep.subr.mxu0 %v292
        %497 = vmatpush1.msra.mxu0 %v290
        %498 = vmatprep.subr.mxu0 0.0
        %499 = vmatpush1.msra.mxu0 0.0
        %500 = vmatprep.subr.mxu0 0.0
        %501 = vmatpush1.msra.mxu0 0.0
        %502 = vmatprep.subr.mxu0 0.0
        %503 = vmatpush1.msra.mxu0 0.0
        %504 = vmatprep.subr.mxu0 0.0
        %505 = vmatpush1.msra.mxu0 0.0
        %506 = vmatprep.subr.mxu0 0.0
        %507 = vmatpush1.msra.mxu0 0.0
        %508 = vmatprep.subr.mxu0 0.0
        %509 = vmatpush1.msra.mxu0 0.0
        %510 = vmatprep.subr.mxu0 0.0
        %511 = vmatpush1.msra.mxu0 0.0
        %512 = vmatprep.subr.mxu0 0.0
        %513 = vmatpush1.msra.mxu0 0.0
        %514 = vmatprep.subr.mxu0 0.0
        %515 = vmatpush1.msra.mxu0 0.0
        %516 = vmatprep.subr.mxu0 0.0
        %517 = vmatpush1.msra.mxu0 0.0
        %518 = vmatprep.subr.mxu0 0.0
        %519 = vmatpush1.msra.mxu0 0.0
        %520 = vmatprep.subr.mxu0 0.0
        %521 = vmatpush1.msra.mxu0 0.0
        %522 = vmatprep.subr.mxu0 0.0
        %523 = vmatpush1.msra.mxu0 0.0
        %524 = vmatprep.subr.mxu0 0.0
        %525 = vmatpush1.msra.mxu0 0.0
        %526 = vmatprep.subr.mxu0 0.0
        %527 = vmatpush1.msra.mxu0 0.0
        %528 = vmatprep.subr.mxu0 0.0
        %529 = vmatpush1.msra.mxu0 0.0
        %530 = vmatprep.subr.mxu0 0.0
        %531 = vmatpush1.msra.mxu0 0.0
        %532 = vmatprep.subr.mxu0 0.0
        %533 = vmatpush1.msra.mxu0 0.0
        %534 = vmatprep.subr.mxu0 0.0
        %535 = vmatpush1.msra.mxu0 0.0
        %536 = vmatprep.subr.mxu0 0.0
        %537 = vmatpush1.msra.mxu0 0.0
        %538 = vmatprep.subr.mxu0 0.0
        %539 = vmatpush1.msra.mxu0 0.0
        %540 = vmatprep.subr.mxu0 0.0
        %541 = vmatpush1.msra.mxu0 0.0
        %542 = vmatprep.subr.mxu0 0.0
        %543 = vmatpush1.msra.mxu0 0.0
        %544 = vmatprep.subr.mxu0 0.0
        %545 = vmatpush1.msra.mxu0 0.0
        %546 = vmatprep.subr.mxu0 0.0
        %547 = vmatpush1.msra.mxu0 0.0
        %548 = vmatprep.subr.mxu0 0.0
        %549 = vmatpush1.msra.mxu0 0.0
        %550 = vmatprep.subr.mxu0 0.0
        %551 = vmatpush1.msra.mxu0 0.0
        %552 = vmatprep.subr.mxu0 0.0
        %553 = vmatpush1.msra.mxu0 0.0
        %554 = vmatprep.subr.mxu0 0.0
        %555 = vmatpush1.msra.mxu0 0.0
        %556 = vmatprep.subr.mxu0 0.0
        %557 = vmatpush1.msra.mxu0 0.0
        %558 = vmatprep.subr.mxu0 0.0
        %559 = vmatpush1.msra.mxu0 0.0
        %560 = vmatprep.mubr.f32.mxu0 0.0
        %561 = vmatmul.mubr.f32.gmra.mrb[0].mxu0 %v485
        %v562 = vpop.f32.mrb[0].mxu0
        %v563 = vadd.f32 0.0, %v562
        %v564 = vpop.f32.mrb[0].mxu0
        %v565 = vadd.f32 0.0, %v564
        %566 = vmatprep.mubr.f32.mxu0 0.0
        %567 = vmatmul.mubr.f32.gmra.mrb[0].mxu0 %v488
        %v568 = vpop.f32.mrb[0].mxu0
        %v569 = vadd.f32 0.0, %v568
        %v570 = vpop.f32.mrb[0].mxu0
        %v571 = vadd.f32 0.0, %v570
        %572 = vmatprep.mubr.f32.mxu0 0.0
        %573 = vmatmul.mubr.f32.gmra.mrb[0].mxu0 %v491
        %v574 = vpop.f32.mrb[0].mxu0
        %v575 = vadd.f32 0.0, %v574
        %v576 = vpop.f32.mrb[0].mxu0
        %v577 = vadd.f32 0.0, %v576
        %578 = vmatprep.mubr.f32.mxu0 0.0
        %579 = vmatmul.mubr.f32.gmra.mrb[0].mxu0 %v494
        %v580 = vpop.f32.mrb[0].mxu0
        %v581 = vadd.f32 0.0, %v580
        %v582 = vpop.f32.mrb[0].mxu0
        %v583 = vadd.f32 0.0, %v582
        %584 = vdwg.mxu0
        %585 = vxpose.xlu0.b32.start [1/16] %v361, 128
        %586 = vxpose.xlu0.b32.cont [2/16] %v367, 128
        %587 = vxpose.xlu0.b32.cont [3/16] %v373, 128
        %588 = vxpose.xlu0.b32.cont [4/16] %v379, 128
        %589 = vxpose.xlu0.b32.cont [5/16] 0.0, 128
        %590 = vxpose.xlu0.b32.cont [6/16] 0.0, 128
        %591 = vxpose.xlu0.b32.cont [7/16] 0.0, 128
        %592 = vxpose.xlu0.b32.cont [8/16] 0.0, 128
        %593 = vxpose.xlu0.b32.cont [9/16] 0.0, 128
        %594 = vxpose.xlu0.b32.cont [10/16] 0.0, 128
        %595 = vxpose.xlu0.b32.cont [11/16] 0.0, 128
        %596 = vxpose.xlu0.b32.cont [12/16] 0.0, 128
        %597 = vxpose.xlu0.b32.cont [13/16] 0.0, 128
        %598 = vxpose.xlu0.b32.cont [14/16] 0.0, 128
        %599 = vxpose.xlu0.b32.cont [15/16] 0.0, 128
        %600 = vxpose.xlu0.b32.end [16/16] 0.0, 128
        %v601 = vpop.trf.xlu0
        %v602 = vpop.trf.xlu0
        %v603 = vpop.trf.xlu0
        %v604 = vpop.trf.xlu0
        %v605 = vpop.trf.xlu0
        %v606 = vpop.trf.xlu0
        %v607 = vpop.trf.xlu0
        %v608 = vpop.trf.xlu0
        %v609 = vpop.trf.xlu0
        %v610 = vpop.trf.xlu0
        %v611 = vpop.trf.xlu0
        %v612 = vpop.trf.xlu0
        %v613 = vpop.trf.xlu0
        %v614 = vpop.trf.xlu0
        %v615 = vpop.trf.xlu0
        %v616 = vpop.trf.xlu0
        %617 = vxpose.xlu0.b32.start [1/16] %v363, 128
        %618 = vxpose.xlu0.b32.cont [2/16] %v369, 128
        %619 = vxpose.xlu0.b32.cont [3/16] %v375, 128
        %620 = vxpose.xlu0.b32.cont [4/16] %v381, 128
        %621 = vxpose.xlu0.b32.cont [5/16] 0.0, 128
        %622 = vxpose.xlu0.b32.cont [6/16] 0.0, 128
        %623 = vxpose.xlu0.b32.cont [7/16] 0.0, 128
        %624 = vxpose.xlu0.b32.cont [8/16] 0.0, 128
        %625 = vxpose.xlu0.b32.cont [9/16] 0.0, 128
        %626 = vxpose.xlu0.b32.cont [10/16] 0.0, 128
        %627 = vxpose.xlu0.b32.cont [11/16] 0.0, 128
        %628 = vxpose.xlu0.b32.cont [12/16] 0.0, 128
        %629 = vxpose.xlu0.b32.cont [13/16] 0.0, 128
        %630 = vxpose.xlu0.b32.cont [14/16] 0.0, 128
        %631 = vxpose.xlu0.b32.cont [15/16] 0.0, 128
        %632 = vxpose.xlu0.b32.end [16/16] 0.0, 128
        %v633 = vpop.trf.xlu0
        %v634 = vpop.trf.xlu0
        %v635 = vpop.trf.xlu0
        %v636 = vpop.trf.xlu0
        %v637 = vpop.trf.xlu0
        %v638 = vpop.trf.xlu0
        %v639 = vpop.trf.xlu0
        %v640 = vpop.trf.xlu0
        %v641 = vpop.trf.xlu0
        %v642 = vpop.trf.xlu0
        %v643 = vpop.trf.xlu0
        %v644 = vpop.trf.xlu0
        %v645 = vpop.trf.xlu0
        %v646 = vpop.trf.xlu0
        %v647 = vpop.trf.xlu0
        %v648 = vpop.trf.xlu0
        %v649 = vpack.c.bf16 %v602, %v601
        %v650 = vpack.c.bf16 %v604, %v603
        %v651 = vpack.c.bf16 %v606, %v605
        %v652 = vpack.c.bf16 %v608, %v607
        %v653 = vpack.c.bf16 %v610, %v609
        %v654 = vpack.c.bf16 %v612, %v611
        %v655 = vpack.c.bf16 %v614, %v613
        %v656 = vpack.c.bf16 %v616, %v615
        %v657 = vpack.c.bf16 %v634, %v633
        %v658 = vpack.c.bf16 %v636, %v635
        %v659 = vpack.c.bf16 %v638, %v637
        %v660 = vpack.c.bf16 %v640, %v639
        %v661 = vpack.c.bf16 %v642, %v641
        %v662 = vpack.c.bf16 %v644, %v643
        %v663 = vpack.c.bf16 %v646, %v645
        %v664 = vpack.c.bf16 %v648, %v647
        %665 = vxpose.xlu0.b32.start [1/16] %v563, 128
        %666 = vxpose.xlu0.b32.cont [2/16] %v569, 128
        %667 = vxpose.xlu0.b32.cont [3/16] %v575, 128
        %668 = vxpose.xlu0.b32.cont [4/16] %v581, 128
        %669 = vxpose.xlu0.b32.cont [5/16] 0.0, 128
        %670 = vxpose.xlu0.b32.cont [6/16] 0.0, 128
        %671 = vxpose.xlu0.b32.cont [7/16] 0.0, 128
        %672 = vxpose.xlu0.b32.cont [8/16] 0.0, 128
        %673 = vxpose.xlu0.b32.cont [9/16] 0.0, 128
        %674 = vxpose.xlu0.b32.cont [10/16] 0.0, 128
        %675 = vxpose.xlu0.b32.cont [11/16] 0.0, 128
        %676 = vxpose.xlu0.b32.cont [12/16] 0.0, 128
        %677 = vxpose.xlu0.b32.cont [13/16] 0.0, 128
        %678 = vxpose.xlu0.b32.cont [14/16] 0.0, 128
        %679 = vxpose.xlu0.b32.cont [15/16] 0.0, 128
        %680 = vxpose.xlu0.b32.end [16/16] 0.0, 128
        %v681 = vpop.trf.xlu0
        %v682 = vpop.trf.xlu0
        %v683 = vpop.trf.xlu0
        %v684 = vpop.trf.xlu0
        %v685 = vpop.trf.xlu0
        %v686 = vpop.trf.xlu0
        %v687 = vpop.trf.xlu0
        %v688 = vpop.trf.xlu0
        %v689 = vpop.trf.xlu0
        %v690 = vpop.trf.xlu0
        %v691 = vpop.trf.xlu0
        %v692 = vpop.trf.xlu0
        %v693 = vpop.trf.xlu0
        %v694 = vpop.trf.xlu0
        %v695 = vpop.trf.xlu0
        %v696 = vpop.trf.xlu0
        %697 = vxpose.xlu0.b32.start [1/16] %v565, 128
        %698 = vxpose.xlu0.b32.cont [2/16] %v571, 128
        %699 = vxpose.xlu0.b32.cont [3/16] %v577, 128
        %700 = vxpose.xlu0.b32.cont [4/16] %v583, 128
        %701 = vxpose.xlu0.b32.cont [5/16] 0.0, 128
        %702 = vxpose.xlu0.b32.cont [6/16] 0.0, 128
        %703 = vxpose.xlu0.b32.cont [7/16] 0.0, 128
        %704 = vxpose.xlu0.b32.cont [8/16] 0.0, 128
        %705 = vxpose.xlu0.b32.cont [9/16] 0.0, 128
        %706 = vxpose.xlu0.b32.cont [10/16] 0.0, 128
        %707 = vxpose.xlu0.b32.cont [11/16] 0.0, 128
        %708 = vxpose.xlu0.b32.cont [12/16] 0.0, 128
        %709 = vxpose.xlu0.b32.cont [13/16] 0.0, 128
        %710 = vxpose.xlu0.b32.cont [14/16] 0.0, 128
        %711 = vxpose.xlu0.b32.cont [15/16] 0.0, 128
        %712 = vxpose.xlu0.b32.end [16/16] 0.0, 128
        %v713 = vpop.trf.xlu0
        %v714 = vpop.trf.xlu0
        %v715 = vpop.trf.xlu0
        %v716 = vpop.trf.xlu0
        %v717 = vpop.trf.xlu0
        %v718 = vpop.trf.xlu0
        %v719 = vpop.trf.xlu0
        %v720 = vpop.trf.xlu0
        %v721 = vpop.trf.xlu0
        %v722 = vpop.trf.xlu0
        %v723 = vpop.trf.xlu0
        %v724 = vpop.trf.xlu0
        %v725 = vpop.trf.xlu0
        %v726 = vpop.trf.xlu0
        %v727 = vpop.trf.xlu0
        %v728 = vpop.trf.xlu0
        %v729 = vpack.c.bf16 %v682, %v681
        %v730 = vpack.c.bf16 %v684, %v683
        %v731 = vpack.c.bf16 %v686, %v685
        %v732 = vpack.c.bf16 %v688, %v687
        %v733 = vpack.c.bf16 %v690, %v689
        %v734 = vpack.c.bf16 %v692, %v691
        %v735 = vpack.c.bf16 %v694, %v693
        %v736 = vpack.c.bf16 %v696, %v695
        %v737 = vpack.c.bf16 %v714, %v713
        %v738 = vpack.c.bf16 %v716, %v715
        %v739 = vpack.c.bf16 %v718, %v717
        %v740 = vpack.c.bf16 %v720, %v719
        %v741 = vpack.c.bf16 %v722, %v721
        %v742 = vpack.c.bf16 %v724, %v723
        %v743 = vpack.c.bf16 %v726, %v725
        %v744 = vpack.c.bf16 %v728, %v727
        %v745 = vpack.c.bf16 %v468, %v462
        %v746 = vpack.c.bf16 %v470, %v464
        %v747 = vpack.c.bf16 %v480, %v474
        %v748 = vpack.c.bf16 %v482, %v476
        %vm749 = vcmask 261120
        %v751 = vsel %vm749, %v649, 0
        %v754 = vsel %vm749, %v650, 0
        %v757 = vsel %vm749, %v651, 0
        %v760 = vsel %vm749, %v652, 0
        %v763 = vsel %vm749, %v653, 0
        %v766 = vsel %vm749, %v654, 0
        %v769 = vsel %vm749, %v655, 0
        %v772 = vsel %vm749, %v656, 0
        %v775 = vsel %vm749, %v657, 0
        %v778 = vsel %vm749, %v658, 0
        %v781 = vsel %vm749, %v659, 0
        %v784 = vsel %vm749, %v660, 0
        %v787 = vsel %vm749, %v661, 0
        %v790 = vsel %vm749, %v662, 0
        %v793 = vsel %vm749, %v663, 0
        %v796 = vsel %vm749, %v664, 0
        %798 = vmatprep.subr.bf16.mxu0 %v746
        %799 = vmatpush1.bf16.msra.mxu0 %v745
        %800 = vmatprep.subr.bf16.mxu0 %v748
        %801 = vmatpush1.bf16.msra.mxu0 %v747
        %802 = vmatprep.subr.bf16.mxu0 0
        %803 = vmatpush1.bf16.msra.mxu0 0
        %804 = vmatprep.subr.bf16.mxu0 0
        %805 = vmatpush1.bf16.msra.mxu0 0
        %806 = vmatprep.subr.bf16.mxu0 0
        %807 = vmatpush1.bf16.msra.mxu0 0
        %808 = vmatprep.subr.bf16.mxu0 0
        %809 = vmatpush1.bf16.msra.mxu0 0
        %810 = vmatprep.subr.bf16.mxu0 0
        %811 = vmatpush1.bf16.msra.mxu0 0
        %812 = vmatprep.subr.bf16.mxu0 0
        %813 = vmatpush1.bf16.msra.mxu0 0
        %814 = vmatprep.subr.bf16.mxu0 0
        %815 = vmatpush1.bf16.msra.mxu0 0
        %816 = vmatprep.subr.bf16.mxu0 0
        %817 = vmatpush1.bf16.msra.mxu0 0
        %818 = vmatprep.subr.bf16.mxu0 0
        %819 = vmatpush1.bf16.msra.mxu0 0
        %820 = vmatprep.subr.bf16.mxu0 0
        %821 = vmatpush1.bf16.msra.mxu0 0
        %822 = vmatprep.subr.bf16.mxu0 0
        %823 = vmatpush1.bf16.msra.mxu0 0
        %824 = vmatprep.subr.bf16.mxu0 0
        %825 = vmatpush1.bf16.msra.mxu0 0
        %826 = vmatprep.subr.bf16.mxu0 0
        %827 = vmatpush1.bf16.msra.mxu0 0
        %828 = vmatprep.subr.bf16.mxu0 0
        %829 = vmatpush1.bf16.msra.mxu0 0
        %830 = vmatprep.mubr.bf16.mxu0 0
        %831 = vmatmul.mubr.bf16.gmra.mrb[0].mxu0 %v751
        %v832 = vpop.f32.mrb[0].mxu0
        %v833 = vadd.f32 0.0, %v832
        %v834 = vpop.f32.mrb[0].mxu0
        %v835 = vadd.f32 0.0, %v834
        %v836 = vpop.f32.mrb[0].mxu0
        %v837 = vadd.f32 0.0, %v836
        %v838 = vpop.f32.mrb[0].mxu0
        %v839 = vadd.f32 0.0, %v838
        %840 = vmatprep.mubr.bf16.mxu0 0
        %841 = vmatmul.mubr.bf16.gmra.mrb[0].mxu0 %v754
        %v842 = vpop.f32.mrb[0].mxu0
        %v843 = vadd.f32 0.0, %v842
        %v844 = vpop.f32.mrb[0].mxu0
        %v845 = vadd.f32 0.0, %v844
        %v846 = vpop.f32.mrb[0].mxu0
        %v847 = vadd.f32 0.0, %v846
        %v848 = vpop.f32.mrb[0].mxu0
        %v849 = vadd.f32 0.0, %v848
        %850 = vmatprep.mubr.bf16.mxu0 0
        %851 = vmatmul.mubr.bf16.gmra.mrb[0].mxu0 %v757
        %v852 = vpop.f32.mrb[0].mxu0
        %v853 = vadd.f32 0.0, %v852
        %v854 = vpop.f32.mrb[0].mxu0
        %v855 = vadd.f32 0.0, %v854
        %v856 = vpop.f32.mrb[0].mxu0
        %v857 = vadd.f32 0.0, %v856
        %v858 = vpop.f32.mrb[0].mxu0
        %v859 = vadd.f32 0.0, %v858
        %860 = vmatprep.mubr.bf16.mxu0 0
        %861 = vmatmul.mubr.bf16.gmra.mrb[0].mxu0 %v760
        %v862 = vpop.f32.mrb[0].mxu0
        %v863 = vadd.f32 0.0, %v862
        %v864 = vpop.f32.mrb[0].mxu0
        %v865 = vadd.f32 0.0, %v864
        %v866 = vpop.f32.mrb[0].mxu0
        %v867 = vadd.f32 0.0, %v866
        %v868 = vpop.f32.mrb[0].mxu0
        %v869 = vadd.f32 0.0, %v868
        %870 = vmatprep.mubr.bf16.mxu0 0
        %871 = vmatmul.mubr.bf16.gmra.mrb[0].mxu0 %v763
        %v872 = vpop.f32.mrb[0].mxu0
        %v873 = vadd.f32 0.0, %v872
        %v874 = vpop.f32.mrb[0].mxu0
        %v875 = vadd.f32 0.0, %v874
        %v876 = vpop.f32.mrb[0].mxu0
        %v877 = vadd.f32 0.0, %v876
        %v878 = vpop.f32.mrb[0].mxu0
        %v879 = vadd.f32 0.0, %v878
        %880 = vmatprep.mubr.bf16.mxu0 0
        %881 = vmatmul.mubr.bf16.gmra.mrb[0].mxu0 %v766
        %v882 = vpop.f32.mrb[0].mxu0
        %v883 = vadd.f32 0.0, %v882
        %v884 = vpop.f32.mrb[0].mxu0
        %v885 = vadd.f32 0.0, %v884
        %v886 = vpop.f32.mrb[0].mxu0
        %v887 = vadd.f32 0.0, %v886
        %v888 = vpop.f32.mrb[0].mxu0
        %v889 = vadd.f32 0.0, %v888
        %890 = vmatprep.mubr.bf16.mxu0 0
        %891 = vmatmul.mubr.bf16.gmra.mrb[0].mxu0 %v769
        %v892 = vpop.f32.mrb[0].mxu0
        %v893 = vadd.f32 0.0, %v892
        %v894 = vpop.f32.mrb[0].mxu0
        %v895 = vadd.f32 0.0, %v894
        %v896 = vpop.f32.mrb[0].mxu0
        %v897 = vadd.f32 0.0, %v896
        %v898 = vpop.f32.mrb[0].mxu0
        %v899 = vadd.f32 0.0, %v898
        %900 = vmatprep.mubr.bf16.mxu0 0
        %901 = vmatmul.mubr.bf16.gmra.mrb[0].mxu0 %v772
        %v902 = vpop.f32.mrb[0].mxu0
        %v903 = vadd.f32 0.0, %v902
        %v904 = vpop.f32.mrb[0].mxu0
        %v905 = vadd.f32 0.0, %v904
        %v906 = vpop.f32.mrb[0].mxu0
        %v907 = vadd.f32 0.0, %v906
        %v908 = vpop.f32.mrb[0].mxu0
        %v909 = vadd.f32 0.0, %v908
        %910 = vmatprep.mubr.bf16.mxu0 0
        %911 = vmatmul.mubr.bf16.gmra.mrb[0].mxu0 %v775
        %v912 = vpop.f32.mrb[0].mxu0
        %v913 = vadd.f32 0.0, %v912
        %v914 = vpop.f32.mrb[0].mxu0
        %v915 = vadd.f32 0.0, %v914
        %v916 = vpop.f32.mrb[0].mxu0
        %v917 = vadd.f32 0.0, %v916
        %v918 = vpop.f32.mrb[0].mxu0
        %v919 = vadd.f32 0.0, %v918
        %920 = vmatprep.mubr.bf16.mxu0 0
        %921 = vmatmul.mubr.bf16.gmra.mrb[0].mxu0 %v778
        %v922 = vpop.f32.mrb[0].mxu0
        %v923 = vadd.f32 0.0, %v922
        %v924 = vpop.f32.mrb[0].mxu0
        %v925 = vadd.f32 0.0, %v924
        %v926 = vpop.f32.mrb[0].mxu0
        %v927 = vadd.f32 0.0, %v926
        %v928 = vpop.f32.mrb[0].mxu0
        %v929 = vadd.f32 0.0, %v928
        %930 = vmatprep.mubr.bf16.mxu0 0
        %931 = vmatmul.mubr.bf16.gmra.mrb[0].mxu0 %v781
        %v932 = vpop.f32.mrb[0].mxu0
        %v933 = vadd.f32 0.0, %v932
        %v934 = vpop.f32.mrb[0].mxu0
        %v935 = vadd.f32 0.0, %v934
        %v936 = vpop.f32.mrb[0].mxu0
        %v937 = vadd.f32 0.0, %v936
        %v938 = vpop.f32.mrb[0].mxu0
        %v939 = vadd.f32 0.0, %v938
        %940 = vmatprep.mubr.bf16.mxu0 0
        %941 = vmatmul.mubr.bf16.gmra.mrb[0].mxu0 %v784
        %v942 = vpop.f32.mrb[0].mxu0
        %v943 = vadd.f32 0.0, %v942
        %v944 = vpop.f32.mrb[0].mxu0
        %v945 = vadd.f32 0.0, %v944
        %v946 = vpop.f32.mrb[0].mxu0
        %v947 = vadd.f32 0.0, %v946
        %v948 = vpop.f32.mrb[0].mxu0
        %v949 = vadd.f32 0.0, %v948
        %950 = vmatprep.mubr.bf16.mxu0 0
        %951 = vmatmul.mubr.bf16.gmra.mrb[0].mxu0 %v787
        %v952 = vpop.f32.mrb[0].mxu0
        %v953 = vadd.f32 0.0, %v952
        %v954 = vpop.f32.mrb[0].mxu0
        %v955 = vadd.f32 0.0, %v954
        %v956 = vpop.f32.mrb[0].mxu0
        %v957 = vadd.f32 0.0, %v956
        %v958 = vpop.f32.mrb[0].mxu0
        %v959 = vadd.f32 0.0, %v958
        %960 = vmatprep.mubr.bf16.mxu0 0
        %961 = vmatmul.mubr.bf16.gmra.mrb[0].mxu0 %v790
        %v962 = vpop.f32.mrb[0].mxu0
        %v963 = vadd.f32 0.0, %v962
        %v964 = vpop.f32.mrb[0].mxu0
        %v965 = vadd.f32 0.0, %v964
        %v966 = vpop.f32.mrb[0].mxu0
        %v967 = vadd.f32 0.0, %v966
        %v968 = vpop.f32.mrb[0].mxu0
        %v969 = vadd.f32 0.0, %v968
        %970 = vmatprep.mubr.bf16.mxu0 0
        %971 = vmatmul.mubr.bf16.gmra.mrb[0].mxu0 %v793
        %v972 = vpop.f32.mrb[0].mxu0
        %v973 = vadd.f32 0.0, %v972
        %v974 = vpop.f32.mrb[0].mxu0
        %v975 = vadd.f32 0.0, %v974
        %v976 = vpop.f32.mrb[0].mxu0
        %v977 = vadd.f32 0.0, %v976
        %v978 = vpop.f32.mrb[0].mxu0
        %v979 = vadd.f32 0.0, %v978
        %980 = vmatprep.mubr.bf16.mxu0 0
        %981 = vmatmul.mubr.bf16.gmra.mrb[0].mxu0 %v796
        %v982 = vpop.f32.mrb[0].mxu0
        %v983 = vadd.f32 0.0, %v982
        %v984 = vpop.f32.mrb[0].mxu0
        %v985 = vadd.f32 0.0, %v984
        %v986 = vpop.f32.mrb[0].mxu0
        %v987 = vadd.f32 0.0, %v986
        %v988 = vpop.f32.mrb[0].mxu0
        %v989 = vadd.f32 0.0, %v988
        %990 = vdwg.mxu0
        %v991 = vmax.f32 %v833, %v835
        %992 = vmax.xlane.f32.xlu0 %v991
        %v993 = vpop.xlane.xlu0 %992
        %v994 = vmax.f32 %v837, %v839
        %995 = vmax.xlane.f32.xlu0 %v994
        %v996 = vpop.xlane.xlu0 %995
        %v997 = vmax.f32 %v843, %v845
        %998 = vmax.xlane.f32.xlu0 %v997
        %v999 = vpop.xlane.xlu0 %998
        %v1000 = vmax.f32 %v847, %v849
        %1001 = vmax.xlane.f32.xlu0 %v1000
        %v1002 = vpop.xlane.xlu0 %1001
        %v1003 = vmax.f32 %v853, %v855
        %1004 = vmax.xlane.f32.xlu0 %v1003
        %v1005 = vpop.xlane.xlu0 %1004
        %v1006 = vmax.f32 %v857, %v859
        %1007 = vmax.xlane.f32.xlu0 %v1006
        %v1008 = vpop.xlane.xlu0 %1007
        %v1009 = vmax.f32 %v863, %v865
        %1010 = vmax.xlane.f32.xlu0 %v1009
        %v1011 = vpop.xlane.xlu0 %1010
        %v1012 = vmax.f32 %v867, %v869
        %1013 = vmax.xlane.f32.xlu0 %v1012
        %v1014 = vpop.xlane.xlu0 %1013
        %v1015 = vmax.f32 %v873, %v875
        %1016 = vmax.xlane.f32.xlu0 %v1015
        %v1017 = vpop.xlane.xlu0 %1016
        %v1018 = vmax.f32 %v877, %v879
        %1019 = vmax.xlane.f32.xlu0 %v1018
        %v1020 = vpop.xlane.xlu0 %1019
        %v1021 = vmax.f32 %v883, %v885
        %1022 = vmax.xlane.f32.xlu0 %v1021
        %v1023 = vpop.xlane.xlu0 %1022
        %v1024 = vmax.f32 %v887, %v889
        %1025 = vmax.xlane.f32.xlu0 %v1024
        %v1026 = vpop.xlane.xlu0 %1025
        %v1027 = vmax.f32 %v893, %v895
        %1028 = vmax.xlane.f32.xlu0 %v1027
        %v1029 = vpop.xlane.xlu0 %1028
        %v1030 = vmax.f32 %v897, %v899
        %1031 = vmax.xlane.f32.xlu0 %v1030
        %v1032 = vpop.xlane.xlu0 %1031
        %v1033 = vmax.f32 %v903, %v905
        %1034 = vmax.xlane.f32.xlu0 %v1033
        %v1035 = vpop.xlane.xlu0 %1034
        %v1036 = vmax.f32 %v907, %v909
        %1037 = vmax.xlane.f32.xlu0 %v1036
        %v1038 = vpop.xlane.xlu0 %1037
        %v1039 = vmax.f32 %v913, %v915
        %1040 = vmax.xlane.f32.xlu0 %v1039
        %v1041 = vpop.xlane.xlu0 %1040
        %v1042 = vmax.f32 %v917, %v919
        %1043 = vmax.xlane.f32.xlu0 %v1042
        %v1044 = vpop.xlane.xlu0 %1043
        %v1045 = vmax.f32 %v923, %v925
        %1046 = vmax.xlane.f32.xlu0 %v1045
        %v1047 = vpop.xlane.xlu0 %1046
        %v1048 = vmax.f32 %v927, %v929
        %1049 = vmax.xlane.f32.xlu0 %v1048
        %v1050 = vpop.xlane.xlu0 %1049
        %v1051 = vmax.f32 %v933, %v935
        %1052 = vmax.xlane.f32.xlu0 %v1051
        %v1053 = vpop.xlane.xlu0 %1052
        %v1054 = vmax.f32 %v937, %v939
        %1055 = vmax.xlane.f32.xlu0 %v1054
        %v1056 = vpop.xlane.xlu0 %1055
        %v1057 = vmax.f32 %v943, %v945
        %1058 = vmax.xlane.f32.xlu0 %v1057
        %v1059 = vpop.xlane.xlu0 %1058
        %v1060 = vmax.f32 %v947, %v949
        %1061 = vmax.xlane.f32.xlu0 %v1060
        %v1062 = vpop.xlane.xlu0 %1061
        %v1063 = vmax.f32 %v953, %v955
        %1064 = vmax.xlane.f32.xlu0 %v1063
        %v1065 = vpop.xlane.xlu0 %1064
        %v1066 = vmax.f32 %v957, %v959
        %1067 = vmax.xlane.f32.xlu0 %v1066
        %v1068 = vpop.xlane.xlu0 %1067
        %v1069 = vmax.f32 %v963, %v965
        %1070 = vmax.xlane.f32.xlu0 %v1069
        %v1071 = vpop.xlane.xlu0 %1070
        %v1072 = vmax.f32 %v967, %v969
        %1073 = vmax.xlane.f32.xlu0 %v1072
        %v1074 = vpop.xlane.xlu0 %1073
        %v1075 = vmax.f32 %v973, %v975
        %1076 = vmax.xlane.f32.xlu0 %v1075
        %v1077 = vpop.xlane.xlu0 %1076
        %v1078 = vmax.f32 %v977, %v979
        %1079 = vmax.xlane.f32.xlu0 %v1078
        %v1080 = vpop.xlane.xlu0 %1079
        %v1081 = vmax.f32 %v983, %v985
        %1082 = vmax.xlane.f32.xlu0 %v1081
        %v1083 = vpop.xlane.xlu0 %1082
        %v1084 = vmax.f32 %v987, %v989
        %1085 = vmax.xlane.f32.xlu0 %v1084
        %v1086 = vpop.xlane.xlu0 %1085
        %v1087 = vsub.f32 %v833, %v993
        %v1088 = vsub.f32 %v835, %v993
        %v1089 = vsub.f32 %v837, %v996
        %v1090 = vsub.f32 %v839, %v996
        %v1091 = vsub.f32 %v843, %v999
        %v1092 = vsub.f32 %v845, %v999
        %v1093 = vsub.f32 %v847, %v1002
        %v1094 = vsub.f32 %v849, %v1002
        %v1095 = vsub.f32 %v853, %v1005
        %v1096 = vsub.f32 %v855, %v1005
        %v1097 = vsub.f32 %v857, %v1008
        %v1098 = vsub.f32 %v859, %v1008
        %v1099 = vsub.f32 %v863, %v1011
        %v1100 = vsub.f32 %v865, %v1011
        %v1101 = vsub.f32 %v867, %v1014
        %v1102 = vsub.f32 %v869, %v1014
        %v1103 = vsub.f32 %v873, %v1017
        %v1104 = vsub.f32 %v875, %v1017
        %v1105 = vsub.f32 %v877, %v1020
        %v1106 = vsub.f32 %v879, %v1020
        %v1107 = vsub.f32 %v883, %v1023
        %v1108 = vsub.f32 %v885, %v1023
        %v1109 = vsub.f32 %v887, %v1026
        %v1110 = vsub.f32 %v889, %v1026
        %v1111 = vsub.f32 %v893, %v1029
        %v1112 = vsub.f32 %v895, %v1029
        %v1113 = vsub.f32 %v897, %v1032
        %v1114 = vsub.f32 %v899, %v1032
        %v1115 = vsub.f32 %v903, %v1035
        %v1116 = vsub.f32 %v905, %v1035
        %v1117 = vsub.f32 %v907, %v1038
        %v1118 = vsub.f32 %v909, %v1038
        %v1119 = vsub.f32 %v913, %v1041
        %v1120 = vsub.f32 %v915, %v1041
        %v1121 = vsub.f32 %v917, %v1044
        %v1122 = vsub.f32 %v919, %v1044
        %v1123 = vsub.f32 %v923, %v1047
        %v1124 = vsub.f32 %v925, %v1047
        %v1125 = vsub.f32 %v927, %v1050
        %v1126 = vsub.f32 %v929, %v1050
        %v1127 = vsub.f32 %v933, %v1053
        %v1128 = vsub.f32 %v935, %v1053
        %v1129 = vsub.f32 %v937, %v1056
        %v1130 = vsub.f32 %v939, %v1056
        %v1131 = vsub.f32 %v943, %v1059
        %v1132 = vsub.f32 %v945, %v1059
        %v1133 = vsub.f32 %v947, %v1062
        %v1134 = vsub.f32 %v949, %v1062
        %v1135 = vsub.f32 %v953, %v1065
        %v1136 = vsub.f32 %v955, %v1065
        %v1137 = vsub.f32 %v957, %v1068
        %v1138 = vsub.f32 %v959, %v1068
        %v1139 = vsub.f32 %v963, %v1071
        %v1140 = vsub.f32 %v965, %v1071
        %v1141 = vsub.f32 %v967, %v1074
        %v1142 = vsub.f32 %v969, %v1074
        %v1143 = vsub.f32 %v973, %v1077
        %v1144 = vsub.f32 %v975, %v1077
        %v1145 = vsub.f32 %v977, %v1080
        %v1146 = vsub.f32 %v979, %v1080
        %v1147 = vsub.f32 %v983, %v1083
        %v1148 = vsub.f32 %v985, %v1083
        %v1149 = vsub.f32 %v987, %v1086
        %v1150 = vsub.f32 %v989, %v1086
        %v1151 = vmul.f32 %v1087, 1.442695
        %v1152 = vpow.pop %v1151
        %v1153 = vmul.f32 %v1088, 1.442695
        %v1154 = vpow.pop %v1153
        %v1155 = vmul.f32 %v1089, 1.442695
        %v1156 = vpow.pop %v1155
        %v1157 = vmul.f32 %v1090, 1.442695
        %v1158 = vpow.pop %v1157
        %v1159 = vmul.f32 %v1091, 1.442695
        %v1160 = vpow.pop %v1159
        %v1161 = vmul.f32 %v1092, 1.442695
        %v1162 = vpow.pop %v1161
        %v1163 = vmul.f32 %v1093, 1.442695
        %v1164 = vpow.pop %v1163
        %v1165 = vmul.f32 %v1094, 1.442695
        %v1166 = vpow.pop %v1165
        %v1167 = vmul.f32 %v1095, 1.442695
        %v1168 = vpow.pop %v1167
        %v1169 = vmul.f32 %v1096, 1.442695
        %v1170 = vpow.pop %v1169
        %v1171 = vmul.f32 %v1097, 1.442695
        %v1172 = vpow.pop %v1171
        %v1173 = vmul.f32 %v1098, 1.442695
        %v1174 = vpow.pop %v1173
        %v1175 = vmul.f32 %v1099, 1.442695
        %v1176 = vpow.pop %v1175
        %v1177 = vmul.f32 %v1100, 1.442695
        %v1178 = vpow.pop %v1177
        %v1179 = vmul.f32 %v1101, 1.442695
        %v1180 = vpow.pop %v1179
        %v1181 = vmul.f32 %v1102, 1.442695
        %v1182 = vpow.pop %v1181
        %v1183 = vmul.f32 %v1103, 1.442695
        %v1184 = vpow.pop %v1183
        %v1185 = vmul.f32 %v1104, 1.442695
        %v1186 = vpow.pop %v1185
        %v1187 = vmul.f32 %v1105, 1.442695
        %v1188 = vpow.pop %v1187
        %v1189 = vmul.f32 %v1106, 1.442695
        %v1190 = vpow.pop %v1189
        %v1191 = vmul.f32 %v1107, 1.442695
        %v1192 = vpow.pop %v1191
        %v1193 = vmul.f32 %v1108, 1.442695
        %v1194 = vpow.pop %v1193
        %v1195 = vmul.f32 %v1109, 1.442695
        %v1196 = vpow.pop %v1195
        %v1197 = vmul.f32 %v1110, 1.442695
        %v1198 = vpow.pop %v1197
        %v1199 = vmul.f32 %v1111, 1.442695
        %v1200 = vpow.pop %v1199
        %v1201 = vmul.f32 %v1112, 1.442695
        %v1202 = vpow.pop %v1201
        %v1203 = vmul.f32 %v1113, 1.442695
        %v1204 = vpow.pop %v1203
        %v1205 = vmul.f32 %v1114, 1.442695
        %v1206 = vpow.pop %v1205
        %v1207 = vmul.f32 %v1115, 1.442695
        %v1208 = vpow.pop %v1207
        %v1209 = vmul.f32 %v1116, 1.442695
        %v1210 = vpow.pop %v1209
        %v1211 = vmul.f32 %v1117, 1.442695
        %v1212 = vpow.pop %v1211
        %v1213 = vmul.f32 %v1118, 1.442695
        %v1214 = vpow.pop %v1213
        %v1215 = vmul.f32 %v1119, 1.442695
        %v1216 = vpow.pop %v1215
        %v1217 = vmul.f32 %v1120, 1.442695
        %v1218 = vpow.pop %v1217
        %v1219 = vmul.f32 %v1121, 1.442695
        %v1220 = vpow.pop %v1219
        %v1221 = vmul.f32 %v1122, 1.442695
        %v1222 = vpow.pop %v1221
        %v1223 = vmul.f32 %v1123, 1.442695
        %v1224 = vpow.pop %v1223
        %v1225 = vmul.f32 %v1124, 1.442695
        %v1226 = vpow.pop %v1225
        %v1227 = vmul.f32 %v1125, 1.442695
        %v1228 = vpow.pop %v1227
        %v1229 = vmul.f32 %v1126, 1.442695
        %v1230 = vpow.pop %v1229
        %v1231 = vmul.f32 %v1127, 1.442695
        %v1232 = vpow.pop %v1231
        %v1233 = vmul.f32 %v1128, 1.442695
        %v1234 = vpow.pop %v1233
        %v1235 = vmul.f32 %v1129, 1.442695
        %v1236 = vpow.pop %v1235
        %v1237 = vmul.f32 %v1130, 1.442695
        %v1238 = vpow.pop %v1237
        %v1239 = vmul.f32 %v1131, 1.442695
        %v1240 = vpow.pop %v1239
        %v1241 = vmul.f32 %v1132, 1.442695
        %v1242 = vpow.pop %v1241
        %v1243 = vmul.f32 %v1133, 1.442695
        %v1244 = vpow.pop %v1243
        %v1245 = vmul.f32 %v1134, 1.442695
        %v1246 = vpow.pop %v1245
        %v1247 = vmul.f32 %v1135, 1.442695
        %v1248 = vpow.pop %v1247
        %v1249 = vmul.f32 %v1136, 1.442695
        %v1250 = vpow.pop %v1249
        %v1251 = vmul.f32 %v1137, 1.442695
        %v1252 = vpow.pop %v1251
        %v1253 = vmul.f32 %v1138, 1.442695
        %v1254 = vpow.pop %v1253
        %v1255 = vmul.f32 %v1139, 1.442695
        %v1256 = vpow.pop %v1255
        %v1257 = vmul.f32 %v1140, 1.442695
        %v1258 = vpow.pop %v1257
        %v1259 = vmul.f32 %v1141, 1.442695
        %v1260 = vpow.pop %v1259
        %v1261 = vmul.f32 %v1142, 1.442695
        %v1262 = vpow.pop %v1261
        %v1263 = vmul.f32 %v1143, 1.442695
        %v1264 = vpow.pop %v1263
        %v1265 = vmul.f32 %v1144, 1.442695
        %v1266 = vpow.pop %v1265
        %v1267 = vmul.f32 %v1145, 1.442695
        %v1268 = vpow.pop %v1267
        %v1269 = vmul.f32 %v1146, 1.442695
        %v1270 = vpow.pop %v1269
        %v1271 = vmul.f32 %v1147, 1.442695
        %v1272 = vpow.pop %v1271
        %v1273 = vmul.f32 %v1148, 1.442695
        %v1274 = vpow.pop %v1273
        %v1275 = vmul.f32 %v1149, 1.442695
        %v1276 = vpow.pop %v1275
        %v1277 = vmul.f32 %v1150, 1.442695
        %v1278 = vpow.pop %v1277
        %v1279 = vadd.f32 %v1152, %v1154
        %1280 = vadd.xlane.f32.xlu0 %v1279
        %v1281 = vpop.xlane.xlu0 %1280
        %v1282 = vadd.f32 %v1156, %v1158
        %1283 = vadd.xlane.f32.xlu0 %v1282
        %v1284 = vpop.xlane.xlu0 %1283
        %v1285 = vadd.f32 %v1160, %v1162
        %1286 = vadd.xlane.f32.xlu0 %v1285
        %v1287 = vpop.xlane.xlu0 %1286
        %v1288 = vadd.f32 %v1164, %v1166
        %1289 = vadd.xlane.f32.xlu0 %v1288
        %v1290 = vpop.xlane.xlu0 %1289
        %v1291 = vadd.f32 %v1168, %v1170
        %1292 = vadd.xlane.f32.xlu0 %v1291
        %v1293 = vpop.xlane.xlu0 %1292
        %v1294 = vadd.f32 %v1172, %v1174
        %1295 = vadd.xlane.f32.xlu0 %v1294
        %v1296 = vpop.xlane.xlu0 %1295
        %v1297 = vadd.f32 %v1176, %v1178
        %1298 = vadd.xlane.f32.xlu0 %v1297
        %v1299 = vpop.xlane.xlu0 %1298
        %v1300 = vadd.f32 %v1180, %v1182
        %1301 = vadd.xlane.f32.xlu0 %v1300
        %v1302 = vpop.xlane.xlu0 %1301
        %v1303 = vadd.f32 %v1184, %v1186
        %1304 = vadd.xlane.f32.xlu0 %v1303
        %v1305 = vpop.xlane.xlu0 %1304
        %v1306 = vadd.f32 %v1188, %v1190
        %1307 = vadd.xlane.f32.xlu0 %v1306
        %v1308 = vpop.xlane.xlu0 %1307
        %v1309 = vadd.f32 %v1192, %v1194
        %1310 = vadd.xlane.f32.xlu0 %v1309
        %v1311 = vpop.xlane.xlu0 %1310
        %v1312 = vadd.f32 %v1196, %v1198
        %1313 = vadd.xlane.f32.xlu0 %v1312
        %v1314 = vpop.xlane.xlu0 %1313
        %v1315 = vadd.f32 %v1200, %v1202
        %1316 = vadd.xlane.f32.xlu0 %v1315
        %v1317 = vpop.xlane.xlu0 %1316
        %v1318 = vadd.f32 %v1204, %v1206
        %1319 = vadd.xlane.f32.xlu0 %v1318
        %v1320 = vpop.xlane.xlu0 %1319
        %v1321 = vadd.f32 %v1208, %v1210
        %1322 = vadd.xlane.f32.xlu0 %v1321
        %v1323 = vpop.xlane.xlu0 %1322
        %v1324 = vadd.f32 %v1212, %v1214
        %1325 = vadd.xlane.f32.xlu0 %v1324
        %v1326 = vpop.xlane.xlu0 %1325
        %v1327 = vadd.f32 %v1216, %v1218
        %1328 = vadd.xlane.f32.xlu0 %v1327
        %v1329 = vpop.xlane.xlu0 %1328
        %v1330 = vadd.f32 %v1220, %v1222
        %1331 = vadd.xlane.f32.xlu0 %v1330
        %v1332 = vpop.xlane.xlu0 %1331
        %v1333 = vadd.f32 %v1224, %v1226
        %1334 = vadd.xlane.f32.xlu0 %v1333
        %v1335 = vpop.xlane.xlu0 %1334
        %v1336 = vadd.f32 %v1228, %v1230
        %1337 = vadd.xlane.f32.xlu0 %v1336
        %v1338 = vpop.xlane.xlu0 %1337
        %v1339 = vadd.f32 %v1232, %v1234
        %1340 = vadd.xlane.f32.xlu0 %v1339
        %v1341 = vpop.xlane.xlu0 %1340
        %v1342 = vadd.f32 %v1236, %v1238
        %1343 = vadd.xlane.f32.xlu0 %v1342
        %v1344 = vpop.xlane.xlu0 %1343
        %v1345 = vadd.f32 %v1240, %v1242
        %1346 = vadd.xlane.f32.xlu0 %v1345
        %v1347 = vpop.xlane.xlu0 %1346
        %v1348 = vadd.f32 %v1244, %v1246
        %1349 = vadd.xlane.f32.xlu0 %v1348
        %v1350 = vpop.xlane.xlu0 %1349
        %v1351 = vadd.f32 %v1248, %v1250
        %1352 = vadd.xlane.f32.xlu0 %v1351
        %v1353 = vpop.xlane.xlu0 %1352
        %v1354 = vadd.f32 %v1252, %v1254
        %1355 = vadd.xlane.f32.xlu0 %v1354
        %v1356 = vpop.xlane.xlu0 %1355
        %v1357 = vadd.f32 %v1256, %v1258
        %1358 = vadd.xlane.f32.xlu0 %v1357
        %v1359 = vpop.xlane.xlu0 %1358
        %v1360 = vadd.f32 %v1260, %v1262
        %1361 = vadd.xlane.f32.xlu0 %v1360
        %v1362 = vpop.xlane.xlu0 %1361
        %v1363 = vadd.f32 %v1264, %v1266
        %1364 = vadd.xlane.f32.xlu0 %v1363
        %v1365 = vpop.xlane.xlu0 %1364
        %v1366 = vadd.f32 %v1268, %v1270
        %1367 = vadd.xlane.f32.xlu0 %v1366
        %v1368 = vpop.xlane.xlu0 %1367
        %v1369 = vadd.f32 %v1272, %v1274
        %1370 = vadd.xlane.f32.xlu0 %v1369
        %v1371 = vpop.xlane.xlu0 %1370
        %v1372 = vadd.f32 %v1276, %v1278
        %1373 = vadd.xlane.f32.xlu0 %v1372
        %v1374 = vpop.xlane.xlu0 %1373
        %v1375 = vrcp.pop %v1281
        %v1376 = vrcp.pop %v1284
        %v1377 = vrcp.pop %v1287
        %v1378 = vrcp.pop %v1290
        %v1379 = vrcp.pop %v1293
        %v1380 = vrcp.pop %v1296
        %v1381 = vrcp.pop %v1299
        %v1382 = vrcp.pop %v1302
        %v1383 = vrcp.pop %v1305
        %v1384 = vrcp.pop %v1308
        %v1385 = vrcp.pop %v1311
        %v1386 = vrcp.pop %v1314
        %v1387 = vrcp.pop %v1317
        %v1388 = vrcp.pop %v1320
        %v1389 = vrcp.pop %v1323
        %v1390 = vrcp.pop %v1326
        %v1391 = vrcp.pop %v1329
        %v1392 = vrcp.pop %v1332
        %v1393 = vrcp.pop %v1335
        %v1394 = vrcp.pop %v1338
        %v1395 = vrcp.pop %v1341
        %v1396 = vrcp.pop %v1344
        %v1397 = vrcp.pop %v1347
        %v1398 = vrcp.pop %v1350
        %v1399 = vrcp.pop %v1353
        %v1400 = vrcp.pop %v1356
        %v1401 = vrcp.pop %v1359
        %v1402 = vrcp.pop %v1362
        %v1403 = vrcp.pop %v1365
        %v1404 = vrcp.pop %v1368
        %v1405 = vrcp.pop %v1371
        %v1406 = vrcp.pop %v1374
        %v1407 = vpack.c.bf16 %v1156, %v1152
        %v1408 = vpack.c.bf16 %v1158, %v1154
        %v1409 = vpack.c.bf16 %v1164, %v1160
        %v1410 = vpack.c.bf16 %v1166, %v1162
        %v1411 = vpack.c.bf16 %v1172, %v1168
        %v1412 = vpack.c.bf16 %v1174, %v1170
        %v1413 = vpack.c.bf16 %v1180, %v1176
        %v1414 = vpack.c.bf16 %v1182, %v1178
        %v1415 = vpack.c.bf16 %v1188, %v1184
        %v1416 = vpack.c.bf16 %v1190, %v1186
        %v1417 = vpack.c.bf16 %v1196, %v1192
        %v1418 = vpack.c.bf16 %v1198, %v1194
        %v1419 = vpack.c.bf16 %v1204, %v1200
        %v1420 = vpack.c.bf16 %v1206, %v1202
        %v1421 = vpack.c.bf16 %v1212, %v1208
        %v1422 = vpack.c.bf16 %v1214, %v1210
        %v1423 = vpack.c.bf16 %v1220, %v1216
        %v1424 = vpack.c.bf16 %v1222, %v1218
        %v1425 = vpack.c.bf16 %v1228, %v1224
        %v1426 = vpack.c.bf16 %v1230, %v1226
        %v1427 = vpack.c.bf16 %v1236, %v1232
        %v1428 = vpack.c.bf16 %v1238, %v1234
        %v1429 = vpack.c.bf16 %v1244, %v1240
        %v1430 = vpack.c.bf16 %v1246, %v1242
        %v1431 = vpack.c.bf16 %v1252, %v1248
        %v1432 = vpack.c.bf16 %v1254, %v1250
        %v1433 = vpack.c.bf16 %v1260, %v1256
        %v1434 = vpack.c.bf16 %v1262, %v1258
        %v1435 = vpack.c.bf16 %v1268, %v1264
        %v1436 = vpack.c.bf16 %v1270, %v1266
        %v1437 = vpack.c.bf16 %v1276, %v1272
        %v1438 = vpack.c.bf16 %v1278, %v1274
        %1439 = vmatprep.subr.bf16.mxu0 0
        %1440 = vmatpush1.bf16.msra.mxu0 %v729
        %1441 = vmatprep.subr.bf16.mxu0 0
        %1442 = vmatpush1.bf16.msra.mxu0 %v730
        %1443 = vmatprep.subr.bf16.mxu0 0
        %1444 = vmatpush1.bf16.msra.mxu0 %v731
        %1445 = vmatprep.subr.bf16.mxu0 0
        %1446 = vmatpush1.bf16.msra.mxu0 %v732
        %1447 = vmatprep.subr.bf16.mxu0 0
        %1448 = vmatpush1.bf16.msra.mxu0 %v733
        %1449 = vmatprep.subr.bf16.mxu0 0
        %1450 = vmatpush1.bf16.msra.mxu0 %v734
        %1451 = vmatprep.subr.bf16.mxu0 0
        %1452 = vmatpush1.bf16.msra.mxu0 %v735
        %1453 = vmatprep.subr.bf16.mxu0 0
        %1454 = vmatpush1.bf16.msra.mxu0 %v736
        %1455 = vmatprep.subr.bf16.mxu0 0
        %1456 = vmatpush1.bf16.msra.mxu0 %v737
        %1457 = vmatprep.subr.bf16.mxu0 0
        %1458 = vmatpush1.bf16.msra.mxu0 %v738
        %1459 = vmatprep.subr.bf16.mxu0 0
        %1460 = vmatpush1.bf16.msra.mxu0 %v739
        %1461 = vmatprep.subr.bf16.mxu0 0
        %1462 = vmatpush1.bf16.msra.mxu0 %v740
        %1463 = vmatprep.subr.bf16.mxu0 0
        %1464 = vmatpush1.bf16.msra.mxu0 %v741
        %1465 = vmatprep.subr.bf16.mxu0 0
        %1466 = vmatpush1.bf16.msra.mxu0 %v742
        %1467 = vmatprep.subr.bf16.mxu0 0
        %1468 = vmatpush1.bf16.msra.mxu0 %v743
        %1469 = vmatprep.subr.bf16.mxu0 0
        %1470 = vmatpush1.bf16.msra.mxu0 %v744
        %1471 = vmatprep.mubr.bf16.mxu0 %v1408
        %1472 = vmatmul.mubr.bf16.gmra.mrb[0].mxu0 %v1407
        %v1473 = vpop.f32.mrb[0].mxu0
        %v1474 = vadd.f32 0.0, %v1473
        %v1475 = vpop.f32.mrb[0].mxu0
        %v1476 = vpop.f32.mrb[0].mxu0
        %v1477 = vadd.f32 0.0, %v1476
        %v1478 = vpop.f32.mrb[0].mxu0
        %1479 = vmatprep.mubr.bf16.mxu0 %v1410
        %1480 = vmatmul.mubr.bf16.gmra.mrb[0].mxu0 %v1409
        %v1481 = vpop.f32.mrb[0].mxu0
        %v1482 = vadd.f32 0.0, %v1481
        %v1483 = vpop.f32.mrb[0].mxu0
        %v1484 = vpop.f32.mrb[0].mxu0
        %v1485 = vadd.f32 0.0, %v1484
        %v1486 = vpop.f32.mrb[0].mxu0
        %1487 = vmatprep.mubr.bf16.mxu0 %v1412
        %1488 = vmatmul.mubr.bf16.gmra.mrb[0].mxu0 %v1411
        %v1489 = vpop.f32.mrb[0].mxu0
        %v1490 = vadd.f32 0.0, %v1489
        %v1491 = vpop.f32.mrb[0].mxu0
        %v1492 = vpop.f32.mrb[0].mxu0
        %v1493 = vadd.f32 0.0, %v1492
        %v1494 = vpop.f32.mrb[0].mxu0
        %1495 = vmatprep.mubr.bf16.mxu0 %v1414
        %1496 = vmatmul.mubr.bf16.gmra.mrb[0].mxu0 %v1413
        %v1497 = vpop.f32.mrb[0].mxu0
        %v1498 = vadd.f32 0.0, %v1497
        %v1499 = vpop.f32.mrb[0].mxu0
        %v1500 = vpop.f32.mrb[0].mxu0
        %v1501 = vadd.f32 0.0, %v1500
        %v1502 = vpop.f32.mrb[0].mxu0
        %1503 = vmatprep.mubr.bf16.mxu0 %v1416
        %1504 = vmatmul.mubr.bf16.gmra.mrb[0].mxu0 %v1415
        %v1505 = vpop.f32.mrb[0].mxu0
        %v1506 = vadd.f32 0.0, %v1505
        %v1507 = vpop.f32.mrb[0].mxu0
        %v1508 = vpop.f32.mrb[0].mxu0
        %v1509 = vadd.f32 0.0, %v1508
        %v1510 = vpop.f32.mrb[0].mxu0
        %1511 = vmatprep.mubr.bf16.mxu0 %v1418
        %1512 = vmatmul.mubr.bf16.gmra.mrb[0].mxu0 %v1417
        %v1513 = vpop.f32.mrb[0].mxu0
        %v1514 = vadd.f32 0.0, %v1513
        %v1515 = vpop.f32.mrb[0].mxu0
        %v1516 = vpop.f32.mrb[0].mxu0
        %v1517 = vadd.f32 0.0, %v1516
        %v1518 = vpop.f32.mrb[0].mxu0
        %1519 = vmatprep.mubr.bf16.mxu0 %v1420
        %1520 = vmatmul.mubr.bf16.gmra.mrb[0].mxu0 %v1419
        %v1521 = vpop.f32.mrb[0].mxu0
        %v1522 = vadd.f32 0.0, %v1521
        %v1523 = vpop.f32.mrb[0].mxu0
        %v1524 = vpop.f32.mrb[0].mxu0
        %v1525 = vadd.f32 0.0, %v1524
        %v1526 = vpop.f32.mrb[0].mxu0
        %1527 = vmatprep.mubr.bf16.mxu0 %v1422
        %1528 = vmatmul.mubr.bf16.gmra.mrb[0].mxu0 %v1421
        %v1529 = vpop.f32.mrb[0].mxu0
        %v1530 = vadd.f32 0.0, %v1529
        %v1531 = vpop.f32.mrb[0].mxu0
        %v1532 = vpop.f32.mrb[0].mxu0
        %v1533 = vadd.f32 0.0, %v1532
        %v1534 = vpop.f32.mrb[0].mxu0
        %1535 = vmatprep.mubr.bf16.mxu0 %v1424
        %1536 = vmatmul.mubr.bf16.gmra.mrb[0].mxu0 %v1423
        %v1537 = vpop.f32.mrb[0].mxu0
        %v1538 = vadd.f32 0.0, %v1537
        %v1539 = vpop.f32.mrb[0].mxu0
        %v1540 = vpop.f32.mrb[0].mxu0
        %v1541 = vadd.f32 0.0, %v1540
        %v1542 = vpop.f32.mrb[0].mxu0
        %1543 = vmatprep.mubr.bf16.mxu0 %v1426
        %1544 = vmatmul.mubr.bf16.gmra.mrb[0].mxu0 %v1425
        %v1545 = vpop.f32.mrb[0].mxu0
        %v1546 = vadd.f32 0.0, %v1545
        %v1547 = vpop.f32.mrb[0].mxu0
        %v1548 = vpop.f32.mrb[0].mxu0
        %v1549 = vadd.f32 0.0, %v1548
        %v1550 = vpop.f32.mrb[0].mxu0
        %1551 = vmatprep.mubr.bf16.mxu0 %v1428
        %1552 = vmatmul.mubr.bf16.gmra.mrb[0].mxu0 %v1427
        %v1553 = vpop.f32.mrb[0].mxu0
        %v1554 = vadd.f32 0.0, %v1553
        %v1555 = vpop.f32.mrb[0].mxu0
        %v1556 = vpop.f32.mrb[0].mxu0
        %v1557 = vadd.f32 0.0, %v1556
        %v1558 = vpop.f32.mrb[0].mxu0
        %1559 = vmatprep.mubr.bf16.mxu0 %v1430
        %1560 = vmatmul.mubr.bf16.gmra.mrb[0].mxu0 %v1429
        %v1561 = vpop.f32.mrb[0].mxu0
        %v1562 = vadd.f32 0.0, %v1561
        %v1563 = vpop.f32.mrb[0].mxu0
        %v1564 = vpop.f32.mrb[0].mxu0
        %v1565 = vadd.f32 0.0, %v1564
        %v1566 = vpop.f32.mrb[0].mxu0
        %1567 = vmatprep.mubr.bf16.mxu0 %v1432
        %1568 = vmatmul.mubr.bf16.gmra.mrb[0].mxu0 %v1431
        %v1569 = vpop.f32.mrb[0].mxu0
        %v1570 = vadd.f32 0.0, %v1569
        %v1571 = vpop.f32.mrb[0].mxu0
        %v1572 = vpop.f32.mrb[0].mxu0
        %v1573 = vadd.f32 0.0, %v1572
        %v1574 = vpop.f32.mrb[0].mxu0
        %1575 = vmatprep.mubr.bf16.mxu0 %v1434
        %1576 = vmatmul.mubr.bf16.gmra.mrb[0].mxu0 %v1433
        %v1577 = vpop.f32.mrb[0].mxu0
        %v1578 = vadd.f32 0.0, %v1577
        %v1579 = vpop.f32.mrb[0].mxu0
        %v1580 = vpop.f32.mrb[0].mxu0
        %v1581 = vadd.f32 0.0, %v1580
        %v1582 = vpop.f32.mrb[0].mxu0
        %1583 = vmatprep.mubr.bf16.mxu0 %v1436
        %1584 = vmatmul.mubr.bf16.gmra.mrb[0].mxu0 %v1435
        %v1585 = vpop.f32.mrb[0].mxu0
        %v1586 = vadd.f32 0.0, %v1585
        %v1587 = vpop.f32.mrb[0].mxu0
        %v1588 = vpop.f32.mrb[0].mxu0
        %v1589 = vadd.f32 0.0, %v1588
        %v1590 = vpop.f32.mrb[0].mxu0
        %1591 = vmatprep.mubr.bf16.mxu0 %v1438
        %1592 = vmatmul.mubr.bf16.gmra.mrb[0].mxu0 %v1437
        %v1593 = vpop.f32.mrb[0].mxu0
        %v1594 = vadd.f32 0.0, %v1593
        %v1595 = vpop.f32.mrb[0].mxu0
        %v1596 = vpop.f32.mrb[0].mxu0
        %v1597 = vadd.f32 0.0, %v1596
        %v1598 = vpop.f32.mrb[0].mxu0
        %1599 = vdwg.mxu0
        %v1600 = vmul.f32 %v1474, %v1375
        %v1601 = vmul.f32 %v1477, %v1376
        %v1602 = vmul.f32 %v1482, %v1377
        %v1603 = vmul.f32 %v1485, %v1378
        %v1604 = vmul.f32 %v1490, %v1379
        %v1605 = vmul.f32 %v1493, %v1380
        %v1606 = vmul.f32 %v1498, %v1381
        %v1607 = vmul.f32 %v1501, %v1382
        %v1608 = vmul.f32 %v1506, %v1383
        %v1609 = vmul.f32 %v1509, %v1384
        %v1610 = vmul.f32 %v1514, %v1385
        %v1611 = vmul.f32 %v1517, %v1386
        %v1612 = vmul.f32 %v1522, %v1387
        %v1613 = vmul.f32 %v1525, %v1388
        %v1614 = vmul.f32 %v1530, %v1389
        %v1615 = vmul.f32 %v1533, %v1390
        %v1616 = vmul.f32 %v1538, %v1391
        %v1617 = vmul.f32 %v1541, %v1392
        %v1618 = vmul.f32 %v1546, %v1393
        %v1619 = vmul.f32 %v1549, %v1394
        %v1620 = vmul.f32 %v1554, %v1395
        %v1621 = vmul.f32 %v1557, %v1396
        %v1622 = vmul.f32 %v1562, %v1397
        %v1623 = vmul.f32 %v1565, %v1398
        %v1624 = vmul.f32 %v1570, %v1399
        %v1625 = vmul.f32 %v1573, %v1400
        %v1626 = vmul.f32 %v1578, %v1401
        %v1627 = vmul.f32 %v1581, %v1402
        %v1628 = vmul.f32 %v1586, %v1403
        %v1629 = vmul.f32 %v1589, %v1404
        %v1630 = vmul.f32 %v1594, %v1405
        %v1631 = vmul.f32 %v1597, %v1406
        %v1633 = vsel %vm277, %v230, 0
        %v1636 = vsel %vm277, %v231, 0
        %v1639 = vsel %vm277, %v232, 0
        %v1642 = vsel %vm277, %v233, 0
        %1644 = vmatprep.subr.mxu0 %v292
        %1645 = vmatpush1.msra.mxu0 %v290
        %1646 = vmatprep.subr.mxu0 0.0
        %1647 = vmatpush1.msra.mxu0 0.0
        %1648 = vmatprep.subr.mxu0 0.0
        %1649 = vmatpush1.msra.mxu0 0.0
        %1650 = vmatprep.subr.mxu0 0.0
        %1651 = vmatpush1.msra.mxu0 0.0
        %1652 = vmatprep.subr.mxu0 0.0
        %1653 = vmatpush1.msra.mxu0 0.0
        %1654 = vmatprep.subr.mxu0 0.0
        %1655 = vmatpush1.msra.mxu0 0.0
        %1656 = vmatprep.subr.mxu0 0.0
        %1657 = vmatpush1.msra.mxu0 0.0
        %1658 = vmatprep.subr.mxu0 0.0
        %1659 = vmatpush1.msra.mxu0 0.0
        %1660 = vmatprep.subr.mxu0 0.0
        %1661 = vmatpush1.msra.mxu0 0.0
        %1662 = vmatprep.subr.mxu0 0.0
        %1663 = vmatpush1.msra.mxu0 0.0
        %1664 = vmatprep.subr.mxu0 0.0
        %1665 = vmatpush1.msra.mxu0 0.0
        %1666 = vmatprep.subr.mxu0 0.0
        %1667 = vmatpush1.msra.mxu0 0.0
        %1668 = vmatprep.subr.mxu0 0.0
        %1669 = vmatpush1.msra.mxu0 0.0
        %1670 = vmatprep.subr.mxu0 0.0
        %1671 = vmatpush1.msra.mxu0 0.0
        %1672 = vmatprep.subr.mxu0 0.0
        %1673 = vmatpush1.msra.mxu0 0.0
        %1674 = vmatprep.subr.mxu0 0.0
        %1675 = vmatpush1.msra.mxu0 0.0
        %1676 = vmatprep.subr.mxu0 0.0
        %1677 = vmatpush1.msra.mxu0 0.0
        %1678 = vmatprep.subr.mxu0 0.0
        %1679 = vmatpush1.msra.mxu0 0.0
        %1680 = vmatprep.subr.mxu0 0.0
        %1681 = vmatpush1.msra.mxu0 0.0
        %1682 = vmatprep.subr.mxu0 0.0
        %1683 = vmatpush1.msra.mxu0 0.0
        %1684 = vmatprep.subr.mxu0 0.0
        %1685 = vmatpush1.msra.mxu0 0.0
        %1686 = vmatprep.subr.mxu0 0.0
        %1687 = vmatpush1.msra.mxu0 0.0
        %1688 = vmatprep.subr.mxu0 0.0
        %1689 = vmatpush1.msra.mxu0 0.0
        %1690 = vmatprep.subr.mxu0 0.0
        %1691 = vmatpush1.msra.mxu0 0.0
        %1692 = vmatprep.subr.mxu0 0.0
        %1693 = vmatpush1.msra.mxu0 0.0
        %1694 = vmatprep.subr.mxu0 0.0
        %1695 = vmatpush1.msra.mxu0 0.0
        %1696 = vmatprep.subr.mxu0 0.0
        %1697 = vmatpush1.msra.mxu0 0.0
        %1698 = vmatprep.subr.mxu0 0.0
        %1699 = vmatpush1.msra.mxu0 0.0
        %1700 = vmatprep.subr.mxu0 0.0
        %1701 = vmatpush1.msra.mxu0 0.0
        %1702 = vmatprep.subr.mxu0 0.0
        %1703 = vmatpush1.msra.mxu0 0.0
        %1704 = vmatprep.subr.mxu0 0.0
        %1705 = vmatpush1.msra.mxu0 0.0
        %1706 = vmatprep.subr.mxu0 0.0
        %1707 = vmatpush1.msra.mxu0 0.0
        %1708 = vmatprep.mubr.f32.mxu0 0.0
        %1709 = vmatmul.mubr.f32.gmra.mrb[0].mxu0 %v1633
        %v1710 = vpop.f32.mrb[0].mxu0
        %v1711 = vadd.f32 0.0, %v1710
        %v1712 = vpop.f32.mrb[0].mxu0
        %v1713 = vadd.f32 0.0, %v1712
        %1714 = vmatprep.mubr.f32.mxu0 0.0
        %1715 = vmatmul.mubr.f32.gmra.mrb[0].mxu0 %v1636
        %v1716 = vpop.f32.mrb[0].mxu0
        %v1717 = vadd.f32 0.0, %v1716
        %v1718 = vpop.f32.mrb[0].mxu0
        %v1719 = vadd.f32 0.0, %v1718
        %1720 = vmatprep.mubr.f32.mxu0 0.0
        %1721 = vmatmul.mubr.f32.gmra.mrb[0].mxu0 %v1639
        %v1722 = vpop.f32.mrb[0].mxu0
        %v1723 = vadd.f32 0.0, %v1722
        %v1724 = vpop.f32.mrb[0].mxu0
        %v1725 = vadd.f32 0.0, %v1724
        %1726 = vmatprep.mubr.f32.mxu0 0.0
        %1727 = vmatmul.mubr.f32.gmra.mrb[0].mxu0 %v1642
        %v1728 = vpop.f32.mrb[0].mxu0
        %v1729 = vadd.f32 0.0, %v1728
        %v1730 = vpop.f32.mrb[0].mxu0
        %v1731 = vadd.f32 0.0, %v1730
        %1732 = vdwg.mxu0
        %v1734 = vsel %vm277, %v246, 0
        %v1737 = vsel %vm277, %v247, 0
        %v1740 = vsel %vm277, %v248, 0
        %v1743 = vsel %vm277, %v249, 0
        %1745 = vmatprep.subr.mxu0 %v292
        %1746 = vmatpush1.msra.mxu0 %v290
        %1747 = vmatprep.subr.mxu0 0.0
        %1748 = vmatpush1.msra.mxu0 0.0
        %1749 = vmatprep.subr.mxu0 0.0
        %1750 = vmatpush1.msra.mxu0 0.0
        %1751 = vmatprep.subr.mxu0 0.0
        %1752 = vmatpush1.msra.mxu0 0.0
        %1753 = vmatprep.subr.mxu0 0.0
        %1754 = vmatpush1.msra.mxu0 0.0
        %1755 = vmatprep.subr.mxu0 0.0
        %1756 = vmatpush1.msra.mxu0 0.0
        %1757 = vmatprep.subr.mxu0 0.0
        %1758 = vmatpush1.msra.mxu0 0.0
        %1759 = vmatprep.subr.mxu0 0.0
        %1760 = vmatpush1.msra.mxu0 0.0
        %1761 = vmatprep.subr.mxu0 0.0
        %1762 = vmatpush1.msra.mxu0 0.0
        %1763 = vmatprep.subr.mxu0 0.0
        %1764 = vmatpush1.msra.mxu0 0.0
        %1765 = vmatprep.subr.mxu0 0.0
        %1766 = vmatpush1.msra.mxu0 0.0
        %1767 = vmatprep.subr.mxu0 0.0
        %1768 = vmatpush1.msra.mxu0 0.0
        %1769 = vmatprep.subr.mxu0 0.0
        %1770 = vmatpush1.msra.mxu0 0.0
        %1771 = vmatprep.subr.mxu0 0.0
        %1772 = vmatpush1.msra.mxu0 0.0
        %1773 = vmatprep.subr.mxu0 0.0
        %1774 = vmatpush1.msra.mxu0 0.0
        %1775 = vmatprep.subr.mxu0 0.0
        %1776 = vmatpush1.msra.mxu0 0.0
        %1777 = vmatprep.subr.mxu0 0.0
        %1778 = vmatpush1.msra.mxu0 0.0
        %1779 = vmatprep.subr.mxu0 0.0
        %1780 = vmatpush1.msra.mxu0 0.0
        %1781 = vmatprep.subr.mxu0 0.0
        %1782 = vmatpush1.msra.mxu0 0.0
        %1783 = vmatprep.subr.mxu0 0.0
        %1784 = vmatpush1.msra.mxu0 0.0
        %1785 = vmatprep.subr.mxu0 0.0
        %1786 = vmatpush1.msra.mxu0 0.0
        %1787 = vmatprep.subr.mxu0 0.0
        %1788 = vmatpush1.msra.mxu0 0.0
        %1789 = vmatprep.subr.mxu0 0.0
        %1790 = vmatpush1.msra.mxu0 0.0
        %1791 = vmatprep.subr.mxu0 0.0
        %1792 = vmatpush1.msra.mxu0 0.0
        %1793 = vmatprep.subr.mxu0 0.0
        %1794 = vmatpush1.msra.mxu0 0.0
        %1795 = vmatprep.subr.mxu0 0.0
        %1796 = vmatpush1.msra.mxu0 0.0
        %1797 = vmatprep.subr.mxu0 0.0
        %1798 = vmatpush1.msra.mxu0 0.0
        %1799 = vmatprep.subr.mxu0 0.0
        %1800 = vmatpush1.msra.mxu0 0.0
        %1801 = vmatprep.subr.mxu0 0.0
        %1802 = vmatpush1.msra.mxu0 0.0
        %1803 = vmatprep.subr.mxu0 0.0
        %1804 = vmatpush1.msra.mxu0 0.0
        %1805 = vmatprep.subr.mxu0 0.0
        %1806 = vmatpush1.msra.mxu0 0.0
        %1807 = vmatprep.subr.mxu0 0.0
        %1808 = vmatpush1.msra.mxu0 0.0
        %1809 = vmatprep.mubr.f32.mxu0 0.0
        %1810 = vmatmul.mubr.f32.gmra.mrb[0].mxu0 %v1734
        %v1811 = vpop.f32.mrb[0].mxu0
        %v1812 = vadd.f32 0.0, %v1811
        %v1813 = vpop.f32.mrb[0].mxu0
        %v1814 = vadd.f32 0.0, %v1813
        %1815 = vmatprep.mubr.f32.mxu0 0.0
        %1816 = vmatmul.mubr.f32.gmra.mrb[0].mxu0 %v1737
        %v1817 = vpop.f32.mrb[0].mxu0
        %v1818 = vadd.f32 0.0, %v1817
        %v1819 = vpop.f32.mrb[0].mxu0
        %v1820 = vadd.f32 0.0, %v1819
        %1821 = vmatprep.mubr.f32.mxu0 0.0
        %1822 = vmatmul.mubr.f32.gmra.mrb[0].mxu0 %v1740
        %v1823 = vpop.f32.mrb[0].mxu0
        %v1824 = vadd.f32 0.0, %v1823
        %v1825 = vpop.f32.mrb[0].mxu0
        %v1826 = vadd.f32 0.0, %v1825
        %1827 = vmatprep.mubr.f32.mxu0 0.0
        %1828 = vmatmul.mubr.f32.gmra.mrb[0].mxu0 %v1743
        %v1829 = vpop.f32.mrb[0].mxu0
        %v1830 = vadd.f32 0.0, %v1829
        %v1831 = vpop.f32.mrb[0].mxu0
        %v1832 = vadd.f32 0.0, %v1831
        %1833 = vdwg.mxu0
        %v1835 = vsel %vm277, %v262, 0
        %v1838 = vsel %vm277, %v263, 0
        %v1841 = vsel %vm277, %v264, 0
        %v1844 = vsel %vm277, %v265, 0
        %1846 = vmatprep.subr.mxu0 %v292
        %1847 = vmatpush1.msra.mxu0 %v290
        %1848 = vmatprep.subr.mxu0 0.0
        %1849 = vmatpush1.msra.mxu0 0.0
        %1850 = vmatprep.subr.mxu0 0.0
        %1851 = vmatpush1.msra.mxu0 0.0
        %1852 = vmatprep.subr.mxu0 0.0
        %1853 = vmatpush1.msra.mxu0 0.0
        %1854 = vmatprep.subr.mxu0 0.0
        %1855 = vmatpush1.msra.mxu0 0.0
        %1856 = vmatprep.subr.mxu0 0.0
        %1857 = vmatpush1.msra.mxu0 0.0
        %1858 = vmatprep.subr.mxu0 0.0
        %1859 = vmatpush1.msra.mxu0 0.0
        %1860 = vmatprep.subr.mxu0 0.0
        %1861 = vmatpush1.msra.mxu0 0.0
        %1862 = vmatprep.subr.mxu0 0.0
        %1863 = vmatpush1.msra.mxu0 0.0
        %1864 = vmatprep.subr.mxu0 0.0
        %1865 = vmatpush1.msra.mxu0 0.0
        %1866 = vmatprep.subr.mxu0 0.0
        %1867 = vmatpush1.msra.mxu0 0.0
        %1868 = vmatprep.subr.mxu0 0.0
        %1869 = vmatpush1.msra.mxu0 0.0
        %1870 = vmatprep.subr.mxu0 0.0
        %1871 = vmatpush1.msra.mxu0 0.0
        %1872 = vmatprep.subr.mxu0 0.0
        %1873 = vmatpush1.msra.mxu0 0.0
        %1874 = vmatprep.subr.mxu0 0.0
        %1875 = vmatpush1.msra.mxu0 0.0
        %1876 = vmatprep.subr.mxu0 0.0
        %1877 = vmatpush1.msra.mxu0 0.0
        %1878 = vmatprep.subr.mxu0 0.0
        %1879 = vmatpush1.msra.mxu0 0.0
        %1880 = vmatprep.subr.mxu0 0.0
        %1881 = vmatpush1.msra.mxu0 0.0
        %1882 = vmatprep.subr.mxu0 0.0
        %1883 = vmatpush1.msra.mxu0 0.0
        %1884 = vmatprep.subr.mxu0 0.0
        %1885 = vmatpush1.msra.mxu0 0.0
        %1886 = vmatprep.subr.mxu0 0.0
        %1887 = vmatpush1.msra.mxu0 0.0
        %1888 = vmatprep.subr.mxu0 0.0
        %1889 = vmatpush1.msra.mxu0 0.0
        %1890 = vmatprep.subr.mxu0 0.0
        %1891 = vmatpush1.msra.mxu0 0.0
        %1892 = vmatprep.subr.mxu0 0.0
        %1893 = vmatpush1.msra.mxu0 0.0
        %1894 = vmatprep.subr.mxu0 0.0
        %1895 = vmatpush1.msra.mxu0 0.0
        %1896 = vmatprep.subr.mxu0 0.0
        %1897 = vmatpush1.msra.mxu0 0.0
        %1898 = vmatprep.subr.mxu0 0.0
        %1899 = vmatpush1.msra.mxu0 0.0
        %1900 = vmatprep.subr.mxu0 0.0
        %1901 = vmatpush1.msra.mxu0 0.0
        %1902 = vmatprep.subr.mxu0 0.0
        %1903 = vmatpush1.msra.mxu0 0.0
        %1904 = vmatprep.subr.mxu0 0.0
        %1905 = vmatpush1.msra.mxu0 0.0
        %1906 = vmatprep.subr.mxu0 0.0
        %1907 = vmatpush1.msra.mxu0 0.0
        %1908 = vmatprep.subr.mxu0 0.0
        %1909 = vmatpush1.msra.mxu0 0.0
        %1910 = vmatprep.mubr.f32.mxu0 0.0
        %1911 = vmatmul.mubr.f32.gmra.mrb[0].mxu0 %v1835
        %v1912 = vpop.f32.mrb[0].mxu0
        %v1913 = vadd.f32 0.0, %v1912
        %v1914 = vpop.f32.mrb[0].mxu0
        %v1915 = vadd.f32 0.0, %v1914
        %1916 = vmatprep.mubr.f32.mxu0 0.0
        %1917 = vmatmul.mubr.f32.gmra.mrb[0].mxu0 %v1838
        %v1918 = vpop.f32.mrb[0].mxu0
        %v1919 = vadd.f32 0.0, %v1918
        %v1920 = vpop.f32.mrb[0].mxu0
        %v1921 = vadd.f32 0.0, %v1920
        %1922 = vmatprep.mubr.f32.mxu0 0.0
        %1923 = vmatmul.mubr.f32.gmra.mrb[0].mxu0 %v1841
        %v1924 = vpop.f32.mrb[0].mxu0
        %v1925 = vadd.f32 0.0, %v1924
        %v1926 = vpop.f32.mrb[0].mxu0
        %v1927 = vadd.f32 0.0, %v1926
        %1928 = vmatprep.mubr.f32.mxu0 0.0
        %1929 = vmatmul.mubr.f32.gmra.mrb[0].mxu0 %v1844
        %v1930 = vpop.f32.mrb[0].mxu0
        %v1931 = vadd.f32 0.0, %v1930
        %v1932 = vpop.f32.mrb[0].mxu0
        %v1933 = vadd.f32 0.0, %v1932
        %1934 = vdwg.mxu0
        %1935 = vxpose.xlu0.b32.start [1/16] %v1711, 128
        %1936 = vxpose.xlu0.b32.cont [2/16] %v1717, 128
        %1937 = vxpose.xlu0.b32.cont [3/16] %v1723, 128
        %1938 = vxpose.xlu0.b32.cont [4/16] %v1729, 128
        %1939 = vxpose.xlu0.b32.cont [5/16] 0.0, 128
        %1940 = vxpose.xlu0.b32.cont [6/16] 0.0, 128
        %1941 = vxpose.xlu0.b32.cont [7/16] 0.0, 128
        %1942 = vxpose.xlu0.b32.cont [8/16] 0.0, 128
        %1943 = vxpose.xlu0.b32.cont [9/16] 0.0, 128
        %1944 = vxpose.xlu0.b32.cont [10/16] 0.0, 128
        %1945 = vxpose.xlu0.b32.cont [11/16] 0.0, 128
        %1946 = vxpose.xlu0.b32.cont [12/16] 0.0, 128
        %1947 = vxpose.xlu0.b32.cont [13/16] 0.0, 128
        %1948 = vxpose.xlu0.b32.cont [14/16] 0.0, 128
        %1949 = vxpose.xlu0.b32.cont [15/16] 0.0, 128
        %1950 = vxpose.xlu0.b32.end [16/16] 0.0, 128
        %v1951 = vpop.trf.xlu0
        %v1952 = vpop.trf.xlu0
        %v1953 = vpop.trf.xlu0
        %v1954 = vpop.trf.xlu0
        %v1955 = vpop.trf.xlu0
        %v1956 = vpop.trf.xlu0
        %v1957 = vpop.trf.xlu0
        %v1958 = vpop.trf.xlu0
        %v1959 = vpop.trf.xlu0
        %v1960 = vpop.trf.xlu0
        %v1961 = vpop.trf.xlu0
        %v1962 = vpop.trf.xlu0
        %v1963 = vpop.trf.xlu0
        %v1964 = vpop.trf.xlu0
        %v1965 = vpop.trf.xlu0
        %v1966 = vpop.trf.xlu0
        %1967 = vxpose.xlu0.b32.start [1/16] %v1713, 128
        %1968 = vxpose.xlu0.b32.cont [2/16] %v1719, 128
        %1969 = vxpose.xlu0.b32.cont [3/16] %v1725, 128
        %1970 = vxpose.xlu0.b32.cont [4/16] %v1731, 128
        %1971 = vxpose.xlu0.b32.cont [5/16] 0.0, 128
        %1972 = vxpose.xlu0.b32.cont [6/16] 0.0, 128
        %1973 = vxpose.xlu0.b32.cont [7/16] 0.0, 128
        %1974 = vxpose.xlu0.b32.cont [8/16] 0.0, 128
        %1975 = vxpose.xlu0.b32.cont [9/16] 0.0, 128
        %1976 = vxpose.xlu0.b32.cont [10/16] 0.0, 128
        %1977 = vxpose.xlu0.b32.cont [11/16] 0.0, 128
        %1978 = vxpose.xlu0.b32.cont [12/16] 0.0, 128
        %1979 = vxpose.xlu0.b32.cont [13/16] 0.0, 128
        %1980 = vxpose.xlu0.b32.cont [14/16] 0.0, 128
        %1981 = vxpose.xlu0.b32.cont [15/16] 0.0, 128
        %1982 = vxpose.xlu0.b32.end [16/16] 0.0, 128
        %v1983 = vpop.trf.xlu0
        %v1984 = vpop.trf.xlu0
        %v1985 = vpop.trf.xlu0
        %v1986 = vpop.trf.xlu0
        %v1987 = vpop.trf.xlu0
        %v1988 = vpop.trf.xlu0
        %v1989 = vpop.trf.xlu0
        %v1990 = vpop.trf.xlu0
        %v1991 = vpop.trf.xlu0
        %v1992 = vpop.trf.xlu0
        %v1993 = vpop.trf.xlu0
        %v1994 = vpop.trf.xlu0
        %v1995 = vpop.trf.xlu0
        %v1996 = vpop.trf.xlu0
        %v1997 = vpop.trf.xlu0
        %v1998 = vpop.trf.xlu0
        %v1999 = vpack.c.bf16 %v1952, %v1951
        %v2000 = vpack.c.bf16 %v1954, %v1953
        %v2001 = vpack.c.bf16 %v1956, %v1955
        %v2002 = vpack.c.bf16 %v1958, %v1957
        %v2003 = vpack.c.bf16 %v1960, %v1959
        %v2004 = vpack.c.bf16 %v1962, %v1961
        %v2005 = vpack.c.bf16 %v1964, %v1963
        %v2006 = vpack.c.bf16 %v1966, %v1965
        %v2007 = vpack.c.bf16 %v1984, %v1983
        %v2008 = vpack.c.bf16 %v1986, %v1985
        %v2009 = vpack.c.bf16 %v1988, %v1987
        %v2010 = vpack.c.bf16 %v1990, %v1989
        %v2011 = vpack.c.bf16 %v1992, %v1991
        %v2012 = vpack.c.bf16 %v1994, %v1993
        %v2013 = vpack.c.bf16 %v1996, %v1995
        %v2014 = vpack.c.bf16 %v1998, %v1997
        %2015 = vxpose.xlu0.b32.start [1/16] %v1913, 128
        %2016 = vxpose.xlu0.b32.cont [2/16] %v1919, 128
        %2017 = vxpose.xlu0.b32.cont [3/16] %v1925, 128
        %2018 = vxpose.xlu0.b32.cont [4/16] %v1931, 128
        %2019 = vxpose.xlu0.b32.cont [5/16] 0.0, 128
        %2020 = vxpose.xlu0.b32.cont [6/16] 0.0, 128
        %2021 = vxpose.xlu0.b32.cont [7/16] 0.0, 128
        %2022 = vxpose.xlu0.b32.cont [8/16] 0.0, 128
        %2023 = vxpose.xlu0.b32.cont [9/16] 0.0, 128
        %2024 = vxpose.xlu0.b32.cont [10/16] 0.0, 128
        %2025 = vxpose.xlu0.b32.cont [11/16] 0.0, 128
        %2026 = vxpose.xlu0.b32.cont [12/16] 0.0, 128
        %2027 = vxpose.xlu0.b32.cont [13/16] 0.0, 128
        %2028 = vxpose.xlu0.b32.cont [14/16] 0.0, 128
        %2029 = vxpose.xlu0.b32.cont [15/16] 0.0, 128
        %2030 = vxpose.xlu0.b32.end [16/16] 0.0, 128
        %v2031 = vpop.trf.xlu0
        %v2032 = vpop.trf.xlu0
        %v2033 = vpop.trf.xlu0
        %v2034 = vpop.trf.xlu0
        %v2035 = vpop.trf.xlu0
        %v2036 = vpop.trf.xlu0
        %v2037 = vpop.trf.xlu0
        %v2038 = vpop.trf.xlu0
        %v2039 = vpop.trf.xlu0
        %v2040 = vpop.trf.xlu0
        %v2041 = vpop.trf.xlu0
        %v2042 = vpop.trf.xlu0
        %v2043 = vpop.trf.xlu0
        %v2044 = vpop.trf.xlu0
        %v2045 = vpop.trf.xlu0
        %v2046 = vpop.trf.xlu0
        %2047 = vxpose.xlu0.b32.start [1/16] %v1915, 128
        %2048 = vxpose.xlu0.b32.cont [2/16] %v1921, 128
        %2049 = vxpose.xlu0.b32.cont [3/16] %v1927, 128
        %2050 = vxpose.xlu0.b32.cont [4/16] %v1933, 128
        %2051 = vxpose.xlu0.b32.cont [5/16] 0.0, 128
        %2052 = vxpose.xlu0.b32.cont [6/16] 0.0, 128
        %2053 = vxpose.xlu0.b32.cont [7/16] 0.0, 128
        %2054 = vxpose.xlu0.b32.cont [8/16] 0.0, 128
        %2055 = vxpose.xlu0.b32.cont [9/16] 0.0, 128
        %2056 = vxpose.xlu0.b32.cont [10/16] 0.0, 128
        %2057 = vxpose.xlu0.b32.cont [11/16] 0.0, 128
        %2058 = vxpose.xlu0.b32.cont [12/16] 0.0, 128
        %2059 = vxpose.xlu0.b32.cont [13/16] 0.0, 128
        %2060 = vxpose.xlu0.b32.cont [14/16] 0.0, 128
        %2061 = vxpose.xlu0.b32.cont [15/16] 0.0, 128
        %2062 = vxpose.xlu0.b32.end [16/16] 0.0, 128
        %v2063 = vpop.trf.xlu0
        %v2064 = vpop.trf.xlu0
        %v2065 = vpop.trf.xlu0
        %v2066 = vpop.trf.xlu0
        %v2067 = vpop.trf.xlu0
        %v2068 = vpop.trf.xlu0
        %v2069 = vpop.trf.xlu0
        %v2070 = vpop.trf.xlu0
        %v2071 = vpop.trf.xlu0
        %v2072 = vpop.trf.xlu0
        %v2073 = vpop.trf.xlu0
        %v2074 = vpop.trf.xlu0
        %v2075 = vpop.trf.xlu0
        %v2076 = vpop.trf.xlu0
        %v2077 = vpop.trf.xlu0
        %v2078 = vpop.trf.xlu0
        %v2079 = vpack.c.bf16 %v2032, %v2031
        %v2080 = vpack.c.bf16 %v2034, %v2033
        %v2081 = vpack.c.bf16 %v2036, %v2035
        %v2082 = vpack.c.bf16 %v2038, %v2037
        %v2083 = vpack.c.bf16 %v2040, %v2039
        %v2084 = vpack.c.bf16 %v2042, %v2041
        %v2085 = vpack.c.bf16 %v2044, %v2043
        %v2086 = vpack.c.bf16 %v2046, %v2045
        %v2087 = vpack.c.bf16 %v2064, %v2063
        %v2088 = vpack.c.bf16 %v2066, %v2065
        %v2089 = vpack.c.bf16 %v2068, %v2067
        %v2090 = vpack.c.bf16 %v2070, %v2069
        %v2091 = vpack.c.bf16 %v2072, %v2071
        %v2092 = vpack.c.bf16 %v2074, %v2073
        %v2093 = vpack.c.bf16 %v2076, %v2075
        %v2094 = vpack.c.bf16 %v2078, %v2077
        %v2095 = vpack.c.bf16 %v1818, %v1812
        %v2096 = vpack.c.bf16 %v1820, %v1814
        %v2097 = vpack.c.bf16 %v1830, %v1824
        %v2098 = vpack.c.bf16 %v1832, %v1826
        %v2100 = vsel %vm749, %v1999, 0
        %v2103 = vsel %vm749, %v2000, 0
        %v2106 = vsel %vm749, %v2001, 0
        %v2109 = vsel %vm749, %v2002, 0
        %v2112 = vsel %vm749, %v2003, 0
        %v2115 = vsel %vm749, %v2004, 0
        %v2118 = vsel %vm749, %v2005, 0
        %v2121 = vsel %vm749, %v2006, 0
        %v2124 = vsel %vm749, %v2007, 0
        %v2127 = vsel %vm749, %v2008, 0
        %v2130 = vsel %vm749, %v2009, 0
        %v2133 = vsel %vm749, %v2010, 0
        %v2136 = vsel %vm749, %v2011, 0
        %v2139 = vsel %vm749, %v2012, 0
        %v2142 = vsel %vm749, %v2013, 0
        %v2145 = vsel %vm749, %v2014, 0
        %2147 = vmatprep.subr.bf16.mxu0 %v2096
        %2148 = vmatpush1.bf16.msra.mxu0 %v2095
        %2149 = vmatprep.subr.bf16.mxu0 %v2098
        %2150 = vmatpush1.bf16.msra.mxu0 %v2097
        %2151 = vmatprep.subr.bf16.mxu0 0
        %2152 = vmatpush1.bf16.msra.mxu0 0
        %2153 = vmatprep.subr.bf16.mxu0 0
        %2154 = vmatpush1.bf16.msra.mxu0 0
        %2155 = vmatprep.subr.bf16.mxu0 0
        %2156 = vmatpush1.bf16.msra.mxu0 0
        %2157 = vmatprep.subr.bf16.mxu0 0
        %2158 = vmatpush1.bf16.msra.mxu0 0
        %2159 = vmatprep.subr.bf16.mxu0 0
        %2160 = vmatpush1.bf16.msra.mxu0 0
        %2161 = vmatprep.subr.bf16.mxu0 0
        %2162 = vmatpush1.bf16.msra.mxu0 0
        %2163 = vmatprep.subr.bf16.mxu0 0
        %2164 = vmatpush1.bf16.msra.mxu0 0
        %2165 = vmatprep.subr.bf16.mxu0 0
        %2166 = vmatpush1.bf16.msra.mxu0 0
        %2167 = vmatprep.subr.bf16.mxu0 0
        %2168 = vmatpush1.bf16.msra.mxu0 0
        %2169 = vmatprep.subr.bf16.mxu0 0
        %2170 = vmatpush1.bf16.msra.mxu0 0
        %2171 = vmatprep.subr.bf16.mxu0 0
        %2172 = vmatpush1.bf16.msra.mxu0 0
        %2173 = vmatprep.subr.bf16.mxu0 0
        %2174 = vmatpush1.bf16.msra.mxu0 0
        %2175 = vmatprep.subr.bf16.mxu0 0
        %2176 = vmatpush1.bf16.msra.mxu0 0
        %2177 = vmatprep.subr.bf16.mxu0 0
        %2178 = vmatpush1.bf16.msra.mxu0 0
        %2179 = vmatprep.mubr.bf16.mxu0 0
        %2180 = vmatmul.mubr.bf16.gmra.mrb[0].mxu0 %v2100
        %v2181 = vpop.f32.mrb[0].mxu0
        %v2182 = vadd.f32 0.0, %v2181
        %v2183 = vpop.f32.mrb[0].mxu0
        %v2184 = vadd.f32 0.0, %v2183
        %v2185 = vpop.f32.mrb[0].mxu0
        %v2186 = vadd.f32 0.0, %v2185
        %v2187 = vpop.f32.mrb[0].mxu0
        %v2188 = vadd.f32 0.0, %v2187
        %2189 = vmatprep.mubr.bf16.mxu0 0
        %2190 = vmatmul.mubr.bf16.gmra.mrb[0].mxu0 %v2103
        %v2191 = vpop.f32.mrb[0].mxu0
        %v2192 = vadd.f32 0.0, %v2191
        %v2193 = vpop.f32.mrb[0].mxu0
        %v2194 = vadd.f32 0.0, %v2193
        %v2195 = vpop.f32.mrb[0].mxu0
        %v2196 = vadd.f32 0.0, %v2195
        %v2197 = vpop.f32.mrb[0].mxu0
        %v2198 = vadd.f32 0.0, %v2197
        %2199 = vmatprep.mubr.bf16.mxu0 0
        %2200 = vmatmul.mubr.bf16.gmra.mrb[0].mxu0 %v2106
        %v2201 = vpop.f32.mrb[0].mxu0
        %v2202 = vadd.f32 0.0, %v2201
        %v2203 = vpop.f32.mrb[0].mxu0
        %v2204 = vadd.f32 0.0, %v2203
        %v2205 = vpop.f32.mrb[0].mxu0
        %v2206 = vadd.f32 0.0, %v2205
        %v2207 = vpop.f32.mrb[0].mxu0
        %v2208 = vadd.f32 0.0, %v2207
        %2209 = vmatprep.mubr.bf16.mxu0 0
        %2210 = vmatmul.mubr.bf16.gmra.mrb[0].mxu0 %v2109
        %v2211 = vpop.f32.mrb[0].mxu0
        %v2212 = vadd.f32 0.0, %v2211
        %v2213 = vpop.f32.mrb[0].mxu0
        %v2214 = vadd.f32 0.0, %v2213
        %v2215 = vpop.f32.mrb[0].mxu0
        %v2216 = vadd.f32 0.0, %v2215
        %v2217 = vpop.f32.mrb[0].mxu0
        %v2218 = vadd.f32 0.0, %v2217
        %2219 = vmatprep.mubr.bf16.mxu0 0
        %2220 = vmatmul.mubr.bf16.gmra.mrb[0].mxu0 %v2112
        %v2221 = vpop.f32.mrb[0].mxu0
        %v2222 = vadd.f32 0.0, %v2221
        %v2223 = vpop.f32.mrb[0].mxu0
        %v2224 = vadd.f32 0.0, %v2223
        %v2225 = vpop.f32.mrb[0].mxu0
        %v2226 = vadd.f32 0.0, %v2225
        %v2227 = vpop.f32.mrb[0].mxu0
        %v2228 = vadd.f32 0.0, %v2227
        %2229 = vmatprep.mubr.bf16.mxu0 0
        %2230 = vmatmul.mubr.bf16.gmra.mrb[0].mxu0 %v2115
        %v2231 = vpop.f32.mrb[0].mxu0
        %v2232 = vadd.f32 0.0, %v2231
        %v2233 = vpop.f32.mrb[0].mxu0
        %v2234 = vadd.f32 0.0, %v2233
        %v2235 = vpop.f32.mrb[0].mxu0
        %v2236 = vadd.f32 0.0, %v2235
        %v2237 = vpop.f32.mrb[0].mxu0
        %v2238 = vadd.f32 0.0, %v2237
        %2239 = vmatprep.mubr.bf16.mxu0 0
        %2240 = vmatmul.mubr.bf16.gmra.mrb[0].mxu0 %v2118
        %v2241 = vpop.f32.mrb[0].mxu0
        %v2242 = vadd.f32 0.0, %v2241
        %v2243 = vpop.f32.mrb[0].mxu0
        %v2244 = vadd.f32 0.0, %v2243
        %v2245 = vpop.f32.mrb[0].mxu0
        %v2246 = vadd.f32 0.0, %v2245
        %v2247 = vpop.f32.mrb[0].mxu0
        %v2248 = vadd.f32 0.0, %v2247
        %2249 = vmatprep.mubr.bf16.mxu0 0
        %2250 = vmatmul.mubr.bf16.gmra.mrb[0].mxu0 %v2121
        %v2251 = vpop.f32.mrb[0].mxu0
        %v2252 = vadd.f32 0.0, %v2251
        %v2253 = vpop.f32.mrb[0].mxu0
        %v2254 = vadd.f32 0.0, %v2253
        %v2255 = vpop.f32.mrb[0].mxu0
        %v2256 = vadd.f32 0.0, %v2255
        %v2257 = vpop.f32.mrb[0].mxu0
        %v2258 = vadd.f32 0.0, %v2257
        %2259 = vmatprep.mubr.bf16.mxu0 0
        %2260 = vmatmul.mubr.bf16.gmra.mrb[0].mxu0 %v2124
        %v2261 = vpop.f32.mrb[0].mxu0
        %v2262 = vadd.f32 0.0, %v2261
        %v2263 = vpop.f32.mrb[0].mxu0
        %v2264 = vadd.f32 0.0, %v2263
        %v2265 = vpop.f32.mrb[0].mxu0
        %v2266 = vadd.f32 0.0, %v2265
        %v2267 = vpop.f32.mrb[0].mxu0
        %v2268 = vadd.f32 0.0, %v2267
        %2269 = vmatprep.mubr.bf16.mxu0 0
        %2270 = vmatmul.mubr.bf16.gmra.mrb[0].mxu0 %v2127
        %v2271 = vpop.f32.mrb[0].mxu0
        %v2272 = vadd.f32 0.0, %v2271
        %v2273 = vpop.f32.mrb[0].mxu0
        %v2274 = vadd.f32 0.0, %v2273
        %v2275 = vpop.f32.mrb[0].mxu0
        %v2276 = vadd.f32 0.0, %v2275
        %v2277 = vpop.f32.mrb[0].mxu0
        %v2278 = vadd.f32 0.0, %v2277
        %2279 = vmatprep.mubr.bf16.mxu0 0
        %2280 = vmatmul.mubr.bf16.gmra.mrb[0].mxu0 %v2130
        %v2281 = vpop.f32.mrb[0].mxu0
        %v2282 = vadd.f32 0.0, %v2281
        %v2283 = vpop.f32.mrb[0].mxu0
        %v2284 = vadd.f32 0.0, %v2283
        %v2285 = vpop.f32.mrb[0].mxu0
        %v2286 = vadd.f32 0.0, %v2285
        %v2287 = vpop.f32.mrb[0].mxu0
        %v2288 = vadd.f32 0.0, %v2287
        %2289 = vmatprep.mubr.bf16.mxu0 0
        %2290 = vmatmul.mubr.bf16.gmra.mrb[0].mxu0 %v2133
        %v2291 = vpop.f32.mrb[0].mxu0
        %v2292 = vadd.f32 0.0, %v2291
        %v2293 = vpop.f32.mrb[0].mxu0
        %v2294 = vadd.f32 0.0, %v2293
        %v2295 = vpop.f32.mrb[0].mxu0
        %v2296 = vadd.f32 0.0, %v2295
        %v2297 = vpop.f32.mrb[0].mxu0
        %v2298 = vadd.f32 0.0, %v2297
        %2299 = vmatprep.mubr.bf16.mxu0 0
        %2300 = vmatmul.mubr.bf16.gmra.mrb[0].mxu0 %v2136
        %v2301 = vpop.f32.mrb[0].mxu0
        %v2302 = vadd.f32 0.0, %v2301
        %v2303 = vpop.f32.mrb[0].mxu0
        %v2304 = vadd.f32 0.0, %v2303
        %v2305 = vpop.f32.mrb[0].mxu0
        %v2306 = vadd.f32 0.0, %v2305
        %v2307 = vpop.f32.mrb[0].mxu0
        %v2308 = vadd.f32 0.0, %v2307
        %2309 = vmatprep.mubr.bf16.mxu0 0
        %2310 = vmatmul.mubr.bf16.gmra.mrb[0].mxu0 %v2139
        %v2311 = vpop.f32.mrb[0].mxu0
        %v2312 = vadd.f32 0.0, %v2311
        %v2313 = vpop.f32.mrb[0].mxu0
        %v2314 = vadd.f32 0.0, %v2313
        %v2315 = vpop.f32.mrb[0].mxu0
        %v2316 = vadd.f32 0.0, %v2315
        %v2317 = vpop.f32.mrb[0].mxu0
        %v2318 = vadd.f32 0.0, %v2317
        %2319 = vmatprep.mubr.bf16.mxu0 0
        %2320 = vmatmul.mubr.bf16.gmra.mrb[0].mxu0 %v2142
        %v2321 = vpop.f32.mrb[0].mxu0
        %v2322 = vadd.f32 0.0, %v2321
        %v2323 = vpop.f32.mrb[0].mxu0
        %v2324 = vadd.f32 0.0, %v2323
        %v2325 = vpop.f32.mrb[0].mxu0
        %v2326 = vadd.f32 0.0, %v2325
        %v2327 = vpop.f32.mrb[0].mxu0
        %v2328 = vadd.f32 0.0, %v2327
        %2329 = vmatprep.mubr.bf16.mxu0 0
        %2330 = vmatmul.mubr.bf16.gmra.mrb[0].mxu0 %v2145
        %v2331 = vpop.f32.mrb[0].mxu0
        %v2332 = vadd.f32 0.0, %v2331
        %v2333 = vpop.f32.mrb[0].mxu0
        %v2334 = vadd.f32 0.0, %v2333
        %v2335 = vpop.f32.mrb[0].mxu0
        %v2336 = vadd.f32 0.0, %v2335
        %v2337 = vpop.f32.mrb[0].mxu0
        %v2338 = vadd.f32 0.0, %v2337
        %2339 = vdwg.mxu0
        %v2340 = vmax.f32 %v2182, %v2184
        %2341 = vmax.xlane.f32.xlu0 %v2340
        %v2342 = vpop.xlane.xlu0 %2341
        %v2343 = vmax.f32 %v2186, %v2188
        %2344 = vmax.xlane.f32.xlu0 %v2343
        %v2345 = vpop.xlane.xlu0 %2344
        %v2346 = vmax.f32 %v2192, %v2194
        %2347 = vmax.xlane.f32.xlu0 %v2346
        %v2348 = vpop.xlane.xlu0 %2347
        %v2349 = vmax.f32 %v2196, %v2198
        %2350 = vmax.xlane.f32.xlu0 %v2349
        %v2351 = vpop.xlane.xlu0 %2350
        %v2352 = vmax.f32 %v2202, %v2204
        %2353 = vmax.xlane.f32.xlu0 %v2352
        %v2354 = vpop.xlane.xlu0 %2353
        %v2355 = vmax.f32 %v2206, %v2208
        %2356 = vmax.xlane.f32.xlu0 %v2355
        %v2357 = vpop.xlane.xlu0 %2356
        %v2358 = vmax.f32 %v2212, %v2214
        %2359 = vmax.xlane.f32.xlu0 %v2358
        %v2360 = vpop.xlane.xlu0 %2359
        %v2361 = vmax.f32 %v2216, %v2218
        %2362 = vmax.xlane.f32.xlu0 %v2361
        %v2363 = vpop.xlane.xlu0 %2362
        %v2364 = vmax.f32 %v2222, %v2224
        %2365 = vmax.xlane.f32.xlu0 %v2364
        %v2366 = vpop.xlane.xlu0 %2365
        %v2367 = vmax.f32 %v2226, %v2228
        %2368 = vmax.xlane.f32.xlu0 %v2367
        %v2369 = vpop.xlane.xlu0 %2368
        %v2370 = vmax.f32 %v2232, %v2234
        %2371 = vmax.xlane.f32.xlu0 %v2370
        %v2372 = vpop.xlane.xlu0 %2371
        %v2373 = vmax.f32 %v2236, %v2238
        %2374 = vmax.xlane.f32.xlu0 %v2373
        %v2375 = vpop.xlane.xlu0 %2374
        %v2376 = vmax.f32 %v2242, %v2244
        %2377 = vmax.xlane.f32.xlu0 %v2376
        %v2378 = vpop.xlane.xlu0 %2377
        %v2379 = vmax.f32 %v2246, %v2248
        %2380 = vmax.xlane.f32.xlu0 %v2379
        %v2381 = vpop.xlane.xlu0 %2380
        %v2382 = vmax.f32 %v2252, %v2254
        %2383 = vmax.xlane.f32.xlu0 %v2382
        %v2384 = vpop.xlane.xlu0 %2383
        %v2385 = vmax.f32 %v2256, %v2258
        %2386 = vmax.xlane.f32.xlu0 %v2385
        %v2387 = vpop.xlane.xlu0 %2386
        %v2388 = vmax.f32 %v2262, %v2264
        %2389 = vmax.xlane.f32.xlu0 %v2388
        %v2390 = vpop.xlane.xlu0 %2389
        %v2391 = vmax.f32 %v2266, %v2268
        %2392 = vmax.xlane.f32.xlu0 %v2391
        %v2393 = vpop.xlane.xlu0 %2392
        %v2394 = vmax.f32 %v2272, %v2274
        %2395 = vmax.xlane.f32.xlu0 %v2394
        %v2396 = vpop.xlane.xlu0 %2395
        %v2397 = vmax.f32 %v2276, %v2278
        %2398 = vmax.xlane.f32.xlu0 %v2397
        %v2399 = vpop.xlane.xlu0 %2398
        %v2400 = vmax.f32 %v2282, %v2284
        %2401 = vmax.xlane.f32.xlu0 %v2400
        %v2402 = vpop.xlane.xlu0 %2401
        %v2403 = vmax.f32 %v2286, %v2288
        %2404 = vmax.xlane.f32.xlu0 %v2403
        %v2405 = vpop.xlane.xlu0 %2404
        %v2406 = vmax.f32 %v2292, %v2294
        %2407 = vmax.xlane.f32.xlu0 %v2406
        %v2408 = vpop.xlane.xlu0 %2407
        %v2409 = vmax.f32 %v2296, %v2298
        %2410 = vmax.xlane.f32.xlu0 %v2409
        %v2411 = vpop.xlane.xlu0 %2410
        %v2412 = vmax.f32 %v2302, %v2304
        %2413 = vmax.xlane.f32.xlu0 %v2412
        %v2414 = vpop.xlane.xlu0 %2413
        %v2415 = vmax.f32 %v2306, %v2308
        %2416 = vmax.xlane.f32.xlu0 %v2415
        %v2417 = vpop.xlane.xlu0 %2416
        %v2418 = vmax.f32 %v2312, %v2314
        %2419 = vmax.xlane.f32.xlu0 %v2418
        %v2420 = vpop.xlane.xlu0 %2419
        %v2421 = vmax.f32 %v2316, %v2318
        %2422 = vmax.xlane.f32.xlu0 %v2421
        %v2423 = vpop.xlane.xlu0 %2422
        %v2424 = vmax.f32 %v2322, %v2324
        %2425 = vmax.xlane.f32.xlu0 %v2424
        %v2426 = vpop.xlane.xlu0 %2425
        %v2427 = vmax.f32 %v2326, %v2328
        %2428 = vmax.xlane.f32.xlu0 %v2427
        %v2429 = vpop.xlane.xlu0 %2428
        %v2430 = vmax.f32 %v2332, %v2334
        %2431 = vmax.xlane.f32.xlu0 %v2430
        %v2432 = vpop.xlane.xlu0 %2431
        %v2433 = vmax.f32 %v2336, %v2338
        %2434 = vmax.xlane.f32.xlu0 %v2433
        %v2435 = vpop.xlane.xlu0 %2434
        %v2436 = vsub.f32 %v2182, %v2342
        %v2437 = vsub.f32 %v2184, %v2342
        %v2438 = vsub.f32 %v2186, %v2345
        %v2439 = vsub.f32 %v2188, %v2345
        %v2440 = vsub.f32 %v2192, %v2348
        %v2441 = vsub.f32 %v2194, %v2348
        %v2442 = vsub.f32 %v2196, %v2351
        %v2443 = vsub.f32 %v2198, %v2351
        %v2444 = vsub.f32 %v2202, %v2354
        %v2445 = vsub.f32 %v2204, %v2354
        %v2446 = vsub.f32 %v2206, %v2357
        %v2447 = vsub.f32 %v2208, %v2357
        %v2448 = vsub.f32 %v2212, %v2360
        %v2449 = vsub.f32 %v2214, %v2360
        %v2450 = vsub.f32 %v2216, %v2363
        %v2451 = vsub.f32 %v2218, %v2363
        %v2452 = vsub.f32 %v2222, %v2366
        %v2453 = vsub.f32 %v2224, %v2366
        %v2454 = vsub.f32 %v2226, %v2369
        %v2455 = vsub.f32 %v2228, %v2369
        %v2456 = vsub.f32 %v2232, %v2372
        %v2457 = vsub.f32 %v2234, %v2372
        %v2458 = vsub.f32 %v2236, %v2375
        %v2459 = vsub.f32 %v2238, %v2375
        %v2460 = vsub.f32 %v2242, %v2378
        %v2461 = vsub.f32 %v2244, %v2378
        %v2462 = vsub.f32 %v2246, %v2381
        %v2463 = vsub.f32 %v2248, %v2381
        %v2464 = vsub.f32 %v2252, %v2384
        %v2465 = vsub.f32 %v2254, %v2384
        %v2466 = vsub.f32 %v2256, %v2387
        %v2467 = vsub.f32 %v2258, %v2387
        %v2468 = vsub.f32 %v2262, %v2390
        %v2469 = vsub.f32 %v2264, %v2390
        %v2470 = vsub.f32 %v2266, %v2393
        %v2471 = vsub.f32 %v2268, %v2393
        %v2472 = vsub.f32 %v2272, %v2396
        %v2473 = vsub.f32 %v2274, %v2396
        %v2474 = vsub.f32 %v2276, %v2399
        %v2475 = vsub.f32 %v2278, %v2399
        %v2476 = vsub.f32 %v2282, %v2402
        %v2477 = vsub.f32 %v2284, %v2402
        %v2478 = vsub.f32 %v2286, %v2405
        %v2479 = vsub.f32 %v2288, %v2405
        %v2480 = vsub.f32 %v2292, %v2408
        %v2481 = vsub.f32 %v2294, %v2408
        %v2482 = vsub.f32 %v2296, %v2411
        %v2483 = vsub.f32 %v2298, %v2411
        %v2484 = vsub.f32 %v2302, %v2414
        %v2485 = vsub.f32 %v2304, %v2414
        %v2486 = vsub.f32 %v2306, %v2417
        %v2487 = vsub.f32 %v2308, %v2417
        %v2488 = vsub.f32 %v2312, %v2420
        %v2489 = vsub.f32 %v2314, %v2420
        %v2490 = vsub.f32 %v2316, %v2423
        %v2491 = vsub.f32 %v2318, %v2423
        %v2492 = vsub.f32 %v2322, %v2426
        %v2493 = vsub.f32 %v2324, %v2426
        %v2494 = vsub.f32 %v2326, %v2429
        %v2495 = vsub.f32 %v2328, %v2429
        %v2496 = vsub.f32 %v2332, %v2432
        %v2497 = vsub.f32 %v2334, %v2432
        %v2498 = vsub.f32 %v2336, %v2435
        %v2499 = vsub.f32 %v2338, %v2435
        %v2500 = vmul.f32 %v2436, 1.442695
        %v2501 = vpow.pop %v2500
        %v2502 = vmul.f32 %v2437, 1.442695
        %v2503 = vpow.pop %v2502
        %v2504 = vmul.f32 %v2438, 1.442695
        %v2505 = vpow.pop %v2504
        %v2506 = vmul.f32 %v2439, 1.442695
        %v2507 = vpow.pop %v2506
        %v2508 = vmul.f32 %v2440, 1.442695
        %v2509 = vpow.pop %v2508
        %v2510 = vmul.f32 %v2441, 1.442695
        %v2511 = vpow.pop %v2510
        %v2512 = vmul.f32 %v2442, 1.442695
        %v2513 = vpow.pop %v2512
        %v2514 = vmul.f32 %v2443, 1.442695
        %v2515 = vpow.pop %v2514
        %v2516 = vmul.f32 %v2444, 1.442695
        %v2517 = vpow.pop %v2516
        %v2518 = vmul.f32 %v2445, 1.442695
        %v2519 = vpow.pop %v2518
        %v2520 = vmul.f32 %v2446, 1.442695
        %v2521 = vpow.pop %v2520
        %v2522 = vmul.f32 %v2447, 1.442695
        %v2523 = vpow.pop %v2522
        %v2524 = vmul.f32 %v2448, 1.442695
        %v2525 = vpow.pop %v2524
        %v2526 = vmul.f32 %v2449, 1.442695
        %v2527 = vpow.pop %v2526
        %v2528 = vmul.f32 %v2450, 1.442695
        %v2529 = vpow.pop %v2528
        %v2530 = vmul.f32 %v2451, 1.442695
        %v2531 = vpow.pop %v2530
        %v2532 = vmul.f32 %v2452, 1.442695
        %v2533 = vpow.pop %v2532
        %v2534 = vmul.f32 %v2453, 1.442695
        %v2535 = vpow.pop %v2534
        %v2536 = vmul.f32 %v2454, 1.442695
        %v2537 = vpow.pop %v2536
        %v2538 = vmul.f32 %v2455, 1.442695
        %v2539 = vpow.pop %v2538
        %v2540 = vmul.f32 %v2456, 1.442695
        %v2541 = vpow.pop %v2540
        %v2542 = vmul.f32 %v2457, 1.442695
        %v2543 = vpow.pop %v2542
        %v2544 = vmul.f32 %v2458, 1.442695
        %v2545 = vpow.pop %v2544
        %v2546 = vmul.f32 %v2459, 1.442695
        %v2547 = vpow.pop %v2546
        %v2548 = vmul.f32 %v2460, 1.442695
        %v2549 = vpow.pop %v2548
        %v2550 = vmul.f32 %v2461, 1.442695
        %v2551 = vpow.pop %v2550
        %v2552 = vmul.f32 %v2462, 1.442695
        %v2553 = vpow.pop %v2552
        %v2554 = vmul.f32 %v2463, 1.442695
        %v2555 = vpow.pop %v2554
        %v2556 = vmul.f32 %v2464, 1.442695
        %v2557 = vpow.pop %v2556
        %v2558 = vmul.f32 %v2465, 1.442695
        %v2559 = vpow.pop %v2558
        %v2560 = vmul.f32 %v2466, 1.442695
        %v2561 = vpow.pop %v2560
        %v2562 = vmul.f32 %v2467, 1.442695
        %v2563 = vpow.pop %v2562
        %v2564 = vmul.f32 %v2468, 1.442695
        %v2565 = vpow.pop %v2564
        %v2566 = vmul.f32 %v2469, 1.442695
        %v2567 = vpow.pop %v2566
        %v2568 = vmul.f32 %v2470, 1.442695
        %v2569 = vpow.pop %v2568
        %v2570 = vmul.f32 %v2471, 1.442695
        %v2571 = vpow.pop %v2570
        %v2572 = vmul.f32 %v2472, 1.442695
        %v2573 = vpow.pop %v2572
        %v2574 = vmul.f32 %v2473, 1.442695
        %v2575 = vpow.pop %v2574
        %v2576 = vmul.f32 %v2474, 1.442695
        %v2577 = vpow.pop %v2576
        %v2578 = vmul.f32 %v2475, 1.442695
        %v2579 = vpow.pop %v2578
        %v2580 = vmul.f32 %v2476, 1.442695
        %v2581 = vpow.pop %v2580
        %v2582 = vmul.f32 %v2477, 1.442695
        %v2583 = vpow.pop %v2582
        %v2584 = vmul.f32 %v2478, 1.442695
        %v2585 = vpow.pop %v2584
        %v2586 = vmul.f32 %v2479, 1.442695
        %v2587 = vpow.pop %v2586
        %v2588 = vmul.f32 %v2480, 1.442695
        %v2589 = vpow.pop %v2588
        %v2590 = vmul.f32 %v2481, 1.442695
        %v2591 = vpow.pop %v2590
        %v2592 = vmul.f32 %v2482, 1.442695
        %v2593 = vpow.pop %v2592
        %v2594 = vmul.f32 %v2483, 1.442695
        %v2595 = vpow.pop %v2594
        %v2596 = vmul.f32 %v2484, 1.442695
        %v2597 = vpow.pop %v2596
        %v2598 = vmul.f32 %v2485, 1.442695
        %v2599 = vpow.pop %v2598
        %v2600 = vmul.f32 %v2486, 1.442695
        %v2601 = vpow.pop %v2600
        %v2602 = vmul.f32 %v2487, 1.442695
        %v2603 = vpow.pop %v2602
        %v2604 = vmul.f32 %v2488, 1.442695
        %v2605 = vpow.pop %v2604
        %v2606 = vmul.f32 %v2489, 1.442695
        %v2607 = vpow.pop %v2606
        %v2608 = vmul.f32 %v2490, 1.442695
        %v2609 = vpow.pop %v2608
        %v2610 = vmul.f32 %v2491, 1.442695
        %v2611 = vpow.pop %v2610
        %v2612 = vmul.f32 %v2492, 1.442695
        %v2613 = vpow.pop %v2612
        %v2614 = vmul.f32 %v2493, 1.442695
        %v2615 = vpow.pop %v2614
        %v2616 = vmul.f32 %v2494, 1.442695
        %v2617 = vpow.pop %v2616
        %v2618 = vmul.f32 %v2495, 1.442695
        %v2619 = vpow.pop %v2618
        %v2620 = vmul.f32 %v2496, 1.442695
        %v2621 = vpow.pop %v2620
        %v2622 = vmul.f32 %v2497, 1.442695
        %v2623 = vpow.pop %v2622
        %v2624 = vmul.f32 %v2498, 1.442695
        %v2625 = vpow.pop %v2624
        %v2626 = vmul.f32 %v2499, 1.442695
        %v2627 = vpow.pop %v2626
        %v2628 = vadd.f32 %v2501, %v2503
        %2629 = vadd.xlane.f32.xlu0 %v2628
        %v2630 = vpop.xlane.xlu0 %2629
        %v2631 = vadd.f32 %v2505, %v2507
        %2632 = vadd.xlane.f32.xlu0 %v2631
        %v2633 = vpop.xlane.xlu0 %2632
        %v2634 = vadd.f32 %v2509, %v2511
        %2635 = vadd.xlane.f32.xlu0 %v2634
        %v2636 = vpop.xlane.xlu0 %2635
        %v2637 = vadd.f32 %v2513, %v2515
        %2638 = vadd.xlane.f32.xlu0 %v2637
        %v2639 = vpop.xlane.xlu0 %2638
        %v2640 = vadd.f32 %v2517, %v2519
        %2641 = vadd.xlane.f32.xlu0 %v2640
        %v2642 = vpop.xlane.xlu0 %2641
        %v2643 = vadd.f32 %v2521, %v2523
        %2644 = vadd.xlane.f32.xlu0 %v2643
        %v2645 = vpop.xlane.xlu0 %2644
        %v2646 = vadd.f32 %v2525, %v2527
        %2647 = vadd.xlane.f32.xlu0 %v2646
        %v2648 = vpop.xlane.xlu0 %2647
        %v2649 = vadd.f32 %v2529, %v2531
        %2650 = vadd.xlane.f32.xlu0 %v2649
        %v2651 = vpop.xlane.xlu0 %2650
        %v2652 = vadd.f32 %v2533, %v2535
        %2653 = vadd.xlane.f32.xlu0 %v2652
        %v2654 = vpop.xlane.xlu0 %2653
        %v2655 = vadd.f32 %v2537, %v2539
        %2656 = vadd.xlane.f32.xlu0 %v2655
        %v2657 = vpop.xlane.xlu0 %2656
        %v2658 = vadd.f32 %v2541, %v2543
        %2659 = vadd.xlane.f32.xlu0 %v2658
        %v2660 = vpop.xlane.xlu0 %2659
        %v2661 = vadd.f32 %v2545, %v2547
        %2662 = vadd.xlane.f32.xlu0 %v2661
        %v2663 = vpop.xlane.xlu0 %2662
        %v2664 = vadd.f32 %v2549, %v2551
        %2665 = vadd.xlane.f32.xlu0 %v2664
        %v2666 = vpop.xlane.xlu0 %2665
        %v2667 = vadd.f32 %v2553, %v2555
        %2668 = vadd.xlane.f32.xlu0 %v2667
        %v2669 = vpop.xlane.xlu0 %2668
        %v2670 = vadd.f32 %v2557, %v2559
        %2671 = vadd.xlane.f32.xlu0 %v2670
        %v2672 = vpop.xlane.xlu0 %2671
        %v2673 = vadd.f32 %v2561, %v2563
        %2674 = vadd.xlane.f32.xlu0 %v2673
        %v2675 = vpop.xlane.xlu0 %2674
        %v2676 = vadd.f32 %v2565, %v2567
        %2677 = vadd.xlane.f32.xlu0 %v2676
        %v2678 = vpop.xlane.xlu0 %2677
        %v2679 = vadd.f32 %v2569, %v2571
        %2680 = vadd.xlane.f32.xlu0 %v2679
        %v2681 = vpop.xlane.xlu0 %2680
        %v2682 = vadd.f32 %v2573, %v2575
        %2683 = vadd.xlane.f32.xlu0 %v2682
        %v2684 = vpop.xlane.xlu0 %2683
        %v2685 = vadd.f32 %v2577, %v2579
        %2686 = vadd.xlane.f32.xlu0 %v2685
        %v2687 = vpop.xlane.xlu0 %2686
        %v2688 = vadd.f32 %v2581, %v2583
        %2689 = vadd.xlane.f32.xlu0 %v2688
        %v2690 = vpop.xlane.xlu0 %2689
        %v2691 = vadd.f32 %v2585, %v2587
        %2692 = vadd.xlane.f32.xlu0 %v2691
        %v2693 = vpop.xlane.xlu0 %2692
        %v2694 = vadd.f32 %v2589, %v2591
        %2695 = vadd.xlane.f32.xlu0 %v2694
        %v2696 = vpop.xlane.xlu0 %2695
        %v2697 = vadd.f32 %v2593, %v2595
        %2698 = vadd.xlane.f32.xlu0 %v2697
        %v2699 = vpop.xlane.xlu0 %2698
        %v2700 = vadd.f32 %v2597, %v2599
        %2701 = vadd.xlane.f32.xlu0 %v2700
        %v2702 = vpop.xlane.xlu0 %2701
        %v2703 = vadd.f32 %v2601, %v2603
        %2704 = vadd.xlane.f32.xlu0 %v2703
        %v2705 = vpop.xlane.xlu0 %2704
        %v2706 = vadd.f32 %v2605, %v2607
        %2707 = vadd.xlane.f32.xlu0 %v2706
        %v2708 = vpop.xlane.xlu0 %2707
        %v2709 = vadd.f32 %v2609, %v2611
        %2710 = vadd.xlane.f32.xlu0 %v2709
        %v2711 = vpop.xlane.xlu0 %2710
        %v2712 = vadd.f32 %v2613, %v2615
        %2713 = vadd.xlane.f32.xlu0 %v2712
        %v2714 = vpop.xlane.xlu0 %2713
        %v2715 = vadd.f32 %v2617, %v2619
        %2716 = vadd.xlane.f32.xlu0 %v2715
        %v2717 = vpop.xlane.xlu0 %2716
        %v2718 = vadd.f32 %v2621, %v2623
        %2719 = vadd.xlane.f32.xlu0 %v2718
        %v2720 = vpop.xlane.xlu0 %2719
        %v2721 = vadd.f32 %v2625, %v2627
        %2722 = vadd.xlane.f32.xlu0 %v2721
        %v2723 = vpop.xlane.xlu0 %2722
        %v2724 = vrcp.pop %v2630
        %v2725 = vrcp.pop %v2633
        %v2726 = vrcp.pop %v2636
        %v2727 = vrcp.pop %v2639
        %v2728 = vrcp.pop %v2642
        %v2729 = vrcp.pop %v2645
        %v2730 = vrcp.pop %v2648
        %v2731 = vrcp.pop %v2651
        %v2732 = vrcp.pop %v2654
        %v2733 = vrcp.pop %v2657
        %v2734 = vrcp.pop %v2660
        %v2735 = vrcp.pop %v2663
        %v2736 = vrcp.pop %v2666
        %v2737 = vrcp.pop %v2669
        %v2738 = vrcp.pop %v2672
        %v2739 = vrcp.pop %v2675
        %v2740 = vrcp.pop %v2678
        %v2741 = vrcp.pop %v2681
        %v2742 = vrcp.pop %v2684
        %v2743 = vrcp.pop %v2687
        %v2744 = vrcp.pop %v2690
        %v2745 = vrcp.pop %v2693
        %v2746 = vrcp.pop %v2696
        %v2747 = vrcp.pop %v2699
        %v2748 = vrcp.pop %v2702
        %v2749 = vrcp.pop %v2705
        %v2750 = vrcp.pop %v2708
        %v2751 = vrcp.pop %v2711
        %v2752 = vrcp.pop %v2714
        %v2753 = vrcp.pop %v2717
        %v2754 = vrcp.pop %v2720
        %v2755 = vrcp.pop %v2723
        %v2756 = vpack.c.bf16 %v2505, %v2501
        %v2757 = vpack.c.bf16 %v2507, %v2503
        %v2758 = vpack.c.bf16 %v2513, %v2509
        %v2759 = vpack.c.bf16 %v2515, %v2511
        %v2760 = vpack.c.bf16 %v2521, %v2517
        %v2761 = vpack.c.bf16 %v2523, %v2519
        %v2762 = vpack.c.bf16 %v2529, %v2525
        %v2763 = vpack.c.bf16 %v2531, %v2527
        %v2764 = vpack.c.bf16 %v2537, %v2533
        %v2765 = vpack.c.bf16 %v2539, %v2535
        %v2766 = vpack.c.bf16 %v2545, %v2541
        %v2767 = vpack.c.bf16 %v2547, %v2543
        %v2768 = vpack.c.bf16 %v2553, %v2549
        %v2769 = vpack.c.bf16 %v2555, %v2551
        %v2770 = vpack.c.bf16 %v2561, %v2557
        %v2771 = vpack.c.bf16 %v2563, %v2559
        %v2772 = vpack.c.bf16 %v2569, %v2565
        %v2773 = vpack.c.bf16 %v2571, %v2567
        %v2774 = vpack.c.bf16 %v2577, %v2573
        %v2775 = vpack.c.bf16 %v2579, %v2575
        %v2776 = vpack.c.bf16 %v2585, %v2581
        %v2777 = vpack.c.bf16 %v2587, %v2583
        %v2778 = vpack.c.bf16 %v2593, %v2589
        %v2779 = vpack.c.bf16 %v2595, %v2591
        %v2780 = vpack.c.bf16 %v2601, %v2597
        %v2781 = vpack.c.bf16 %v2603, %v2599
        %v2782 = vpack.c.bf16 %v2609, %v2605
        %v2783 = vpack.c.bf16 %v2611, %v2607
        %v2784 = vpack.c.bf16 %v2617, %v2613
        %v2785 = vpack.c.bf16 %v2619, %v2615
        %v2786 = vpack.c.bf16 %v2625, %v2621
        %v2787 = vpack.c.bf16 %v2627, %v2623
        %2788 = vmatprep.subr.bf16.mxu0 0
        %2789 = vmatpush1.bf16.msra.mxu0 %v2079
        %2790 = vmatprep.subr.bf16.mxu0 0
        %2791 = vmatpush1.bf16.msra.mxu0 %v2080
        %2792 = vmatprep.subr.bf16.mxu0 0
        %2793 = vmatpush1.bf16.msra.mxu0 %v2081
        %2794 = vmatprep.subr.bf16.mxu0 0
        %2795 = vmatpush1.bf16.msra.mxu0 %v2082
        %2796 = vmatprep.subr.bf16.mxu0 0
        %2797 = vmatpush1.bf16.msra.mxu0 %v2083
        %2798 = vmatprep.subr.bf16.mxu0 0
        %2799 = vmatpush1.bf16.msra.mxu0 %v2084
        %2800 = vmatprep.subr.bf16.mxu0 0
        %2801 = vmatpush1.bf16.msra.mxu0 %v2085
        %2802 = vmatprep.subr.bf16.mxu0 0
        %2803 = vmatpush1.bf16.msra.mxu0 %v2086
        %2804 = vmatprep.subr.bf16.mxu0 0
        %2805 = vmatpush1.bf16.msra.mxu0 %v2087
        %2806 = vmatprep.subr.bf16.mxu0 0
        %2807 = vmatpush1.bf16.msra.mxu0 %v2088
        %2808 = vmatprep.subr.bf16.mxu0 0
        %2809 = vmatpush1.bf16.msra.mxu0 %v2089
        %2810 = vmatprep.subr.bf16.mxu0 0
        %2811 = vmatpush1.bf16.msra.mxu0 %v2090
        %2812 = vmatprep.subr.bf16.mxu0 0
        %2813 = vmatpush1.bf16.msra.mxu0 %v2091
        %2814 = vmatprep.subr.bf16.mxu0 0
        %2815 = vmatpush1.bf16.msra.mxu0 %v2092
        %2816 = vmatprep.subr.bf16.mxu0 0
        %2817 = vmatpush1.bf16.msra.mxu0 %v2093
        %2818 = vmatprep.subr.bf16.mxu0 0
        %2819 = vmatpush1.bf16.msra.mxu0 %v2094
        %2820 = vmatprep.mubr.bf16.mxu0 %v2757
        %2821 = vmatmul.mubr.bf16.gmra.mrb[0].mxu0 %v2756
        %v2822 = vpop.f32.mrb[0].mxu0
        %v2823 = vadd.f32 0.0, %v2822
        %v2824 = vpop.f32.mrb[0].mxu0
        %v2825 = vpop.f32.mrb[0].mxu0
        %v2826 = vadd.f32 0.0, %v2825
        %v2827 = vpop.f32.mrb[0].mxu0
        %2828 = vmatprep.mubr.bf16.mxu0 %v2759
        %2829 = vmatmul.mubr.bf16.gmra.mrb[0].mxu0 %v2758
        %v2830 = vpop.f32.mrb[0].mxu0
        %v2831 = vadd.f32 0.0, %v2830
        %v2832 = vpop.f32.mrb[0].mxu0
        %v2833 = vpop.f32.mrb[0].mxu0
        %v2834 = vadd.f32 0.0, %v2833
        %v2835 = vpop.f32.mrb[0].mxu0
        %2836 = vmatprep.mubr.bf16.mxu0 %v2761
        %2837 = vmatmul.mubr.bf16.gmra.mrb[0].mxu0 %v2760
        %v2838 = vpop.f32.mrb[0].mxu0
        %v2839 = vadd.f32 0.0, %v2838
        %v2840 = vpop.f32.mrb[0].mxu0
        %v2841 = vpop.f32.mrb[0].mxu0
        %v2842 = vadd.f32 0.0, %v2841
        %v2843 = vpop.f32.mrb[0].mxu0
        %2844 = vmatprep.mubr.bf16.mxu0 %v2763
        %2845 = vmatmul.mubr.bf16.gmra.mrb[0].mxu0 %v2762
        %v2846 = vpop.f32.mrb[0].mxu0
        %v2847 = vadd.f32 0.0, %v2846
        %v2848 = vpop.f32.mrb[0].mxu0
        %v2849 = vpop.f32.mrb[0].mxu0
        %v2850 = vadd.f32 0.0, %v2849
        %v2851 = vpop.f32.mrb[0].mxu0
        %2852 = vmatprep.mubr.bf16.mxu0 %v2765
        %2853 = vmatmul.mubr.bf16.gmra.mrb[0].mxu0 %v2764
        %v2854 = vpop.f32.mrb[0].mxu0
        %v2855 = vadd.f32 0.0, %v2854
        %v2856 = vpop.f32.mrb[0].mxu0
        %v2857 = vpop.f32.mrb[0].mxu0
        %v2858 = vadd.f32 0.0, %v2857
        %v2859 = vpop.f32.mrb[0].mxu0
        %2860 = vmatprep.mubr.bf16.mxu0 %v2767
        %2861 = vmatmul.mubr.bf16.gmra.mrb[0].mxu0 %v2766
        %v2862 = vpop.f32.mrb[0].mxu0
        %v2863 = vadd.f32 0.0, %v2862
        %v2864 = vpop.f32.mrb[0].mxu0
        %v2865 = vpop.f32.mrb[0].mxu0
        %v2866 = vadd.f32 0.0, %v2865
        %v2867 = vpop.f32.mrb[0].mxu0
        %2868 = vmatprep.mubr.bf16.mxu0 %v2769
        %2869 = vmatmul.mubr.bf16.gmra.mrb[0].mxu0 %v2768
        %v2870 = vpop.f32.mrb[0].mxu0
        %v2871 = vadd.f32 0.0, %v2870
        %v2872 = vpop.f32.mrb[0].mxu0
        %v2873 = vpop.f32.mrb[0].mxu0
        %v2874 = vadd.f32 0.0, %v2873
        %v2875 = vpop.f32.mrb[0].mxu0
        %2876 = vmatprep.mubr.bf16.mxu0 %v2771
        %2877 = vmatmul.mubr.bf16.gmra.mrb[0].mxu0 %v2770
        %v2878 = vpop.f32.mrb[0].mxu0
        %v2879 = vadd.f32 0.0, %v2878
        %v2880 = vpop.f32.mrb[0].mxu0
        %v2881 = vpop.f32.mrb[0].mxu0
        %v2882 = vadd.f32 0.0, %v2881
        %v2883 = vpop.f32.mrb[0].mxu0
        %2884 = vmatprep.mubr.bf16.mxu0 %v2773
        %2885 = vmatmul.mubr.bf16.gmra.mrb[0].mxu0 %v2772
        %v2886 = vpop.f32.mrb[0].mxu0
        %v2887 = vadd.f32 0.0, %v2886
        %v2888 = vpop.f32.mrb[0].mxu0
        %v2889 = vpop.f32.mrb[0].mxu0
        %v2890 = vadd.f32 0.0, %v2889
        %v2891 = vpop.f32.mrb[0].mxu0
        %2892 = vmatprep.mubr.bf16.mxu0 %v2775
        %2893 = vmatmul.mubr.bf16.gmra.mrb[0].mxu0 %v2774
        %v2894 = vpop.f32.mrb[0].mxu0
        %v2895 = vadd.f32 0.0, %v2894
        %v2896 = vpop.f32.mrb[0].mxu0
        %v2897 = vpop.f32.mrb[0].mxu0
        %v2898 = vadd.f32 0.0, %v2897
        %v2899 = vpop.f32.mrb[0].mxu0
        %2900 = vmatprep.mubr.bf16.mxu0 %v2777
        %2901 = vmatmul.mubr.bf16.gmra.mrb[0].mxu0 %v2776
        %v2902 = vpop.f32.mrb[0].mxu0
        %v2903 = vadd.f32 0.0, %v2902
        %v2904 = vpop.f32.mrb[0].mxu0
        %v2905 = vpop.f32.mrb[0].mxu0
        %v2906 = vadd.f32 0.0, %v2905
        %v2907 = vpop.f32.mrb[0].mxu0
        %2908 = vmatprep.mubr.bf16.mxu0 %v2779
        %2909 = vmatmul.mubr.bf16.gmra.mrb[0].mxu0 %v2778
        %v2910 = vpop.f32.mrb[0].mxu0
        %v2911 = vadd.f32 0.0, %v2910
        %v2912 = vpop.f32.mrb[0].mxu0
        %v2913 = vpop.f32.mrb[0].mxu0
        %v2914 = vadd.f32 0.0, %v2913
        %v2915 = vpop.f32.mrb[0].mxu0
        %2916 = vmatprep.mubr.bf16.mxu0 %v2781
        %2917 = vmatmul.mubr.bf16.gmra.mrb[0].mxu0 %v2780
        %v2918 = vpop.f32.mrb[0].mxu0
        %v2919 = vadd.f32 0.0, %v2918
        %v2920 = vpop.f32.mrb[0].mxu0
        %v2921 = vpop.f32.mrb[0].mxu0
        %v2922 = vadd.f32 0.0, %v2921
        %v2923 = vpop.f32.mrb[0].mxu0
        %2924 = vmatprep.mubr.bf16.mxu0 %v2783
        %2925 = vmatmul.mubr.bf16.gmra.mrb[0].mxu0 %v2782
        %v2926 = vpop.f32.mrb[0].mxu0
        %v2927 = vadd.f32 0.0, %v2926
        %v2928 = vpop.f32.mrb[0].mxu0
        %v2929 = vpop.f32.mrb[0].mxu0
        %v2930 = vadd.f32 0.0, %v2929
        %v2931 = vpop.f32.mrb[0].mxu0
        %2932 = vmatprep.mubr.bf16.mxu0 %v2785
        %2933 = vmatmul.mubr.bf16.gmra.mrb[0].mxu0 %v2784
        %v2934 = vpop.f32.mrb[0].mxu0
        %v2935 = vadd.f32 0.0, %v2934
        %v2936 = vpop.f32.mrb[0].mxu0
        %v2937 = vpop.f32.mrb[0].mxu0
        %v2938 = vadd.f32 0.0, %v2937
        %v2939 = vpop.f32.mrb[0].mxu0
        %2940 = vmatprep.mubr.bf16.mxu0 %v2787
        %2941 = vmatmul.mubr.bf16.gmra.mrb[0].mxu0 %v2786
        %v2942 = vpop.f32.mrb[0].mxu0
        %v2943 = vadd.f32 0.0, %v2942
        %v2944 = vpop.f32.mrb[0].mxu0
        %v2945 = vpop.f32.mrb[0].mxu0
        %v2946 = vadd.f32 0.0, %v2945
        %v2947 = vpop.f32.mrb[0].mxu0
        %2948 = vdwg.mxu0
        %v2949 = vmul.f32 %v2823, %v2724
        %v2950 = vmul.f32 %v2826, %v2725
        %v2951 = vmul.f32 %v2831, %v2726
        %v2952 = vmul.f32 %v2834, %v2727
        %v2953 = vmul.f32 %v2839, %v2728
        %v2954 = vmul.f32 %v2842, %v2729
        %v2955 = vmul.f32 %v2847, %v2730
        %v2956 = vmul.f32 %v2850, %v2731
        %v2957 = vmul.f32 %v2855, %v2732
        %v2958 = vmul.f32 %v2858, %v2733
        %v2959 = vmul.f32 %v2863, %v2734
        %v2960 = vmul.f32 %v2866, %v2735
        %v2961 = vmul.f32 %v2871, %v2736
        %v2962 = vmul.f32 %v2874, %v2737
        %v2963 = vmul.f32 %v2879, %v2738
        %v2964 = vmul.f32 %v2882, %v2739
        %v2965 = vmul.f32 %v2887, %v2740
        %v2966 = vmul.f32 %v2890, %v2741
        %v2967 = vmul.f32 %v2895, %v2742
        %v2968 = vmul.f32 %v2898, %v2743
        %v2969 = vmul.f32 %v2903, %v2744
        %v2970 = vmul.f32 %v2906, %v2745
        %v2971 = vmul.f32 %v2911, %v2746
        %v2972 = vmul.f32 %v2914, %v2747
        %v2973 = vmul.f32 %v2919, %v2748
        %v2974 = vmul.f32 %v2922, %v2749
        %v2975 = vmul.f32 %v2927, %v2750
        %v2976 = vmul.f32 %v2930, %v2751
        %v2977 = vmul.f32 %v2935, %v2752
        %v2978 = vmul.f32 %v2938, %v2753
        %v2979 = vmul.f32 %v2943, %v2754
        %v2980 = vmul.f32 %v2946, %v2755
        %2982 = vrot.lane.b32.xlu0 %v274, 96
        %v2983 = vpop.permute.xlu0 %2982
        %v2984 = vsel %vm749, %v2983, 0
        %v2987 = vsel %vm749, %v2949, 0
        %v2990 = vsel %vm749, %v2950, 0
        %v2993 = vsel %vm749, %v2951, 0
        %v2996 = vsel %vm749, %v2952, 0
        %v2999 = vsel %vm749, %v2953, 0
        %v3002 = vsel %vm749, %v2954, 0
        %v3005 = vsel %vm749, %v2955, 0
        %v3008 = vsel %vm749, %v2956, 0
        %v3011 = vsel %vm749, %v2957, 0
        %v3014 = vsel %vm749, %v2958, 0
        %v3017 = vsel %vm749, %v2959, 0
        %v3020 = vsel %vm749, %v2960, 0
        %v3023 = vsel %vm749, %v2961, 0
        %v3026 = vsel %vm749, %v2962, 0
        %v3029 = vsel %vm749, %v2963, 0
        %v3032 = vsel %vm749, %v2964, 0
        %v3035 = vsel %vm749, %v2965, 0
        %v3038 = vsel %vm749, %v2966, 0
        %v3041 = vsel %vm749, %v2967, 0
        %v3044 = vsel %vm749, %v2968, 0
        %v3047 = vsel %vm749, %v2969, 0
        %v3050 = vsel %vm749, %v2970, 0
        %v3053 = vsel %vm749, %v2971, 0
        %v3056 = vsel %vm749, %v2972, 0
        %v3059 = vsel %vm749, %v2973, 0
        %v3062 = vsel %vm749, %v2974, 0
        %v3065 = vsel %vm749, %v2975, 0
        %v3068 = vsel %vm749, %v2976, 0
        %v3071 = vsel %vm749, %v2977, 0
        %v3074 = vsel %vm749, %v2978, 0
        %v3077 = vsel %vm749, %v2979, 0
        %v3080 = vsel %vm749, %v2980, 0
        %3082 = vmatprep.subr.mxu0 0.0
        %3083 = vmatpush1.xpose.msra.mxu0 %v2987
        %3084 = vmatprep.subr.mxu0 0.0
        %3085 = vmatpush1.xpose.msra.mxu0 %v2990
        %3086 = vmatprep.subr.mxu0 0.0
        %3087 = vmatpush1.xpose.msra.mxu0 %v2993
        %3088 = vmatprep.subr.mxu0 0.0
        %3089 = vmatpush1.xpose.msra.mxu0 %v2996
        %3090 = vmatprep.subr.mxu0 0.0
        %3091 = vmatpush1.xpose.msra.mxu0 %v2999
        %3092 = vmatprep.subr.mxu0 0.0
        %3093 = vmatpush1.xpose.msra.mxu0 %v3002
        %3094 = vmatprep.subr.mxu0 0.0
        %3095 = vmatpush1.xpose.msra.mxu0 %v3005
        %3096 = vmatprep.subr.mxu0 0.0
        %3097 = vmatpush1.xpose.msra.mxu0 %v3008
        %3098 = vmatprep.subr.mxu0 0.0
        %3099 = vmatpush1.xpose.msra.mxu0 %v3011
        %3100 = vmatprep.subr.mxu0 0.0
        %3101 = vmatpush1.xpose.msra.mxu0 %v3014
        %3102 = vmatprep.subr.mxu0 0.0
        %3103 = vmatpush1.xpose.msra.mxu0 %v3017
        %3104 = vmatprep.subr.mxu0 0.0
        %3105 = vmatpush1.xpose.msra.mxu0 %v3020
        %3106 = vmatprep.subr.mxu0 0.0
        %3107 = vmatpush1.xpose.msra.mxu0 %v3023
        %3108 = vmatprep.subr.mxu0 0.0
        %3109 = vmatpush1.xpose.msra.mxu0 %v3026
        %3110 = vmatprep.subr.mxu0 0.0
        %3111 = vmatpush1.xpose.msra.mxu0 %v3029
        %3112 = vmatprep.subr.mxu0 0.0
        %3113 = vmatpush1.xpose.msra.mxu0 %v3032
        %3114 = vmatprep.subr.mxu0 0.0
        %3115 = vmatpush1.xpose.msra.mxu0 %v3035
        %3116 = vmatprep.subr.mxu0 0.0
        %3117 = vmatpush1.xpose.msra.mxu0 %v3038
        %3118 = vmatprep.subr.mxu0 0.0
        %3119 = vmatpush1.xpose.msra.mxu0 %v3041
        %3120 = vmatprep.subr.mxu0 0.0
        %3121 = vmatpush1.xpose.msra.mxu0 %v3044
        %3122 = vmatprep.subr.mxu0 0.0
        %3123 = vmatpush1.xpose.msra.mxu0 %v3047
        %3124 = vmatprep.subr.mxu0 0.0
        %3125 = vmatpush1.xpose.msra.mxu0 %v3050
        %3126 = vmatprep.subr.mxu0 0.0
        %3127 = vmatpush1.xpose.msra.mxu0 %v3053
        %3128 = vmatprep.subr.mxu0 0.0
        %3129 = vmatpush1.xpose.msra.mxu0 %v3056
        %3130 = vmatprep.subr.mxu0 0.0
        %3131 = vmatpush1.xpose.msra.mxu0 %v3059
        %3132 = vmatprep.subr.mxu0 0.0
        %3133 = vmatpush1.xpose.msra.mxu0 %v3062
        %3134 = vmatprep.subr.mxu0 0.0
        %3135 = vmatpush1.xpose.msra.mxu0 %v3065
        %3136 = vmatprep.subr.mxu0 0.0
        %3137 = vmatpush1.xpose.msra.mxu0 %v3068
        %3138 = vmatprep.subr.mxu0 0.0
        %3139 = vmatpush1.xpose.msra.mxu0 %v3071
        %3140 = vmatprep.subr.mxu0 0.0
        %3141 = vmatpush1.xpose.msra.mxu0 %v3074
        %3142 = vmatprep.subr.mxu0 0.0
        %3143 = vmatpush1.xpose.msra.mxu0 %v3077
        %3144 = vmatprep.subr.mxu0 0.0
        %3145 = vmatpush1.xpose.msra.mxu0 %v3080
        %3146 = vmatprep.mubr.f32.mxu0 0.0
        %3147 = vmatmul.mubr.f32.gmra.mrb[0].mxu0 %v2984
        %v3148 = vpop.f32.mrb[0].mxu0
        %v3149 = vadd.f32 0.0, %v3148
        %v3150 = vpop.f32.mrb[0].mxu0
        %v3151 = vadd.f32 0.0, %v3150
        %3152 = vdwg.mxu0
        %v3153 = vsel %vm749, %v274, 0
        %v3156 = vsel %vm749, %v1600, 0
        %v3159 = vsel %vm749, %v1601, 0
        %v3162 = vsel %vm749, %v1602, 0
        %v3165 = vsel %vm749, %v1603, 0
        %v3168 = vsel %vm749, %v1604, 0
        %v3171 = vsel %vm749, %v1605, 0
        %v3174 = vsel %vm749, %v1606, 0
        %v3177 = vsel %vm749, %v1607, 0
        %v3180 = vsel %vm749, %v1608, 0
        %v3183 = vsel %vm749, %v1609, 0
        %v3186 = vsel %vm749, %v1610, 0
        %v3189 = vsel %vm749, %v1611, 0
        %v3192 = vsel %vm749, %v1612, 0
        %v3195 = vsel %vm749, %v1613, 0
        %v3198 = vsel %vm749, %v1614, 0
        %v3201 = vsel %vm749, %v1615, 0
        %v3204 = vsel %vm749, %v1616, 0
        %v3207 = vsel %vm749, %v1617, 0
        %v3210 = vsel %vm749, %v1618, 0
        %v3213 = vsel %vm749, %v1619, 0
        %v3216 = vsel %vm749, %v1620, 0
        %v3219 = vsel %vm749, %v1621, 0
        %v3222 = vsel %vm749, %v1622, 0
        %v3225 = vsel %vm749, %v1623, 0
        %v3228 = vsel %vm749, %v1624, 0
        %v3231 = vsel %vm749, %v1625, 0
        %v3234 = vsel %vm749, %v1626, 0
        %v3237 = vsel %vm749, %v1627, 0
        %v3240 = vsel %vm749, %v1628, 0
        %v3243 = vsel %vm749, %v1629, 0
        %v3246 = vsel %vm749, %v1630, 0
        %v3249 = vsel %vm749, %v1631, 0
        %3251 = vmatprep.subr.mxu0 0.0
        %3252 = vmatpush1.xpose.msra.mxu0 %v3156
        %3253 = vmatprep.subr.mxu0 0.0
        %3254 = vmatpush1.xpose.msra.mxu0 %v3159
        %3255 = vmatprep.subr.mxu0 0.0
        %3256 = vmatpush1.xpose.msra.mxu0 %v3162
        %3257 = vmatprep.subr.mxu0 0.0
        %3258 = vmatpush1.xpose.msra.mxu0 %v3165
        %3259 = vmatprep.subr.mxu0 0.0
        %3260 = vmatpush1.xpose.msra.mxu0 %v3168
        %3261 = vmatprep.subr.mxu0 0.0
        %3262 = vmatpush1.xpose.msra.mxu0 %v3171
        %3263 = vmatprep.subr.mxu0 0.0
        %3264 = vmatpush1.xpose.msra.mxu0 %v3174
        %3265 = vmatprep.subr.mxu0 0.0
        %3266 = vmatpush1.xpose.msra.mxu0 %v3177
        %3267 = vmatprep.subr.mxu0 0.0
        %3268 = vmatpush1.xpose.msra.mxu0 %v3180
        %3269 = vmatprep.subr.mxu0 0.0
        %3270 = vmatpush1.xpose.msra.mxu0 %v3183
        %3271 = vmatprep.subr.mxu0 0.0
        %3272 = vmatpush1.xpose.msra.mxu0 %v3186
        %3273 = vmatprep.subr.mxu0 0.0
        %3274 = vmatpush1.xpose.msra.mxu0 %v3189
        %3275 = vmatprep.subr.mxu0 0.0
        %3276 = vmatpush1.xpose.msra.mxu0 %v3192
        %3277 = vmatprep.subr.mxu0 0.0
        %3278 = vmatpush1.xpose.msra.mxu0 %v3195
        %3279 = vmatprep.subr.mxu0 0.0
        %3280 = vmatpush1.xpose.msra.mxu0 %v3198
        %3281 = vmatprep.subr.mxu0 0.0
        %3282 = vmatpush1.xpose.msra.mxu0 %v3201
        %3283 = vmatprep.subr.mxu0 0.0
        %3284 = vmatpush1.xpose.msra.mxu0 %v3204
        %3285 = vmatprep.subr.mxu0 0.0
        %3286 = vmatpush1.xpose.msra.mxu0 %v3207
        %3287 = vmatprep.subr.mxu0 0.0
        %3288 = vmatpush1.xpose.msra.mxu0 %v3210
        %3289 = vmatprep.subr.mxu0 0.0
        %3290 = vmatpush1.xpose.msra.mxu0 %v3213
        %3291 = vmatprep.subr.mxu0 0.0
        %3292 = vmatpush1.xpose.msra.mxu0 %v3216
        %3293 = vmatprep.subr.mxu0 0.0
        %3294 = vmatpush1.xpose.msra.mxu0 %v3219
        %3295 = vmatprep.subr.mxu0 0.0
        %3296 = vmatpush1.xpose.msra.mxu0 %v3222
        %3297 = vmatprep.subr.mxu0 0.0
        %3298 = vmatpush1.xpose.msra.mxu0 %v3225
        %3299 = vmatprep.subr.mxu0 0.0
        %3300 = vmatpush1.xpose.msra.mxu0 %v3228
        %3301 = vmatprep.subr.mxu0 0.0
        %3302 = vmatpush1.xpose.msra.mxu0 %v3231
        %3303 = vmatprep.subr.mxu0 0.0
        %3304 = vmatpush1.xpose.msra.mxu0 %v3234
        %3305 = vmatprep.subr.mxu0 0.0
        %3306 = vmatpush1.xpose.msra.mxu0 %v3237
        %3307 = vmatprep.subr.mxu0 0.0
        %3308 = vmatpush1.xpose.msra.mxu0 %v3240
        %3309 = vmatprep.subr.mxu0 0.0
        %3310 = vmatpush1.xpose.msra.mxu0 %v3243
        %3311 = vmatprep.subr.mxu0 0.0
        %3312 = vmatpush1.xpose.msra.mxu0 %v3246
        %3313 = vmatprep.subr.mxu0 0.0
        %3314 = vmatpush1.xpose.msra.mxu0 %v3249
        %3315 = vmatprep.mubr.f32.mxu0 0.0
        %3316 = vmatmul.mubr.f32.gmra.mrb[0].mxu0 %v3153
        %v3317 = vpop.f32.mrb[0].mxu0
        %v3318 = vadd.f32 %v3149, %v3317
        %v3319 = vpop.f32.mrb[0].mxu0
        %v3320 = vadd.f32 %v3151, %v3319
        %3321 = vdwg.mxu0
        %v3323 = vsel %vm277, %v234, 0
        %v3326 = vsel %vm277, %v235, 0
        %v3329 = vsel %vm277, %v236, 0
        %v3332 = vsel %vm277, %v237, 0
        %3334 = vmatprep.subr.mxu0 %v292
        %3335 = vmatpush1.msra.mxu0 %v290
        %3336 = vmatprep.subr.mxu0 0.0
        %3337 = vmatpush1.msra.mxu0 0.0
        %3338 = vmatprep.subr.mxu0 0.0
        %3339 = vmatpush1.msra.mxu0 0.0
        %3340 = vmatprep.subr.mxu0 0.0
        %3341 = vmatpush1.msra.mxu0 0.0
        %3342 = vmatprep.subr.mxu0 0.0
        %3343 = vmatpush1.msra.mxu0 0.0
        %3344 = vmatprep.subr.mxu0 0.0
        %3345 = vmatpush1.msra.mxu0 0.0
        %3346 = vmatprep.subr.mxu0 0.0
        %3347 = vmatpush1.msra.mxu0 0.0
        %3348 = vmatprep.subr.mxu0 0.0
        %3349 = vmatpush1.msra.mxu0 0.0
        %3350 = vmatprep.subr.mxu0 0.0
        %3351 = vmatpush1.msra.mxu0 0.0
        %3352 = vmatprep.subr.mxu0 0.0
        %3353 = vmatpush1.msra.mxu0 0.0
        %3354 = vmatprep.subr.mxu0 0.0
        %3355 = vmatpush1.msra.mxu0 0.0
        %3356 = vmatprep.subr.mxu0 0.0
        %3357 = vmatpush1.msra.mxu0 0.0
        %3358 = vmatprep.subr.mxu0 0.0
        %3359 = vmatpush1.msra.mxu0 0.0
        %3360 = vmatprep.subr.mxu0 0.0
        %3361 = vmatpush1.msra.mxu0 0.0
        %3362 = vmatprep.subr.mxu0 0.0
        %3363 = vmatpush1.msra.mxu0 0.0
        %3364 = vmatprep.subr.mxu0 0.0
        %3365 = vmatpush1.msra.mxu0 0.0
        %3366 = vmatprep.subr.mxu0 0.0
        %3367 = vmatpush1.msra.mxu0 0.0
        %3368 = vmatprep.subr.mxu0 0.0
        %3369 = vmatpush1.msra.mxu0 0.0
        %3370 = vmatprep.subr.mxu0 0.0
        %3371 = vmatpush1.msra.mxu0 0.0
        %3372 = vmatprep.subr.mxu0 0.0
        %3373 = vmatpush1.msra.mxu0 0.0
        %3374 = vmatprep.subr.mxu0 0.0
        %3375 = vmatpush1.msra.mxu0 0.0
        %3376 = vmatprep.subr.mxu0 0.0
        %3377 = vmatpush1.msra.mxu0 0.0
        %3378 = vmatprep.subr.mxu0 0.0
        %3379 = vmatpush1.msra.mxu0 0.0
        %3380 = vmatprep.subr.mxu0 0.0
        %3381 = vmatpush1.msra.mxu0 0.0
        %3382 = vmatprep.subr.mxu0 0.0
        %3383 = vmatpush1.msra.mxu0 0.0
        %3384 = vmatprep.subr.mxu0 0.0
        %3385 = vmatpush1.msra.mxu0 0.0
        %3386 = vmatprep.subr.mxu0 0.0
        %3387 = vmatpush1.msra.mxu0 0.0
        %3388 = vmatprep.subr.mxu0 0.0
        %3389 = vmatpush1.msra.mxu0 0.0
        %3390 = vmatprep.subr.mxu0 0.0
        %3391 = vmatpush1.msra.mxu0 0.0
        %3392 = vmatprep.subr.mxu0 0.0
        %3393 = vmatpush1.msra.mxu0 0.0
        %3394 = vmatprep.subr.mxu0 0.0
        %3395 = vmatpush1.msra.mxu0 0.0
        %3396 = vmatprep.subr.mxu0 0.0
        %3397 = vmatpush1.msra.mxu0 0.0
        %3398 = vmatprep.mubr.f32.mxu0 0.0
        %3399 = vmatmul.mubr.f32.gmra.mrb[0].mxu0 %v3323
        %v3400 = vpop.f32.mrb[0].mxu0
        %v3401 = vadd.f32 0.0, %v3400
        %v3402 = vpop.f32.mrb[0].mxu0
        %v3403 = vadd.f32 0.0, %v3402
        %3404 = vmatprep.mubr.f32.mxu0 0.0
        %3405 = vmatmul.mubr.f32.gmra.mrb[0].mxu0 %v3326
        %v3406 = vpop.f32.mrb[0].mxu0
        %v3407 = vadd.f32 0.0, %v3406
        %v3408 = vpop.f32.mrb[0].mxu0
        %v3409 = vadd.f32 0.0, %v3408
        %3410 = vmatprep.mubr.f32.mxu0 0.0
        %3411 = vmatmul.mubr.f32.gmra.mrb[0].mxu0 %v3329
        %v3412 = vpop.f32.mrb[0].mxu0
        %v3413 = vadd.f32 0.0, %v3412
        %v3414 = vpop.f32.mrb[0].mxu0
        %v3415 = vadd.f32 0.0, %v3414
        %3416 = vmatprep.mubr.f32.mxu0 0.0
        %3417 = vmatmul.mubr.f32.gmra.mrb[0].mxu0 %v3332
        %v3418 = vpop.f32.mrb[0].mxu0
        %v3419 = vadd.f32 0.0, %v3418
        %v3420 = vpop.f32.mrb[0].mxu0
        %v3421 = vadd.f32 0.0, %v3420
        %3422 = vdwg.mxu0
        %v3424 = vsel %vm277, %v250, 0
        %v3427 = vsel %vm277, %v251, 0
        %v3430 = vsel %vm277, %v252, 0
        %v3433 = vsel %vm277, %v253, 0
        %3435 = vmatprep.subr.mxu0 %v292
        %3436 = vmatpush1.msra.mxu0 %v290
        %3437 = vmatprep.subr.mxu0 0.0
        %3438 = vmatpush1.msra.mxu0 0.0
        %3439 = vmatprep.subr.mxu0 0.0
        %3440 = vmatpush1.msra.mxu0 0.0
        %3441 = vmatprep.subr.mxu0 0.0
        %3442 = vmatpush1.msra.mxu0 0.0
        %3443 = vmatprep.subr.mxu0 0.0
        %3444 = vmatpush1.msra.mxu0 0.0
        %3445 = vmatprep.subr.mxu0 0.0
        %3446 = vmatpush1.msra.mxu0 0.0
        %3447 = vmatprep.subr.mxu0 0.0
        %3448 = vmatpush1.msra.mxu0 0.0
        %3449 = vmatprep.subr.mxu0 0.0
        %3450 = vmatpush1.msra.mxu0 0.0
        %3451 = vmatprep.subr.mxu0 0.0
        %3452 = vmatpush1.msra.mxu0 0.0
        %3453 = vmatprep.subr.mxu0 0.0
        %3454 = vmatpush1.msra.mxu0 0.0
        %3455 = vmatprep.subr.mxu0 0.0
        %3456 = vmatpush1.msra.mxu0 0.0
        %3457 = vmatprep.subr.mxu0 0.0
        %3458 = vmatpush1.msra.mxu0 0.0
        %3459 = vmatprep.subr.mxu0 0.0
        %3460 = vmatpush1.msra.mxu0 0.0
        %3461 = vmatprep.subr.mxu0 0.0
        %3462 = vmatpush1.msra.mxu0 0.0
        %3463 = vmatprep.subr.mxu0 0.0
        %3464 = vmatpush1.msra.mxu0 0.0
        %3465 = vmatprep.subr.mxu0 0.0
        %3466 = vmatpush1.msra.mxu0 0.0
        %3467 = vmatprep.subr.mxu0 0.0
        %3468 = vmatpush1.msra.mxu0 0.0
        %3469 = vmatprep.subr.mxu0 0.0
        %3470 = vmatpush1.msra.mxu0 0.0
        %3471 = vmatprep.subr.mxu0 0.0
        %3472 = vmatpush1.msra.mxu0 0.0
        %3473 = vmatprep.subr.mxu0 0.0
        %3474 = vmatpush1.msra.mxu0 0.0
        %3475 = vmatprep.subr.mxu0 0.0
        %3476 = vmatpush1.msra.mxu0 0.0
        %3477 = vmatprep.subr.mxu0 0.0
        %3478 = vmatpush1.msra.mxu0 0.0
        %3479 = vmatprep.subr.mxu0 0.0
        %3480 = vmatpush1.msra.mxu0 0.0
        %3481 = vmatprep.subr.mxu0 0.0
        %3482 = vmatpush1.msra.mxu0 0.0
        %3483 = vmatprep.subr.mxu0 0.0
        %3484 = vmatpush1.msra.mxu0 0.0
        %3485 = vmatprep.subr.mxu0 0.0
        %3486 = vmatpush1.msra.mxu0 0.0
        %3487 = vmatprep.subr.mxu0 0.0
        %3488 = vmatpush1.msra.mxu0 0.0
        %3489 = vmatprep.subr.mxu0 0.0
        %3490 = vmatpush1.msra.mxu0 0.0
        %3491 = vmatprep.subr.mxu0 0.0
        %3492 = vmatpush1.msra.mxu0 0.0
        %3493 = vmatprep.subr.mxu0 0.0
        %3494 = vmatpush1.msra.mxu0 0.0
        %3495 = vmatprep.subr.mxu0 0.0
        %3496 = vmatpush1.msra.mxu0 0.0
        %3497 = vmatprep.subr.mxu0 0.0
        %3498 = vmatpush1.msra.mxu0 0.0
        %3499 = vmatprep.mubr.f32.mxu0 0.0
        %3500 = vmatmul.mubr.f32.gmra.mrb[0].mxu0 %v3424
        %v3501 = vpop.f32.mrb[0].mxu0
        %v3502 = vadd.f32 0.0, %v3501
        %v3503 = vpop.f32.mrb[0].mxu0
        %v3504 = vadd.f32 0.0, %v3503
        %3505 = vmatprep.mubr.f32.mxu0 0.0
        %3506 = vmatmul.mubr.f32.gmra.mrb[0].mxu0 %v3427
        %v3507 = vpop.f32.mrb[0].mxu0
        %v3508 = vadd.f32 0.0, %v3507
        %v3509 = vpop.f32.mrb[0].mxu0
        %v3510 = vadd.f32 0.0, %v3509
        %3511 = vmatprep.mubr.f32.mxu0 0.0
        %3512 = vmatmul.mubr.f32.gmra.mrb[0].mxu0 %v3430
        %v3513 = vpop.f32.mrb[0].mxu0
        %v3514 = vadd.f32 0.0, %v3513
        %v3515 = vpop.f32.mrb[0].mxu0
        %v3516 = vadd.f32 0.0, %v3515
        %3517 = vmatprep.mubr.f32.mxu0 0.0
        %3518 = vmatmul.mubr.f32.gmra.mrb[0].mxu0 %v3433
        %v3519 = vpop.f32.mrb[0].mxu0
        %v3520 = vadd.f32 0.0, %v3519
        %v3521 = vpop.f32.mrb[0].mxu0
        %v3522 = vadd.f32 0.0, %v3521
        %3523 = vdwg.mxu0
        %v3525 = vsel %vm277, %v266, 0
        %v3528 = vsel %vm277, %v267, 0
        %v3531 = vsel %vm277, %v268, 0
        %v3534 = vsel %vm277, %v269, 0
        %3536 = vmatprep.subr.mxu0 %v292
        %3537 = vmatpush1.msra.mxu0 %v290
        %3538 = vmatprep.subr.mxu0 0.0
        %3539 = vmatpush1.msra.mxu0 0.0
        %3540 = vmatprep.subr.mxu0 0.0
        %3541 = vmatpush1.msra.mxu0 0.0
        %3542 = vmatprep.subr.mxu0 0.0
        %3543 = vmatpush1.msra.mxu0 0.0
        %3544 = vmatprep.subr.mxu0 0.0
        %3545 = vmatpush1.msra.mxu0 0.0
        %3546 = vmatprep.subr.mxu0 0.0
        %3547 = vmatpush1.msra.mxu0 0.0
        %3548 = vmatprep.subr.mxu0 0.0
        %3549 = vmatpush1.msra.mxu0 0.0
        %3550 = vmatprep.subr.mxu0 0.0
        %3551 = vmatpush1.msra.mxu0 0.0
        %3552 = vmatprep.subr.mxu0 0.0
        %3553 = vmatpush1.msra.mxu0 0.0
        %3554 = vmatprep.subr.mxu0 0.0
        %3555 = vmatpush1.msra.mxu0 0.0
        %3556 = vmatprep.subr.mxu0 0.0
        %3557 = vmatpush1.msra.mxu0 0.0
        %3558 = vmatprep.subr.mxu0 0.0
        %3559 = vmatpush1.msra.mxu0 0.0
        %3560 = vmatprep.subr.mxu0 0.0
        %3561 = vmatpush1.msra.mxu0 0.0
        %3562 = vmatprep.subr.mxu0 0.0
        %3563 = vmatpush1.msra.mxu0 0.0
        %3564 = vmatprep.subr.mxu0 0.0
        %3565 = vmatpush1.msra.mxu0 0.0
        %3566 = vmatprep.subr.mxu0 0.0
        %3567 = vmatpush1.msra.mxu0 0.0
        %3568 = vmatprep.subr.mxu0 0.0
        %3569 = vmatpush1.msra.mxu0 0.0
        %3570 = vmatprep.subr.mxu0 0.0
        %3571 = vmatpush1.msra.mxu0 0.0
        %3572 = vmatprep.subr.mxu0 0.0
        %3573 = vmatpush1.msra.mxu0 0.0
        %3574 = vmatprep.subr.mxu0 0.0
        %3575 = vmatpush1.msra.mxu0 0.0
        %3576 = vmatprep.subr.mxu0 0.0
        %3577 = vmatpush1.msra.mxu0 0.0
        %3578 = vmatprep.subr.mxu0 0.0
        %3579 = vmatpush1.msra.mxu0 0.0
        %3580 = vmatprep.subr.mxu0 0.0
        %3581 = vmatpush1.msra.mxu0 0.0
        %3582 = vmatprep.subr.mxu0 0.0
        %3583 = vmatpush1.msra.mxu0 0.0
        %3584 = vmatprep.subr.mxu0 0.0
        %3585 = vmatpush1.msra.mxu0 0.0
        %3586 = vmatprep.subr.mxu0 0.0
        %3587 = vmatpush1.msra.mxu0 0.0
        %3588 = vmatprep.subr.mxu0 0.0
        %3589 = vmatpush1.msra.mxu0 0.0
        %3590 = vmatprep.subr.mxu0 0.0
        %3591 = vmatpush1.msra.mxu0 0.0
        %3592 = vmatprep.subr.mxu0 0.0
        %3593 = vmatpush1.msra.mxu0 0.0
        %3594 = vmatprep.subr.mxu0 0.0
        %3595 = vmatpush1.msra.mxu0 0.0
        %3596 = vmatprep.subr.mxu0 0.0
        %3597 = vmatpush1.msra.mxu0 0.0
        %3598 = vmatprep.subr.mxu0 0.0
        %3599 = vmatpush1.msra.mxu0 0.0
        %3600 = vmatprep.mubr.f32.mxu0 0.0
        %3601 = vmatmul.mubr.f32.gmra.mrb[0].mxu0 %v3525
        %v3602 = vpop.f32.mrb[0].mxu0
        %v3603 = vadd.f32 0.0, %v3602
        %v3604 = vpop.f32.mrb[0].mxu0
        %v3605 = vadd.f32 0.0, %v3604
        %3606 = vmatprep.mubr.f32.mxu0 0.0
        %3607 = vmatmul.mubr.f32.gmra.mrb[0].mxu0 %v3528
        %v3608 = vpop.f32.mrb[0].mxu0
        %v3609 = vadd.f32 0.0, %v3608
        %v3610 = vpop.f32.mrb[0].mxu0
        %v3611 = vadd.f32 0.0, %v3610
        %3612 = vmatprep.mubr.f32.mxu0 0.0
        %3613 = vmatmul.mubr.f32.gmra.mrb[0].mxu0 %v3531
        %v3614 = vpop.f32.mrb[0].mxu0
        %v3615 = vadd.f32 0.0, %v3614
        %v3616 = vpop.f32.mrb[0].mxu0
        %v3617 = vadd.f32 0.0, %v3616
        %3618 = vmatprep.mubr.f32.mxu0 0.0
        %3619 = vmatmul.mubr.f32.gmra.mrb[0].mxu0 %v3534
        %v3620 = vpop.f32.mrb[0].mxu0
        %v3621 = vadd.f32 0.0, %v3620
        %v3622 = vpop.f32.mrb[0].mxu0
        %v3623 = vadd.f32 0.0, %v3622
        %3624 = vdwg.mxu0
        %3625 = vxpose.xlu0.b32.start [1/16] %v3401, 128
        %3626 = vxpose.xlu0.b32.cont [2/16] %v3407, 128
        %3627 = vxpose.xlu0.b32.cont [3/16] %v3413, 128
        %3628 = vxpose.xlu0.b32.cont [4/16] %v3419, 128
        %3629 = vxpose.xlu0.b32.cont [5/16] 0.0, 128
        %3630 = vxpose.xlu0.b32.cont [6/16] 0.0, 128
        %3631 = vxpose.xlu0.b32.cont [7/16] 0.0, 128
        %3632 = vxpose.xlu0.b32.cont [8/16] 0.0, 128
        %3633 = vxpose.xlu0.b32.cont [9/16] 0.0, 128
        %3634 = vxpose.xlu0.b32.cont [10/16] 0.0, 128
        %3635 = vxpose.xlu0.b32.cont [11/16] 0.0, 128
        %3636 = vxpose.xlu0.b32.cont [12/16] 0.0, 128
        %3637 = vxpose.xlu0.b32.cont [13/16] 0.0, 128
        %3638 = vxpose.xlu0.b32.cont [14/16] 0.0, 128
        %3639 = vxpose.xlu0.b32.cont [15/16] 0.0, 128
        %3640 = vxpose.xlu0.b32.end [16/16] 0.0, 128
        %v3641 = vpop.trf.xlu0
        %v3642 = vpop.trf.xlu0
        %v3643 = vpop.trf.xlu0
        %v3644 = vpop.trf.xlu0
        %v3645 = vpop.trf.xlu0
        %v3646 = vpop.trf.xlu0
        %v3647 = vpop.trf.xlu0
        %v3648 = vpop.trf.xlu0
        %v3649 = vpop.trf.xlu0
        %v3650 = vpop.trf.xlu0
        %v3651 = vpop.trf.xlu0
        %v3652 = vpop.trf.xlu0
        %v3653 = vpop.trf.xlu0
        %v3654 = vpop.trf.xlu0
        %v3655 = vpop.trf.xlu0
        %v3656 = vpop.trf.xlu0
        %3657 = vxpose.xlu0.b32.start [1/16] %v3403, 128
        %3658 = vxpose.xlu0.b32.cont [2/16] %v3409, 128
        %3659 = vxpose.xlu0.b32.cont [3/16] %v3415, 128
        %3660 = vxpose.xlu0.b32.cont [4/16] %v3421, 128
        %3661 = vxpose.xlu0.b32.cont [5/16] 0.0, 128
        %3662 = vxpose.xlu0.b32.cont [6/16] 0.0, 128
        %3663 = vxpose.xlu0.b32.cont [7/16] 0.0, 128
        %3664 = vxpose.xlu0.b32.cont [8/16] 0.0, 128
        %3665 = vxpose.xlu0.b32.cont [9/16] 0.0, 128
        %3666 = vxpose.xlu0.b32.cont [10/16] 0.0, 128
        %3667 = vxpose.xlu0.b32.cont [11/16] 0.0, 128
        %3668 = vxpose.xlu0.b32.cont [12/16] 0.0, 128
        %3669 = vxpose.xlu0.b32.cont [13/16] 0.0, 128
        %3670 = vxpose.xlu0.b32.cont [14/16] 0.0, 128
        %3671 = vxpose.xlu0.b32.cont [15/16] 0.0, 128
        %3672 = vxpose.xlu0.b32.end [16/16] 0.0, 128
        %v3673 = vpop.trf.xlu0
        %v3674 = vpop.trf.xlu0
        %v3675 = vpop.trf.xlu0
        %v3676 = vpop.trf.xlu0
        %v3677 = vpop.trf.xlu0
        %v3678 = vpop.trf.xlu0
        %v3679 = vpop.trf.xlu0
        %v3680 = vpop.trf.xlu0
        %v3681 = vpop.trf.xlu0
        %v3682 = vpop.trf.xlu0
        %v3683 = vpop.trf.xlu0
        %v3684 = vpop.trf.xlu0
        %v3685 = vpop.trf.xlu0
        %v3686 = vpop.trf.xlu0
        %v3687 = vpop.trf.xlu0
        %v3688 = vpop.trf.xlu0
        %v3689 = vpack.c.bf16 %v3642, %v3641
        %v3690 = vpack.c.bf16 %v3644, %v3643
        %v3691 = vpack.c.bf16 %v3646, %v3645
        %v3692 = vpack.c.bf16 %v3648, %v3647
        %v3693 = vpack.c.bf16 %v3650, %v3649
        %v3694 = vpack.c.bf16 %v3652, %v3651
        %v3695 = vpack.c.bf16 %v3654, %v3653
        %v3696 = vpack.c.bf16 %v3656, %v3655
        %v3697 = vpack.c.bf16 %v3674, %v3673
        %v3698 = vpack.c.bf16 %v3676, %v3675
        %v3699 = vpack.c.bf16 %v3678, %v3677
        %v3700 = vpack.c.bf16 %v3680, %v3679
        %v3701 = vpack.c.bf16 %v3682, %v3681
        %v3702 = vpack.c.bf16 %v3684, %v3683
        %v3703 = vpack.c.bf16 %v3686, %v3685
        %v3704 = vpack.c.bf16 %v3688, %v3687
        %3705 = vxpose.xlu0.b32.start [1/16] %v3603, 128
        %3706 = vxpose.xlu0.b32.cont [2/16] %v3609, 128
        %3707 = vxpose.xlu0.b32.cont [3/16] %v3615, 128
        %3708 = vxpose.xlu0.b32.cont [4/16] %v3621, 128
        %3709 = vxpose.xlu0.b32.cont [5/16] 0.0, 128
        %3710 = vxpose.xlu0.b32.cont [6/16] 0.0, 128
        %3711 = vxpose.xlu0.b32.cont [7/16] 0.0, 128
        %3712 = vxpose.xlu0.b32.cont [8/16] 0.0, 128
        %3713 = vxpose.xlu0.b32.cont [9/16] 0.0, 128
        %3714 = vxpose.xlu0.b32.cont [10/16] 0.0, 128
        %3715 = vxpose.xlu0.b32.cont [11/16] 0.0, 128
        %3716 = vxpose.xlu0.b32.cont [12/16] 0.0, 128
        %3717 = vxpose.xlu0.b32.cont [13/16] 0.0, 128
        %3718 = vxpose.xlu0.b32.cont [14/16] 0.0, 128
        %3719 = vxpose.xlu0.b32.cont [15/16] 0.0, 128
        %3720 = vxpose.xlu0.b32.end [16/16] 0.0, 128
        %v3721 = vpop.trf.xlu0
        %v3722 = vpop.trf.xlu0
        %v3723 = vpop.trf.xlu0
        %v3724 = vpop.trf.xlu0
        %v3725 = vpop.trf.xlu0
        %v3726 = vpop.trf.xlu0
        %v3727 = vpop.trf.xlu0
        %v3728 = vpop.trf.xlu0
        %v3729 = vpop.trf.xlu0
        %v3730 = vpop.trf.xlu0
        %v3731 = vpop.trf.xlu0
        %v3732 = vpop.trf.xlu0
        %v3733 = vpop.trf.xlu0
        %v3734 = vpop.trf.xlu0
        %v3735 = vpop.trf.xlu0
        %v3736 = vpop.trf.xlu0
        %3737 = vxpose.xlu0.b32.start [1/16] %v3605, 128
        %3738 = vxpose.xlu0.b32.cont [2/16] %v3611, 128
        %3739 = vxpose.xlu0.b32.cont [3/16] %v3617, 128
        %3740 = vxpose.xlu0.b32.cont [4/16] %v3623, 128
        %3741 = vxpose.xlu0.b32.cont [5/16] 0.0, 128
        %3742 = vxpose.xlu0.b32.cont [6/16] 0.0, 128
        %3743 = vxpose.xlu0.b32.cont [7/16] 0.0, 128
        %3744 = vxpose.xlu0.b32.cont [8/16] 0.0, 128
        %3745 = vxpose.xlu0.b32.cont [9/16] 0.0, 128
        %3746 = vxpose.xlu0.b32.cont [10/16] 0.0, 128
        %3747 = vxpose.xlu0.b32.cont [11/16] 0.0, 128
        %3748 = vxpose.xlu0.b32.cont [12/16] 0.0, 128
        %3749 = vxpose.xlu0.b32.cont [13/16] 0.0, 128
        %3750 = vxpose.xlu0.b32.cont [14/16] 0.0, 128
        %3751 = vxpose.xlu0.b32.cont [15/16] 0.0, 128
        %3752 = vxpose.xlu0.b32.end [16/16] 0.0, 128
        %v3753 = vpop.trf.xlu0
        %v3754 = vpop.trf.xlu0
        %v3755 = vpop.trf.xlu0
        %v3756 = vpop.trf.xlu0
        %v3757 = vpop.trf.xlu0
        %v3758 = vpop.trf.xlu0
        %v3759 = vpop.trf.xlu0
        %v3760 = vpop.trf.xlu0
        %v3761 = vpop.trf.xlu0
        %v3762 = vpop.trf.xlu0
        %v3763 = vpop.trf.xlu0
        %v3764 = vpop.trf.xlu0
        %v3765 = vpop.trf.xlu0
        %v3766 = vpop.trf.xlu0
        %v3767 = vpop.trf.xlu0
        %v3768 = vpop.trf.xlu0
        %v3769 = vpack.c.bf16 %v3722, %v3721
        %v3770 = vpack.c.bf16 %v3724, %v3723
        %v3771 = vpack.c.bf16 %v3726, %v3725
        %v3772 = vpack.c.bf16 %v3728, %v3727
        %v3773 = vpack.c.bf16 %v3730, %v3729
        %v3774 = vpack.c.bf16 %v3732, %v3731
        %v3775 = vpack.c.bf16 %v3734, %v3733
        %v3776 = vpack.c.bf16 %v3736, %v3735
        %v3777 = vpack.c.bf16 %v3754, %v3753
        %v3778 = vpack.c.bf16 %v3756, %v3755
        %v3779 = vpack.c.bf16 %v3758, %v3757
        %v3780 = vpack.c.bf16 %v3760, %v3759
        %v3781 = vpack.c.bf16 %v3762, %v3761
        %v3782 = vpack.c.bf16 %v3764, %v3763
        %v3783 = vpack.c.bf16 %v3766, %v3765
        %v3784 = vpack.c.bf16 %v3768, %v3767
        %v3785 = vpack.c.bf16 %v3508, %v3502
        %v3786 = vpack.c.bf16 %v3510, %v3504
        %v3787 = vpack.c.bf16 %v3520, %v3514
        %v3788 = vpack.c.bf16 %v3522, %v3516
        %v3790 = vsel %vm749, %v3689, 0
        %v3793 = vsel %vm749, %v3690, 0
        %v3796 = vsel %vm749, %v3691, 0
        %v3799 = vsel %vm749, %v3692, 0
        %v3802 = vsel %vm749, %v3693, 0
        %v3805 = vsel %vm749, %v3694, 0
        %v3808 = vsel %vm749, %v3695, 0
        %v3811 = vsel %vm749, %v3696, 0
        %v3814 = vsel %vm749, %v3697, 0
        %v3817 = vsel %vm749, %v3698, 0
        %v3820 = vsel %vm749, %v3699, 0
        %v3823 = vsel %vm749, %v3700, 0
        %v3826 = vsel %vm749, %v3701, 0
        %v3829 = vsel %vm749, %v3702, 0
        %v3832 = vsel %vm749, %v3703, 0
        %v3835 = vsel %vm749, %v3704, 0
        %3837 = vmatprep.subr.bf16.mxu0 %v3786
        %3838 = vmatpush1.bf16.msra.mxu0 %v3785
        %3839 = vmatprep.subr.bf16.mxu0 %v3788
        %3840 = vmatpush1.bf16.msra.mxu0 %v3787
        %3841 = vmatprep.subr.bf16.mxu0 0
        %3842 = vmatpush1.bf16.msra.mxu0 0
        %3843 = vmatprep.subr.bf16.mxu0 0
        %3844 = vmatpush1.bf16.msra.mxu0 0
        %3845 = vmatprep.subr.bf16.mxu0 0
        %3846 = vmatpush1.bf16.msra.mxu0 0
        %3847 = vmatprep.subr.bf16.mxu0 0
        %3848 = vmatpush1.bf16.msra.mxu0 0
        %3849 = vmatprep.subr.bf16.mxu0 0
        %3850 = vmatpush1.bf16.msra.mxu0 0
        %3851 = vmatprep.subr.bf16.mxu0 0
        %3852 = vmatpush1.bf16.msra.mxu0 0
        %3853 = vmatprep.subr.bf16.mxu0 0
        %3854 = vmatpush1.bf16.msra.mxu0 0
        %3855 = vmatprep.subr.bf16.mxu0 0
        %3856 = vmatpush1.bf16.msra.mxu0 0
        %3857 = vmatprep.subr.bf16.mxu0 0
        %3858 = vmatpush1.bf16.msra.mxu0 0
        %3859 = vmatprep.subr.bf16.mxu0 0
        %3860 = vmatpush1.bf16.msra.mxu0 0
        %3861 = vmatprep.subr.bf16.mxu0 0
        %3862 = vmatpush1.bf16.msra.mxu0 0
        %3863 = vmatprep.subr.bf16.mxu0 0
        %3864 = vmatpush1.bf16.msra.mxu0 0
        %3865 = vmatprep.subr.bf16.mxu0 0
        %3866 = vmatpush1.bf16.msra.mxu0 0
        %3867 = vmatprep.subr.bf16.mxu0 0
        %3868 = vmatpush1.bf16.msra.mxu0 0
        %3869 = vmatprep.mubr.bf16.mxu0 0
        %3870 = vmatmul.mubr.bf16.gmra.mrb[0].mxu0 %v3790
        %v3871 = vpop.f32.mrb[0].mxu0
        %v3872 = vadd.f32 0.0, %v3871
        %v3873 = vpop.f32.mrb[0].mxu0
        %v3874 = vadd.f32 0.0, %v3873
        %v3875 = vpop.f32.mrb[0].mxu0
        %v3876 = vadd.f32 0.0, %v3875
        %v3877 = vpop.f32.mrb[0].mxu0
        %v3878 = vadd.f32 0.0, %v3877
        %3879 = vmatprep.mubr.bf16.mxu0 0
        %3880 = vmatmul.mubr.bf16.gmra.mrb[0].mxu0 %v3793
        %v3881 = vpop.f32.mrb[0].mxu0
        %v3882 = vadd.f32 0.0, %v3881
        %v3883 = vpop.f32.mrb[0].mxu0
        %v3884 = vadd.f32 0.0, %v3883
        %v3885 = vpop.f32.mrb[0].mxu0
        %v3886 = vadd.f32 0.0, %v3885
        %v3887 = vpop.f32.mrb[0].mxu0
        %v3888 = vadd.f32 0.0, %v3887
        %3889 = vmatprep.mubr.bf16.mxu0 0
        %3890 = vmatmul.mubr.bf16.gmra.mrb[0].mxu0 %v3796
        %v3891 = vpop.f32.mrb[0].mxu0
        %v3892 = vadd.f32 0.0, %v3891
        %v3893 = vpop.f32.mrb[0].mxu0
        %v3894 = vadd.f32 0.0, %v3893
        %v3895 = vpop.f32.mrb[0].mxu0
        %v3896 = vadd.f32 0.0, %v3895
        %v3897 = vpop.f32.mrb[0].mxu0
        %v3898 = vadd.f32 0.0, %v3897
        %3899 = vmatprep.mubr.bf16.mxu0 0
        %3900 = vmatmul.mubr.bf16.gmra.mrb[0].mxu0 %v3799
        %v3901 = vpop.f32.mrb[0].mxu0
        %v3902 = vadd.f32 0.0, %v3901
        %v3903 = vpop.f32.mrb[0].mxu0
        %v3904 = vadd.f32 0.0, %v3903
        %v3905 = vpop.f32.mrb[0].mxu0
        %v3906 = vadd.f32 0.0, %v3905
        %v3907 = vpop.f32.mrb[0].mxu0
        %v3908 = vadd.f32 0.0, %v3907
        %3909 = vmatprep.mubr.bf16.mxu0 0
        %3910 = vmatmul.mubr.bf16.gmra.mrb[0].mxu0 %v3802
        %v3911 = vpop.f32.mrb[0].mxu0
        %v3912 = vadd.f32 0.0, %v3911
        %v3913 = vpop.f32.mrb[0].mxu0
        %v3914 = vadd.f32 0.0, %v3913
        %v3915 = vpop.f32.mrb[0].mxu0
        %v3916 = vadd.f32 0.0, %v3915
        %v3917 = vpop.f32.mrb[0].mxu0
        %v3918 = vadd.f32 0.0, %v3917
        %3919 = vmatprep.mubr.bf16.mxu0 0
        %3920 = vmatmul.mubr.bf16.gmra.mrb[0].mxu0 %v3805
        %v3921 = vpop.f32.mrb[0].mxu0
        %v3922 = vadd.f32 0.0, %v3921
        %v3923 = vpop.f32.mrb[0].mxu0
        %v3924 = vadd.f32 0.0, %v3923
        %v3925 = vpop.f32.mrb[0].mxu0
        %v3926 = vadd.f32 0.0, %v3925
        %v3927 = vpop.f32.mrb[0].mxu0
        %v3928 = vadd.f32 0.0, %v3927
        %3929 = vmatprep.mubr.bf16.mxu0 0
        %3930 = vmatmul.mubr.bf16.gmra.mrb[0].mxu0 %v3808
        %v3931 = vpop.f32.mrb[0].mxu0
        %v3932 = vadd.f32 0.0, %v3931
        %v3933 = vpop.f32.mrb[0].mxu0
        %v3934 = vadd.f32 0.0, %v3933
        %v3935 = vpop.f32.mrb[0].mxu0
        %v3936 = vadd.f32 0.0, %v3935
        %v3937 = vpop.f32.mrb[0].mxu0
        %v3938 = vadd.f32 0.0, %v3937
        %3939 = vmatprep.mubr.bf16.mxu0 0
        %3940 = vmatmul.mubr.bf16.gmra.mrb[0].mxu0 %v3811
        %v3941 = vpop.f32.mrb[0].mxu0
        %v3942 = vadd.f32 0.0, %v3941
        %v3943 = vpop.f32.mrb[0].mxu0
        %v3944 = vadd.f32 0.0, %v3943
        %v3945 = vpop.f32.mrb[0].mxu0
        %v3946 = vadd.f32 0.0, %v3945
        %v3947 = vpop.f32.mrb[0].mxu0
        %v3948 = vadd.f32 0.0, %v3947
        %3949 = vmatprep.mubr.bf16.mxu0 0
        %3950 = vmatmul.mubr.bf16.gmra.mrb[0].mxu0 %v3814
        %v3951 = vpop.f32.mrb[0].mxu0
        %v3952 = vadd.f32 0.0, %v3951
        %v3953 = vpop.f32.mrb[0].mxu0
        %v3954 = vadd.f32 0.0, %v3953
        %v3955 = vpop.f32.mrb[0].mxu0
        %v3956 = vadd.f32 0.0, %v3955
        %v3957 = vpop.f32.mrb[0].mxu0
        %v3958 = vadd.f32 0.0, %v3957
        %3959 = vmatprep.mubr.bf16.mxu0 0
        %3960 = vmatmul.mubr.bf16.gmra.mrb[0].mxu0 %v3817
        %v3961 = vpop.f32.mrb[0].mxu0
        %v3962 = vadd.f32 0.0, %v3961
        %v3963 = vpop.f32.mrb[0].mxu0
        %v3964 = vadd.f32 0.0, %v3963
        %v3965 = vpop.f32.mrb[0].mxu0
        %v3966 = vadd.f32 0.0, %v3965
        %v3967 = vpop.f32.mrb[0].mxu0
        %v3968 = vadd.f32 0.0, %v3967
        %3969 = vmatprep.mubr.bf16.mxu0 0
        %3970 = vmatmul.mubr.bf16.gmra.mrb[0].mxu0 %v3820
        %v3971 = vpop.f32.mrb[0].mxu0
        %v3972 = vadd.f32 0.0, %v3971
        %v3973 = vpop.f32.mrb[0].mxu0
        %v3974 = vadd.f32 0.0, %v3973
        %v3975 = vpop.f32.mrb[0].mxu0
        %v3976 = vadd.f32 0.0, %v3975
        %v3977 = vpop.f32.mrb[0].mxu0
        %v3978 = vadd.f32 0.0, %v3977
        %3979 = vmatprep.mubr.bf16.mxu0 0
        %3980 = vmatmul.mubr.bf16.gmra.mrb[0].mxu0 %v3823
        %v3981 = vpop.f32.mrb[0].mxu0
        %v3982 = vadd.f32 0.0, %v3981
        %v3983 = vpop.f32.mrb[0].mxu0
        %v3984 = vadd.f32 0.0, %v3983
        %v3985 = vpop.f32.mrb[0].mxu0
        %v3986 = vadd.f32 0.0, %v3985
        %v3987 = vpop.f32.mrb[0].mxu0
        %v3988 = vadd.f32 0.0, %v3987
        %3989 = vmatprep.mubr.bf16.mxu0 0
        %3990 = vmatmul.mubr.bf16.gmra.mrb[0].mxu0 %v3826
        %v3991 = vpop.f32.mrb[0].mxu0
        %v3992 = vadd.f32 0.0, %v3991
        %v3993 = vpop.f32.mrb[0].mxu0
        %v3994 = vadd.f32 0.0, %v3993
        %v3995 = vpop.f32.mrb[0].mxu0
        %v3996 = vadd.f32 0.0, %v3995
        %v3997 = vpop.f32.mrb[0].mxu0
        %v3998 = vadd.f32 0.0, %v3997
        %3999 = vmatprep.mubr.bf16.mxu0 0
        %4000 = vmatmul.mubr.bf16.gmra.mrb[0].mxu0 %v3829
        %v4001 = vpop.f32.mrb[0].mxu0
        %v4002 = vadd.f32 0.0, %v4001
        %v4003 = vpop.f32.mrb[0].mxu0
        %v4004 = vadd.f32 0.0, %v4003
        %v4005 = vpop.f32.mrb[0].mxu0
        %v4006 = vadd.f32 0.0, %v4005
        %v4007 = vpop.f32.mrb[0].mxu0
        %v4008 = vadd.f32 0.0, %v4007
        %4009 = vmatprep.mubr.bf16.mxu0 0
        %4010 = vmatmul.mubr.bf16.gmra.mrb[0].mxu0 %v3832
        %v4011 = vpop.f32.mrb[0].mxu0
        %v4012 = vadd.f32 0.0, %v4011
        %v4013 = vpop.f32.mrb[0].mxu0
        %v4014 = vadd.f32 0.0, %v4013
        %v4015 = vpop.f32.mrb[0].mxu0
        %v4016 = vadd.f32 0.0, %v4015
        %v4017 = vpop.f32.mrb[0].mxu0
        %v4018 = vadd.f32 0.0, %v4017
        %4019 = vmatprep.mubr.bf16.mxu0 0
        %4020 = vmatmul.mubr.bf16.gmra.mrb[0].mxu0 %v3835
        %v4021 = vpop.f32.mrb[0].mxu0
        %v4022 = vadd.f32 0.0, %v4021
        %v4023 = vpop.f32.mrb[0].mxu0
        %v4024 = vadd.f32 0.0, %v4023
        %v4025 = vpop.f32.mrb[0].mxu0
        %v4026 = vadd.f32 0.0, %v4025
        %v4027 = vpop.f32.mrb[0].mxu0
        %v4028 = vadd.f32 0.0, %v4027
        %4029 = vdwg.mxu0
        %v4030 = vmax.f32 %v3872, %v3874
        %4031 = vmax.xlane.f32.xlu0 %v4030
        %v4032 = vpop.xlane.xlu0 %4031
        %v4033 = vmax.f32 %v3876, %v3878
        %4034 = vmax.xlane.f32.xlu0 %v4033
        %v4035 = vpop.xlane.xlu0 %4034
        %v4036 = vmax.f32 %v3882, %v3884
        %4037 = vmax.xlane.f32.xlu0 %v4036
        %v4038 = vpop.xlane.xlu0 %4037
        %v4039 = vmax.f32 %v3886, %v3888
        %4040 = vmax.xlane.f32.xlu0 %v4039
        %v4041 = vpop.xlane.xlu0 %4040
        %v4042 = vmax.f32 %v3892, %v3894
        %4043 = vmax.xlane.f32.xlu0 %v4042
        %v4044 = vpop.xlane.xlu0 %4043
        %v4045 = vmax.f32 %v3896, %v3898
        %4046 = vmax.xlane.f32.xlu0 %v4045
        %v4047 = vpop.xlane.xlu0 %4046
        %v4048 = vmax.f32 %v3902, %v3904
        %4049 = vmax.xlane.f32.xlu0 %v4048
        %v4050 = vpop.xlane.xlu0 %4049
        %v4051 = vmax.f32 %v3906, %v3908
        %4052 = vmax.xlane.f32.xlu0 %v4051
        %v4053 = vpop.xlane.xlu0 %4052
        %v4054 = vmax.f32 %v3912, %v3914
        %4055 = vmax.xlane.f32.xlu0 %v4054
        %v4056 = vpop.xlane.xlu0 %4055
        %v4057 = vmax.f32 %v3916, %v3918
        %4058 = vmax.xlane.f32.xlu0 %v4057
        %v4059 = vpop.xlane.xlu0 %4058
        %v4060 = vmax.f32 %v3922, %v3924
        %4061 = vmax.xlane.f32.xlu0 %v4060
        %v4062 = vpop.xlane.xlu0 %4061
        %v4063 = vmax.f32 %v3926, %v3928
        %4064 = vmax.xlane.f32.xlu0 %v4063
        %v4065 = vpop.xlane.xlu0 %4064
        %v4066 = vmax.f32 %v3932, %v3934
        %4067 = vmax.xlane.f32.xlu0 %v4066
        %v4068 = vpop.xlane.xlu0 %4067
        %v4069 = vmax.f32 %v3936, %v3938
        %4070 = vmax.xlane.f32.xlu0 %v4069
        %v4071 = vpop.xlane.xlu0 %4070
        %v4072 = vmax.f32 %v3942, %v3944
        %4073 = vmax.xlane.f32.xlu0 %v4072
        %v4074 = vpop.xlane.xlu0 %4073
        %v4075 = vmax.f32 %v3946, %v3948
        %4076 = vmax.xlane.f32.xlu0 %v4075
        %v4077 = vpop.xlane.xlu0 %4076
        %v4078 = vmax.f32 %v3952, %v3954
        %4079 = vmax.xlane.f32.xlu0 %v4078
        %v4080 = vpop.xlane.xlu0 %4079
        %v4081 = vmax.f32 %v3956, %v3958
        %4082 = vmax.xlane.f32.xlu0 %v4081
        %v4083 = vpop.xlane.xlu0 %4082
        %v4084 = vmax.f32 %v3962, %v3964
        %4085 = vmax.xlane.f32.xlu0 %v4084
        %v4086 = vpop.xlane.xlu0 %4085
        %v4087 = vmax.f32 %v3966, %v3968
        %4088 = vmax.xlane.f32.xlu0 %v4087
        %v4089 = vpop.xlane.xlu0 %4088
        %v4090 = vmax.f32 %v3972, %v3974
        %4091 = vmax.xlane.f32.xlu0 %v4090
        %v4092 = vpop.xlane.xlu0 %4091
        %v4093 = vmax.f32 %v3976, %v3978
        %4094 = vmax.xlane.f32.xlu0 %v4093
        %v4095 = vpop.xlane.xlu0 %4094
        %v4096 = vmax.f32 %v3982, %v3984
        %4097 = vmax.xlane.f32.xlu0 %v4096
        %v4098 = vpop.xlane.xlu0 %4097
        %v4099 = vmax.f32 %v3986, %v3988
        %4100 = vmax.xlane.f32.xlu0 %v4099
        %v4101 = vpop.xlane.xlu0 %4100
        %v4102 = vmax.f32 %v3992, %v3994
        %4103 = vmax.xlane.f32.xlu0 %v4102
        %v4104 = vpop.xlane.xlu0 %4103
        %v4105 = vmax.f32 %v3996, %v3998
        %4106 = vmax.xlane.f32.xlu0 %v4105
        %v4107 = vpop.xlane.xlu0 %4106
        %v4108 = vmax.f32 %v4002, %v4004
        %4109 = vmax.xlane.f32.xlu0 %v4108
        %v4110 = vpop.xlane.xlu0 %4109
        %v4111 = vmax.f32 %v4006, %v4008
        %4112 = vmax.xlane.f32.xlu0 %v4111
        %v4113 = vpop.xlane.xlu0 %4112
        %v4114 = vmax.f32 %v4012, %v4014
        %4115 = vmax.xlane.f32.xlu0 %v4114
        %v4116 = vpop.xlane.xlu0 %4115
        %v4117 = vmax.f32 %v4016, %v4018
        %4118 = vmax.xlane.f32.xlu0 %v4117
        %v4119 = vpop.xlane.xlu0 %4118
        %v4120 = vmax.f32 %v4022, %v4024
        %4121 = vmax.xlane.f32.xlu0 %v4120
        %v4122 = vpop.xlane.xlu0 %4121
        %v4123 = vmax.f32 %v4026, %v4028
        %4124 = vmax.xlane.f32.xlu0 %v4123
        %v4125 = vpop.xlane.xlu0 %4124
        %v4126 = vsub.f32 %v3872, %v4032
        %v4127 = vsub.f32 %v3874, %v4032
        %v4128 = vsub.f32 %v3876, %v4035
        %v4129 = vsub.f32 %v3878, %v4035
        %v4130 = vsub.f32 %v3882, %v4038
        %v4131 = vsub.f32 %v3884, %v4038
        %v4132 = vsub.f32 %v3886, %v4041
        %v4133 = vsub.f32 %v3888, %v4041
        %v4134 = vsub.f32 %v3892, %v4044
        %v4135 = vsub.f32 %v3894, %v4044
        %v4136 = vsub.f32 %v3896, %v4047
        %v4137 = vsub.f32 %v3898, %v4047
        %v4138 = vsub.f32 %v3902, %v4050
        %v4139 = vsub.f32 %v3904, %v4050
        %v4140 = vsub.f32 %v3906, %v4053
        %v4141 = vsub.f32 %v3908, %v4053
        %v4142 = vsub.f32 %v3912, %v4056
        %v4143 = vsub.f32 %v3914, %v4056
        %v4144 = vsub.f32 %v3916, %v4059
        %v4145 = vsub.f32 %v3918, %v4059
        %v4146 = vsub.f32 %v3922, %v4062
        %v4147 = vsub.f32 %v3924, %v4062
        %v4148 = vsub.f32 %v3926, %v4065
        %v4149 = vsub.f32 %v3928, %v4065
        %v4150 = vsub.f32 %v3932, %v4068
        %v4151 = vsub.f32 %v3934, %v4068
        %v4152 = vsub.f32 %v3936, %v4071
        %v4153 = vsub.f32 %v3938, %v4071
        %v4154 = vsub.f32 %v3942, %v4074
        %v4155 = vsub.f32 %v3944, %v4074
        %v4156 = vsub.f32 %v3946, %v4077
        %v4157 = vsub.f32 %v3948, %v4077
        %v4158 = vsub.f32 %v3952, %v4080
        %v4159 = vsub.f32 %v3954, %v4080
        %v4160 = vsub.f32 %v3956, %v4083
        %v4161 = vsub.f32 %v3958, %v4083
        %v4162 = vsub.f32 %v3962, %v4086
        %v4163 = vsub.f32 %v3964, %v4086
        %v4164 = vsub.f32 %v3966, %v4089
        %v4165 = vsub.f32 %v3968, %v4089
        %v4166 = vsub.f32 %v3972, %v4092
        %v4167 = vsub.f32 %v3974, %v4092
        %v4168 = vsub.f32 %v3976, %v4095
        %v4169 = vsub.f32 %v3978, %v4095
        %v4170 = vsub.f32 %v3982, %v4098
        %v4171 = vsub.f32 %v3984, %v4098
        %v4172 = vsub.f32 %v3986, %v4101
        %v4173 = vsub.f32 %v3988, %v4101
        %v4174 = vsub.f32 %v3992, %v4104
        %v4175 = vsub.f32 %v3994, %v4104
        %v4176 = vsub.f32 %v3996, %v4107
        %v4177 = vsub.f32 %v3998, %v4107
        %v4178 = vsub.f32 %v4002, %v4110
        %v4179 = vsub.f32 %v4004, %v4110
        %v4180 = vsub.f32 %v4006, %v4113
        %v4181 = vsub.f32 %v4008, %v4113
        %v4182 = vsub.f32 %v4012, %v4116
        %v4183 = vsub.f32 %v4014, %v4116
        %v4184 = vsub.f32 %v4016, %v4119
        %v4185 = vsub.f32 %v4018, %v4119
        %v4186 = vsub.f32 %v4022, %v4122
        %v4187 = vsub.f32 %v4024, %v4122
        %v4188 = vsub.f32 %v4026, %v4125
        %v4189 = vsub.f32 %v4028, %v4125
        %v4190 = vmul.f32 %v4126, 1.442695
        %v4191 = vpow.pop %v4190
        %v4192 = vmul.f32 %v4127, 1.442695
        %v4193 = vpow.pop %v4192
        %v4194 = vmul.f32 %v4128, 1.442695
        %v4195 = vpow.pop %v4194
        %v4196 = vmul.f32 %v4129, 1.442695
        %v4197 = vpow.pop %v4196
        %v4198 = vmul.f32 %v4130, 1.442695
        %v4199 = vpow.pop %v4198
        %v4200 = vmul.f32 %v4131, 1.442695
        %v4201 = vpow.pop %v4200
        %v4202 = vmul.f32 %v4132, 1.442695
        %v4203 = vpow.pop %v4202
        %v4204 = vmul.f32 %v4133, 1.442695
        %v4205 = vpow.pop %v4204
        %v4206 = vmul.f32 %v4134, 1.442695
        %v4207 = vpow.pop %v4206
        %v4208 = vmul.f32 %v4135, 1.442695
        %v4209 = vpow.pop %v4208
        %v4210 = vmul.f32 %v4136, 1.442695
        %v4211 = vpow.pop %v4210
        %v4212 = vmul.f32 %v4137, 1.442695
        %v4213 = vpow.pop %v4212
        %v4214 = vmul.f32 %v4138, 1.442695
        %v4215 = vpow.pop %v4214
        %v4216 = vmul.f32 %v4139, 1.442695
        %v4217 = vpow.pop %v4216
        %v4218 = vmul.f32 %v4140, 1.442695
        %v4219 = vpow.pop %v4218
        %v4220 = vmul.f32 %v4141, 1.442695
        %v4221 = vpow.pop %v4220
        %v4222 = vmul.f32 %v4142, 1.442695
        %v4223 = vpow.pop %v4222
        %v4224 = vmul.f32 %v4143, 1.442695
        %v4225 = vpow.pop %v4224
        %v4226 = vmul.f32 %v4144, 1.442695
        %v4227 = vpow.pop %v4226
        %v4228 = vmul.f32 %v4145, 1.442695
        %v4229 = vpow.pop %v4228
        %v4230 = vmul.f32 %v4146, 1.442695
        %v4231 = vpow.pop %v4230
        %v4232 = vmul.f32 %v4147, 1.442695
        %v4233 = vpow.pop %v4232
        %v4234 = vmul.f32 %v4148, 1.442695
        %v4235 = vpow.pop %v4234
        %v4236 = vmul.f32 %v4149, 1.442695
        %v4237 = vpow.pop %v4236
        %v4238 = vmul.f32 %v4150, 1.442695
        %v4239 = vpow.pop %v4238
        %v4240 = vmul.f32 %v4151, 1.442695
        %v4241 = vpow.pop %v4240
        %v4242 = vmul.f32 %v4152, 1.442695
        %v4243 = vpow.pop %v4242
        %v4244 = vmul.f32 %v4153, 1.442695
        %v4245 = vpow.pop %v4244
        %v4246 = vmul.f32 %v4154, 1.442695
        %v4247 = vpow.pop %v4246
        %v4248 = vmul.f32 %v4155, 1.442695
        %v4249 = vpow.pop %v4248
        %v4250 = vmul.f32 %v4156, 1.442695
        %v4251 = vpow.pop %v4250
        %v4252 = vmul.f32 %v4157, 1.442695
        %v4253 = vpow.pop %v4252
        %v4254 = vmul.f32 %v4158, 1.442695
        %v4255 = vpow.pop %v4254
        %v4256 = vmul.f32 %v4159, 1.442695
        %v4257 = vpow.pop %v4256
        %v4258 = vmul.f32 %v4160, 1.442695
        %v4259 = vpow.pop %v4258
        %v4260 = vmul.f32 %v4161, 1.442695
        %v4261 = vpow.pop %v4260
        %v4262 = vmul.f32 %v4162, 1.442695
        %v4263 = vpow.pop %v4262
        %v4264 = vmul.f32 %v4163, 1.442695
        %v4265 = vpow.pop %v4264
        %v4266 = vmul.f32 %v4164, 1.442695
        %v4267 = vpow.pop %v4266
        %v4268 = vmul.f32 %v4165, 1.442695
        %v4269 = vpow.pop %v4268
        %v4270 = vmul.f32 %v4166, 1.442695
        %v4271 = vpow.pop %v4270
        %v4272 = vmul.f32 %v4167, 1.442695
        %v4273 = vpow.pop %v4272
        %v4274 = vmul.f32 %v4168, 1.442695
        %v4275 = vpow.pop %v4274
        %v4276 = vmul.f32 %v4169, 1.442695
        %v4277 = vpow.pop %v4276
        %v4278 = vmul.f32 %v4170, 1.442695
        %v4279 = vpow.pop %v4278
        %v4280 = vmul.f32 %v4171, 1.442695
        %v4281 = vpow.pop %v4280
        %v4282 = vmul.f32 %v4172, 1.442695
        %v4283 = vpow.pop %v4282
        %v4284 = vmul.f32 %v4173, 1.442695
        %v4285 = vpow.pop %v4284
        %v4286 = vmul.f32 %v4174, 1.442695
        %v4287 = vpow.pop %v4286
        %v4288 = vmul.f32 %v4175, 1.442695
        %v4289 = vpow.pop %v4288
        %v4290 = vmul.f32 %v4176, 1.442695
        %v4291 = vpow.pop %v4290
        %v4292 = vmul.f32 %v4177, 1.442695
        %v4293 = vpow.pop %v4292
        %v4294 = vmul.f32 %v4178, 1.442695
        %v4295 = vpow.pop %v4294
        %v4296 = vmul.f32 %v4179, 1.442695
        %v4297 = vpow.pop %v4296
        %v4298 = vmul.f32 %v4180, 1.442695
        %v4299 = vpow.pop %v4298
        %v4300 = vmul.f32 %v4181, 1.442695
        %v4301 = vpow.pop %v4300
        %v4302 = vmul.f32 %v4182, 1.442695
        %v4303 = vpow.pop %v4302
        %v4304 = vmul.f32 %v4183, 1.442695
        %v4305 = vpow.pop %v4304
        %v4306 = vmul.f32 %v4184, 1.442695
        %v4307 = vpow.pop %v4306
        %v4308 = vmul.f32 %v4185, 1.442695
        %v4309 = vpow.pop %v4308
        %v4310 = vmul.f32 %v4186, 1.442695
        %v4311 = vpow.pop %v4310
        %v4312 = vmul.f32 %v4187, 1.442695
        %v4313 = vpow.pop %v4312
        %v4314 = vmul.f32 %v4188, 1.442695
        %v4315 = vpow.pop %v4314
        %v4316 = vmul.f32 %v4189, 1.442695
        %v4317 = vpow.pop %v4316
        %v4318 = vadd.f32 %v4191, %v4193
        %4319 = vadd.xlane.f32.xlu0 %v4318
        %v4320 = vpop.xlane.xlu0 %4319
        %v4321 = vadd.f32 %v4195, %v4197
        %4322 = vadd.xlane.f32.xlu0 %v4321
        %v4323 = vpop.xlane.xlu0 %4322
        %v4324 = vadd.f32 %v4199, %v4201
        %4325 = vadd.xlane.f32.xlu0 %v4324
        %v4326 = vpop.xlane.xlu0 %4325
        %v4327 = vadd.f32 %v4203, %v4205
        %4328 = vadd.xlane.f32.xlu0 %v4327
        %v4329 = vpop.xlane.xlu0 %4328
        %v4330 = vadd.f32 %v4207, %v4209
        %4331 = vadd.xlane.f32.xlu0 %v4330
        %v4332 = vpop.xlane.xlu0 %4331
        %v4333 = vadd.f32 %v4211, %v4213
        %4334 = vadd.xlane.f32.xlu0 %v4333
        %v4335 = vpop.xlane.xlu0 %4334
        %v4336 = vadd.f32 %v4215, %v4217
        %4337 = vadd.xlane.f32.xlu0 %v4336
        %v4338 = vpop.xlane.xlu0 %4337
        %v4339 = vadd.f32 %v4219, %v4221
        %4340 = vadd.xlane.f32.xlu0 %v4339
        %v4341 = vpop.xlane.xlu0 %4340
        %v4342 = vadd.f32 %v4223, %v4225
        %4343 = vadd.xlane.f32.xlu0 %v4342
        %v4344 = vpop.xlane.xlu0 %4343
        %v4345 = vadd.f32 %v4227, %v4229
        %4346 = vadd.xlane.f32.xlu0 %v4345
        %v4347 = vpop.xlane.xlu0 %4346
        %v4348 = vadd.f32 %v4231, %v4233
        %4349 = vadd.xlane.f32.xlu0 %v4348
        %v4350 = vpop.xlane.xlu0 %4349
        %v4351 = vadd.f32 %v4235, %v4237
        %4352 = vadd.xlane.f32.xlu0 %v4351
        %v4353 = vpop.xlane.xlu0 %4352
        %v4354 = vadd.f32 %v4239, %v4241
        %4355 = vadd.xlane.f32.xlu0 %v4354
        %v4356 = vpop.xlane.xlu0 %4355
        %v4357 = vadd.f32 %v4243, %v4245
        %4358 = vadd.xlane.f32.xlu0 %v4357
        %v4359 = vpop.xlane.xlu0 %4358
        %v4360 = vadd.f32 %v4247, %v4249
        %4361 = vadd.xlane.f32.xlu0 %v4360
        %v4362 = vpop.xlane.xlu0 %4361
        %v4363 = vadd.f32 %v4251, %v4253
        %4364 = vadd.xlane.f32.xlu0 %v4363
        %v4365 = vpop.xlane.xlu0 %4364
        %v4366 = vadd.f32 %v4255, %v4257
        %4367 = vadd.xlane.f32.xlu0 %v4366
        %v4368 = vpop.xlane.xlu0 %4367
        %v4369 = vadd.f32 %v4259, %v4261
        %4370 = vadd.xlane.f32.xlu0 %v4369
        %v4371 = vpop.xlane.xlu0 %4370
        %v4372 = vadd.f32 %v4263, %v4265
        %4373 = vadd.xlane.f32.xlu0 %v4372
        %v4374 = vpop.xlane.xlu0 %4373
        %v4375 = vadd.f32 %v4267, %v4269
        %4376 = vadd.xlane.f32.xlu0 %v4375
        %v4377 = vpop.xlane.xlu0 %4376
        %v4378 = vadd.f32 %v4271, %v4273
        %4379 = vadd.xlane.f32.xlu0 %v4378
        %v4380 = vpop.xlane.xlu0 %4379
        %v4381 = vadd.f32 %v4275, %v4277
        %4382 = vadd.xlane.f32.xlu0 %v4381
        %v4383 = vpop.xlane.xlu0 %4382
        %v4384 = vadd.f32 %v4279, %v4281
        %4385 = vadd.xlane.f32.xlu0 %v4384
        %v4386 = vpop.xlane.xlu0 %4385
        %v4387 = vadd.f32 %v4283, %v4285
        %4388 = vadd.xlane.f32.xlu0 %v4387
        %v4389 = vpop.xlane.xlu0 %4388
        %v4390 = vadd.f32 %v4287, %v4289
        %4391 = vadd.xlane.f32.xlu0 %v4390
        %v4392 = vpop.xlane.xlu0 %4391
        %v4393 = vadd.f32 %v4291, %v4293
        %4394 = vadd.xlane.f32.xlu0 %v4393
        %v4395 = vpop.xlane.xlu0 %4394
        %v4396 = vadd.f32 %v4295, %v4297
        %4397 = vadd.xlane.f32.xlu0 %v4396
        %v4398 = vpop.xlane.xlu0 %4397
        %v4399 = vadd.f32 %v4299, %v4301
        %4400 = vadd.xlane.f32.xlu0 %v4399
        %v4401 = vpop.xlane.xlu0 %4400
        %v4402 = vadd.f32 %v4303, %v4305
        %4403 = vadd.xlane.f32.xlu0 %v4402
        %v4404 = vpop.xlane.xlu0 %4403
        %v4405 = vadd.f32 %v4307, %v4309
        %4406 = vadd.xlane.f32.xlu0 %v4405
        %v4407 = vpop.xlane.xlu0 %4406
        %v4408 = vadd.f32 %v4311, %v4313
        %4409 = vadd.xlane.f32.xlu0 %v4408
        %v4410 = vpop.xlane.xlu0 %4409
        %v4411 = vadd.f32 %v4315, %v4317
        %4412 = vadd.xlane.f32.xlu0 %v4411
        %v4413 = vpop.xlane.xlu0 %4412
        %v4414 = vrcp.pop %v4320
        %v4415 = vrcp.pop %v4323
        %v4416 = vrcp.pop %v4326
        %v4417 = vrcp.pop %v4329
        %v4418 = vrcp.pop %v4332
        %v4419 = vrcp.pop %v4335
        %v4420 = vrcp.pop %v4338
        %v4421 = vrcp.pop %v4341
        %v4422 = vrcp.pop %v4344
        %v4423 = vrcp.pop %v4347
        %v4424 = vrcp.pop %v4350
        %v4425 = vrcp.pop %v4353
        %v4426 = vrcp.pop %v4356
        %v4427 = vrcp.pop %v4359
        %v4428 = vrcp.pop %v4362
        %v4429 = vrcp.pop %v4365
        %v4430 = vrcp.pop %v4368
        %v4431 = vrcp.pop %v4371
        %v4432 = vrcp.pop %v4374
        %v4433 = vrcp.pop %v4377
        %v4434 = vrcp.pop %v4380
        %v4435 = vrcp.pop %v4383
        %v4436 = vrcp.pop %v4386
        %v4437 = vrcp.pop %v4389
        %v4438 = vrcp.pop %v4392
        %v4439 = vrcp.pop %v4395
        %v4440 = vrcp.pop %v4398
        %v4441 = vrcp.pop %v4401
        %v4442 = vrcp.pop %v4404
        %v4443 = vrcp.pop %v4407
        %v4444 = vrcp.pop %v4410
        %v4445 = vrcp.pop %v4413
        %v4446 = vpack.c.bf16 %v4195, %v4191
        %v4447 = vpack.c.bf16 %v4197, %v4193
        %v4448 = vpack.c.bf16 %v4203, %v4199
        %v4449 = vpack.c.bf16 %v4205, %v4201
        %v4450 = vpack.c.bf16 %v4211, %v4207
        %v4451 = vpack.c.bf16 %v4213, %v4209
        %v4452 = vpack.c.bf16 %v4219, %v4215
        %v4453 = vpack.c.bf16 %v4221, %v4217
        %v4454 = vpack.c.bf16 %v4227, %v4223
        %v4455 = vpack.c.bf16 %v4229, %v4225
        %v4456 = vpack.c.bf16 %v4235, %v4231
        %v4457 = vpack.c.bf16 %v4237, %v4233
        %v4458 = vpack.c.bf16 %v4243, %v4239
        %v4459 = vpack.c.bf16 %v4245, %v4241
        %v4460 = vpack.c.bf16 %v4251, %v4247
        %v4461 = vpack.c.bf16 %v4253, %v4249
        %v4462 = vpack.c.bf16 %v4259, %v4255
        %v4463 = vpack.c.bf16 %v4261, %v4257
        %v4464 = vpack.c.bf16 %v4267, %v4263
        %v4465 = vpack.c.bf16 %v4269, %v4265
        %v4466 = vpack.c.bf16 %v4275, %v4271
        %v4467 = vpack.c.bf16 %v4277, %v4273
        %v4468 = vpack.c.bf16 %v4283, %v4279
        %v4469 = vpack.c.bf16 %v4285, %v4281
        %v4470 = vpack.c.bf16 %v4291, %v4287
        %v4471 = vpack.c.bf16 %v4293, %v4289
        %v4472 = vpack.c.bf16 %v4299, %v4295
        %v4473 = vpack.c.bf16 %v4301, %v4297
        %v4474 = vpack.c.bf16 %v4307, %v4303
        %v4475 = vpack.c.bf16 %v4309, %v4305
        %v4476 = vpack.c.bf16 %v4315, %v4311
        %v4477 = vpack.c.bf16 %v4317, %v4313
        %4478 = vmatprep.subr.bf16.mxu0 0
        %4479 = vmatpush1.bf16.msra.mxu0 %v3769
        %4480 = vmatprep.subr.bf16.mxu0 0
        %4481 = vmatpush1.bf16.msra.mxu0 %v3770
        %4482 = vmatprep.subr.bf16.mxu0 0
        %4483 = vmatpush1.bf16.msra.mxu0 %v3771
        %4484 = vmatprep.subr.bf16.mxu0 0
        %4485 = vmatpush1.bf16.msra.mxu0 %v3772
        %4486 = vmatprep.subr.bf16.mxu0 0
        %4487 = vmatpush1.bf16.msra.mxu0 %v3773
        %4488 = vmatprep.subr.bf16.mxu0 0
        %4489 = vmatpush1.bf16.msra.mxu0 %v3774
        %4490 = vmatprep.subr.bf16.mxu0 0
        %4491 = vmatpush1.bf16.msra.mxu0 %v3775
        %4492 = vmatprep.subr.bf16.mxu0 0
        %4493 = vmatpush1.bf16.msra.mxu0 %v3776
        %4494 = vmatprep.subr.bf16.mxu0 0
        %4495 = vmatpush1.bf16.msra.mxu0 %v3777
        %4496 = vmatprep.subr.bf16.mxu0 0
        %4497 = vmatpush1.bf16.msra.mxu0 %v3778
        %4498 = vmatprep.subr.bf16.mxu0 0
        %4499 = vmatpush1.bf16.msra.mxu0 %v3779
        %4500 = vmatprep.subr.bf16.mxu0 0
        %4501 = vmatpush1.bf16.msra.mxu0 %v3780
        %4502 = vmatprep.subr.bf16.mxu0 0
        %4503 = vmatpush1.bf16.msra.mxu0 %v3781
        %4504 = vmatprep.subr.bf16.mxu0 0
        %4505 = vmatpush1.bf16.msra.mxu0 %v3782
        %4506 = vmatprep.subr.bf16.mxu0 0
        %4507 = vmatpush1.bf16.msra.mxu0 %v3783
        %4508 = vmatprep.subr.bf16.mxu0 0
        %4509 = vmatpush1.bf16.msra.mxu0 %v3784
        %4510 = vmatprep.mubr.bf16.mxu0 %v4447
        %4511 = vmatmul.mubr.bf16.gmra.mrb[0].mxu0 %v4446
        %v4512 = vpop.f32.mrb[0].mxu0
        %v4513 = vadd.f32 0.0, %v4512
        %v4514 = vpop.f32.mrb[0].mxu0
        %v4515 = vpop.f32.mrb[0].mxu0
        %v4516 = vadd.f32 0.0, %v4515
        %v4517 = vpop.f32.mrb[0].mxu0
        %4518 = vmatprep.mubr.bf16.mxu0 %v4449
        %4519 = vmatmul.mubr.bf16.gmra.mrb[0].mxu0 %v4448
        %v4520 = vpop.f32.mrb[0].mxu0
        %v4521 = vadd.f32 0.0, %v4520
        %v4522 = vpop.f32.mrb[0].mxu0
        %v4523 = vpop.f32.mrb[0].mxu0
        %v4524 = vadd.f32 0.0, %v4523
        %v4525 = vpop.f32.mrb[0].mxu0
        %4526 = vmatprep.mubr.bf16.mxu0 %v4451
        %4527 = vmatmul.mubr.bf16.gmra.mrb[0].mxu0 %v4450
        %v4528 = vpop.f32.mrb[0].mxu0
        %v4529 = vadd.f32 0.0, %v4528
        %v4530 = vpop.f32.mrb[0].mxu0
        %v4531 = vpop.f32.mrb[0].mxu0
        %v4532 = vadd.f32 0.0, %v4531
        %v4533 = vpop.f32.mrb[0].mxu0
        %4534 = vmatprep.mubr.bf16.mxu0 %v4453
        %4535 = vmatmul.mubr.bf16.gmra.mrb[0].mxu0 %v4452
        %v4536 = vpop.f32.mrb[0].mxu0
        %v4537 = vadd.f32 0.0, %v4536
        %v4538 = vpop.f32.mrb[0].mxu0
        %v4539 = vpop.f32.mrb[0].mxu0
        %v4540 = vadd.f32 0.0, %v4539
        %v4541 = vpop.f32.mrb[0].mxu0
        %4542 = vmatprep.mubr.bf16.mxu0 %v4455
        %4543 = vmatmul.mubr.bf16.gmra.mrb[0].mxu0 %v4454
        %v4544 = vpop.f32.mrb[0].mxu0
        %v4545 = vadd.f32 0.0, %v4544
        %v4546 = vpop.f32.mrb[0].mxu0
        %v4547 = vpop.f32.mrb[0].mxu0
        %v4548 = vadd.f32 0.0, %v4547
        %v4549 = vpop.f32.mrb[0].mxu0
        %4550 = vmatprep.mubr.bf16.mxu0 %v4457
        %4551 = vmatmul.mubr.bf16.gmra.mrb[0].mxu0 %v4456
        %v4552 = vpop.f32.mrb[0].mxu0
        %v4553 = vadd.f32 0.0, %v4552
        %v4554 = vpop.f32.mrb[0].mxu0
        %v4555 = vpop.f32.mrb[0].mxu0
        %v4556 = vadd.f32 0.0, %v4555
        %v4557 = vpop.f32.mrb[0].mxu0
        %4558 = vmatprep.mubr.bf16.mxu0 %v4459
        %4559 = vmatmul.mubr.bf16.gmra.mrb[0].mxu0 %v4458
        %v4560 = vpop.f32.mrb[0].mxu0
        %v4561 = vadd.f32 0.0, %v4560
        %v4562 = vpop.f32.mrb[0].mxu0
        %v4563 = vpop.f32.mrb[0].mxu0
        %v4564 = vadd.f32 0.0, %v4563
        %v4565 = vpop.f32.mrb[0].mxu0
        %4566 = vmatprep.mubr.bf16.mxu0 %v4461
        %4567 = vmatmul.mubr.bf16.gmra.mrb[0].mxu0 %v4460
        %v4568 = vpop.f32.mrb[0].mxu0
        %v4569 = vadd.f32 0.0, %v4568
        %v4570 = vpop.f32.mrb[0].mxu0
        %v4571 = vpop.f32.mrb[0].mxu0
        %v4572 = vadd.f32 0.0, %v4571
        %v4573 = vpop.f32.mrb[0].mxu0
        %4574 = vmatprep.mubr.bf16.mxu0 %v4463
        %4575 = vmatmul.mubr.bf16.gmra.mrb[0].mxu0 %v4462
        %v4576 = vpop.f32.mrb[0].mxu0
        %v4577 = vadd.f32 0.0, %v4576
        %v4578 = vpop.f32.mrb[0].mxu0
        %v4579 = vpop.f32.mrb[0].mxu0
        %v4580 = vadd.f32 0.0, %v4579
        %v4581 = vpop.f32.mrb[0].mxu0
        %4582 = vmatprep.mubr.bf16.mxu0 %v4465
        %4583 = vmatmul.mubr.bf16.gmra.mrb[0].mxu0 %v4464
        %v4584 = vpop.f32.mrb[0].mxu0
        %v4585 = vadd.f32 0.0, %v4584
        %v4586 = vpop.f32.mrb[0].mxu0
        %v4587 = vpop.f32.mrb[0].mxu0
        %v4588 = vadd.f32 0.0, %v4587
        %v4589 = vpop.f32.mrb[0].mxu0
        %4590 = vmatprep.mubr.bf16.mxu0 %v4467
        %4591 = vmatmul.mubr.bf16.gmra.mrb[0].mxu0 %v4466
        %v4592 = vpop.f32.mrb[0].mxu0
        %v4593 = vadd.f32 0.0, %v4592
        %v4594 = vpop.f32.mrb[0].mxu0
        %v4595 = vpop.f32.mrb[0].mxu0
        %v4596 = vadd.f32 0.0, %v4595
        %v4597 = vpop.f32.mrb[0].mxu0
        %4598 = vmatprep.mubr.bf16.mxu0 %v4469
        %4599 = vmatmul.mubr.bf16.gmra.mrb[0].mxu0 %v4468
        %v4600 = vpop.f32.mrb[0].mxu0
        %v4601 = vadd.f32 0.0, %v4600
        %v4602 = vpop.f32.mrb[0].mxu0
        %v4603 = vpop.f32.mrb[0].mxu0
        %v4604 = vadd.f32 0.0, %v4603
        %v4605 = vpop.f32.mrb[0].mxu0
        %4606 = vmatprep.mubr.bf16.mxu0 %v4471
        %4607 = vmatmul.mubr.bf16.gmra.mrb[0].mxu0 %v4470
        %v4608 = vpop.f32.mrb[0].mxu0
        %v4609 = vadd.f32 0.0, %v4608
        %v4610 = vpop.f32.mrb[0].mxu0
        %v4611 = vpop.f32.mrb[0].mxu0
        %v4612 = vadd.f32 0.0, %v4611
        %v4613 = vpop.f32.mrb[0].mxu0
        %4614 = vmatprep.mubr.bf16.mxu0 %v4473
        %4615 = vmatmul.mubr.bf16.gmra.mrb[0].mxu0 %v4472
        %v4616 = vpop.f32.mrb[0].mxu0
        %v4617 = vadd.f32 0.0, %v4616
        %v4618 = vpop.f32.mrb[0].mxu0
        %v4619 = vpop.f32.mrb[0].mxu0
        %v4620 = vadd.f32 0.0, %v4619
        %v4621 = vpop.f32.mrb[0].mxu0
        %4622 = vmatprep.mubr.bf16.mxu0 %v4475
        %4623 = vmatmul.mubr.bf16.gmra.mrb[0].mxu0 %v4474
        %v4624 = vpop.f32.mrb[0].mxu0
        %v4625 = vadd.f32 0.0, %v4624
        %v4626 = vpop.f32.mrb[0].mxu0
        %v4627 = vpop.f32.mrb[0].mxu0
        %v4628 = vadd.f32 0.0, %v4627
        %v4629 = vpop.f32.mrb[0].mxu0
        %4630 = vmatprep.mubr.bf16.mxu0 %v4477
        %4631 = vmatmul.mubr.bf16.gmra.mrb[0].mxu0 %v4476
        %v4632 = vpop.f32.mrb[0].mxu0
        %v4633 = vadd.f32 0.0, %v4632
        %v4634 = vpop.f32.mrb[0].mxu0
        %v4635 = vpop.f32.mrb[0].mxu0
        %v4636 = vadd.f32 0.0, %v4635
        %v4637 = vpop.f32.mrb[0].mxu0
        %4638 = vdwg.mxu0
        %v4639 = vmul.f32 %v4513, %v4414
        %v4640 = vmul.f32 %v4516, %v4415
        %v4641 = vmul.f32 %v4521, %v4416
        %v4642 = vmul.f32 %v4524, %v4417
        %v4643 = vmul.f32 %v4529, %v4418
        %v4644 = vmul.f32 %v4532, %v4419
        %v4645 = vmul.f32 %v4537, %v4420
        %v4646 = vmul.f32 %v4540, %v4421
        %v4647 = vmul.f32 %v4545, %v4422
        %v4648 = vmul.f32 %v4548, %v4423
        %v4649 = vmul.f32 %v4553, %v4424
        %v4650 = vmul.f32 %v4556, %v4425
        %v4651 = vmul.f32 %v4561, %v4426
        %v4652 = vmul.f32 %v4564, %v4427
        %v4653 = vmul.f32 %v4569, %v4428
        %v4654 = vmul.f32 %v4572, %v4429
        %v4655 = vmul.f32 %v4577, %v4430
        %v4656 = vmul.f32 %v4580, %v4431
        %v4657 = vmul.f32 %v4585, %v4432
        %v4658 = vmul.f32 %v4588, %v4433
        %v4659 = vmul.f32 %v4593, %v4434
        %v4660 = vmul.f32 %v4596, %v4435
        %v4661 = vmul.f32 %v4601, %v4436
        %v4662 = vmul.f32 %v4604, %v4437
        %v4663 = vmul.f32 %v4609, %v4438
        %v4664 = vmul.f32 %v4612, %v4439
        %v4665 = vmul.f32 %v4617, %v4440
        %v4666 = vmul.f32 %v4620, %v4441
        %v4667 = vmul.f32 %v4625, %v4442
        %v4668 = vmul.f32 %v4628, %v4443
        %v4669 = vmul.f32 %v4633, %v4444
        %v4670 = vmul.f32 %v4636, %v4445
        %4671 = vrot.lane.b32.xlu0 %v274, 64
        %v4672 = vpop.permute.xlu0 %4671
        %v4673 = vsel %vm749, %v4672, 0
        %v4676 = vsel %vm749, %v4639, 0
        %v4679 = vsel %vm749, %v4640, 0
        %v4682 = vsel %vm749, %v4641, 0
        %v4685 = vsel %vm749, %v4642, 0
        %v4688 = vsel %vm749, %v4643, 0
        %v4691 = vsel %vm749, %v4644, 0
        %v4694 = vsel %vm749, %v4645, 0
        %v4697 = vsel %vm749, %v4646, 0
        %v4700 = vsel %vm749, %v4647, 0
        %v4703 = vsel %vm749, %v4648, 0
        %v4706 = vsel %vm749, %v4649, 0
        %v4709 = vsel %vm749, %v4650, 0
        %v4712 = vsel %vm749, %v4651, 0
        %v4715 = vsel %vm749, %v4652, 0
        %v4718 = vsel %vm749, %v4653, 0
        %v4721 = vsel %vm749, %v4654, 0
        %v4724 = vsel %vm749, %v4655, 0
        %v4727 = vsel %vm749, %v4656, 0
        %v4730 = vsel %vm749, %v4657, 0
        %v4733 = vsel %vm749, %v4658, 0
        %v4736 = vsel %vm749, %v4659, 0
        %v4739 = vsel %vm749, %v4660, 0
        %v4742 = vsel %vm749, %v4661, 0
        %v4745 = vsel %vm749, %v4662, 0
        %v4748 = vsel %vm749, %v4663, 0
        %v4751 = vsel %vm749, %v4664, 0
        %v4754 = vsel %vm749, %v4665, 0
        %v4757 = vsel %vm749, %v4666, 0
        %v4760 = vsel %vm749, %v4667, 0
        %v4763 = vsel %vm749, %v4668, 0
        %v4766 = vsel %vm749, %v4669, 0
        %v4769 = vsel %vm749, %v4670, 0
        %4771 = vmatprep.subr.mxu0 0.0
        %4772 = vmatpush1.xpose.msra.mxu0 %v4676
        %4773 = vmatprep.subr.mxu0 0.0
        %4774 = vmatpush1.xpose.msra.mxu0 %v4679
        %4775 = vmatprep.subr.mxu0 0.0
        %4776 = vmatpush1.xpose.msra.mxu0 %v4682
        %4777 = vmatprep.subr.mxu0 0.0
        %4778 = vmatpush1.xpose.msra.mxu0 %v4685
        %4779 = vmatprep.subr.mxu0 0.0
        %4780 = vmatpush1.xpose.msra.mxu0 %v4688
        %4781 = vmatprep.subr.mxu0 0.0
        %4782 = vmatpush1.xpose.msra.mxu0 %v4691
        %4783 = vmatprep.subr.mxu0 0.0
        %4784 = vmatpush1.xpose.msra.mxu0 %v4694
        %4785 = vmatprep.subr.mxu0 0.0
        %4786 = vmatpush1.xpose.msra.mxu0 %v4697
        %4787 = vmatprep.subr.mxu0 0.0
        %4788 = vmatpush1.xpose.msra.mxu0 %v4700
        %4789 = vmatprep.subr.mxu0 0.0
        %4790 = vmatpush1.xpose.msra.mxu0 %v4703
        %4791 = vmatprep.subr.mxu0 0.0
        %4792 = vmatpush1.xpose.msra.mxu0 %v4706
        %4793 = vmatprep.subr.mxu0 0.0
        %4794 = vmatpush1.xpose.msra.mxu0 %v4709
        %4795 = vmatprep.subr.mxu0 0.0
        %4796 = vmatpush1.xpose.msra.mxu0 %v4712
        %4797 = vmatprep.subr.mxu0 0.0
        %4798 = vmatpush1.xpose.msra.mxu0 %v4715
        %4799 = vmatprep.subr.mxu0 0.0
        %4800 = vmatpush1.xpose.msra.mxu0 %v4718
        %4801 = vmatprep.subr.mxu0 0.0
        %4802 = vmatpush1.xpose.msra.mxu0 %v4721
        %4803 = vmatprep.subr.mxu0 0.0
        %4804 = vmatpush1.xpose.msra.mxu0 %v4724
        %4805 = vmatprep.subr.mxu0 0.0
        %4806 = vmatpush1.xpose.msra.mxu0 %v4727
        %4807 = vmatprep.subr.mxu0 0.0
        %4808 = vmatpush1.xpose.msra.mxu0 %v4730
        %4809 = vmatprep.subr.mxu0 0.0
        %4810 = vmatpush1.xpose.msra.mxu0 %v4733
        %4811 = vmatprep.subr.mxu0 0.0
        %4812 = vmatpush1.xpose.msra.mxu0 %v4736
        %4813 = vmatprep.subr.mxu0 0.0
        %4814 = vmatpush1.xpose.msra.mxu0 %v4739
        %4815 = vmatprep.subr.mxu0 0.0
        %4816 = vmatpush1.xpose.msra.mxu0 %v4742
        %4817 = vmatprep.subr.mxu0 0.0
        %4818 = vmatpush1.xpose.msra.mxu0 %v4745
        %4819 = vmatprep.subr.mxu0 0.0
        %4820 = vmatpush1.xpose.msra.mxu0 %v4748
        %4821 = vmatprep.subr.mxu0 0.0
        %4822 = vmatpush1.xpose.msra.mxu0 %v4751
        %4823 = vmatprep.subr.mxu0 0.0
        %4824 = vmatpush1.xpose.msra.mxu0 %v4754
        %4825 = vmatprep.subr.mxu0 0.0
        %4826 = vmatpush1.xpose.msra.mxu0 %v4757
        %4827 = vmatprep.subr.mxu0 0.0
        %4828 = vmatpush1.xpose.msra.mxu0 %v4760
        %4829 = vmatprep.subr.mxu0 0.0
        %4830 = vmatpush1.xpose.msra.mxu0 %v4763
        %4831 = vmatprep.subr.mxu0 0.0
        %4832 = vmatpush1.xpose.msra.mxu0 %v4766
        %4833 = vmatprep.subr.mxu0 0.0
        %4834 = vmatpush1.xpose.msra.mxu0 %v4769
        %4835 = vmatprep.mubr.f32.mxu0 0.0
        %4836 = vmatmul.mubr.f32.gmra.mrb[0].mxu0 %v4673
        %v4837 = vpop.f32.mrb[0].mxu0
        %v4838 = vadd.f32 0.0, %v4837
        %v4839 = vpop.f32.mrb[0].mxu0
        %v4840 = vadd.f32 0.0, %v4839
        %4841 = vdwg.mxu0
        %v4842 = vadd.f32 %v3318, %v4838
        %v4843 = vadd.f32 %v3320, %v4840
        %v4845 = vsel %vm277, %v238, 0
        %v4848 = vsel %vm277, %v239, 0
        %v4851 = vsel %vm277, %v240, 0
        %v4854 = vsel %vm277, %v241, 0
        %4856 = vmatprep.subr.mxu0 %v292
        %4857 = vmatpush1.msra.mxu0 %v290
        %4858 = vmatprep.subr.mxu0 0.0
        %4859 = vmatpush1.msra.mxu0 0.0
        %4860 = vmatprep.subr.mxu0 0.0
        %4861 = vmatpush1.msra.mxu0 0.0
        %4862 = vmatprep.subr.mxu0 0.0
        %4863 = vmatpush1.msra.mxu0 0.0
        %4864 = vmatprep.subr.mxu0 0.0
        %4865 = vmatpush1.msra.mxu0 0.0
        %4866 = vmatprep.subr.mxu0 0.0
        %4867 = vmatpush1.msra.mxu0 0.0
        %4868 = vmatprep.subr.mxu0 0.0
        %4869 = vmatpush1.msra.mxu0 0.0
        %4870 = vmatprep.subr.mxu0 0.0
        %4871 = vmatpush1.msra.mxu0 0.0
        %4872 = vmatprep.subr.mxu0 0.0
        %4873 = vmatpush1.msra.mxu0 0.0
        %4874 = vmatprep.subr.mxu0 0.0
        %4875 = vmatpush1.msra.mxu0 0.0
        %4876 = vmatprep.subr.mxu0 0.0
        %4877 = vmatpush1.msra.mxu0 0.0
        %4878 = vmatprep.subr.mxu0 0.0
        %4879 = vmatpush1.msra.mxu0 0.0
        %4880 = vmatprep.subr.mxu0 0.0
        %4881 = vmatpush1.msra.mxu0 0.0
        %4882 = vmatprep.subr.mxu0 0.0
        %4883 = vmatpush1.msra.mxu0 0.0
        %4884 = vmatprep.subr.mxu0 0.0
        %4885 = vmatpush1.msra.mxu0 0.0
        %4886 = vmatprep.subr.mxu0 0.0
        %4887 = vmatpush1.msra.mxu0 0.0
        %4888 = vmatprep.subr.mxu0 0.0
        %4889 = vmatpush1.msra.mxu0 0.0
        %4890 = vmatprep.subr.mxu0 0.0
        %4891 = vmatpush1.msra.mxu0 0.0
        %4892 = vmatprep.subr.mxu0 0.0
        %4893 = vmatpush1.msra.mxu0 0.0
        %4894 = vmatprep.subr.mxu0 0.0
        %4895 = vmatpush1.msra.mxu0 0.0
        %4896 = vmatprep.subr.mxu0 0.0
        %4897 = vmatpush1.msra.mxu0 0.0
        %4898 = vmatprep.subr.mxu0 0.0
        %4899 = vmatpush1.msra.mxu0 0.0
        %4900 = vmatprep.subr.mxu0 0.0
        %4901 = vmatpush1.msra.mxu0 0.0
        %4902 = vmatprep.subr.mxu0 0.0
        %4903 = vmatpush1.msra.mxu0 0.0
        %4904 = vmatprep.subr.mxu0 0.0
        %4905 = vmatpush1.msra.mxu0 0.0
        %4906 = vmatprep.subr.mxu0 0.0
        %4907 = vmatpush1.msra.mxu0 0.0
        %4908 = vmatprep.subr.mxu0 0.0
        %4909 = vmatpush1.msra.mxu0 0.0
        %4910 = vmatprep.subr.mxu0 0.0
        %4911 = vmatpush1.msra.mxu0 0.0
        %4912 = vmatprep.subr.mxu0 0.0
        %4913 = vmatpush1.msra.mxu0 0.0
        %4914 = vmatprep.subr.mxu0 0.0
        %4915 = vmatpush1.msra.mxu0 0.0
        %4916 = vmatprep.subr.mxu0 0.0
        %4917 = vmatpush1.msra.mxu0 0.0
        %4918 = vmatprep.subr.mxu0 0.0
        %4919 = vmatpush1.msra.mxu0 0.0
        %4920 = vmatprep.mubr.f32.mxu0 0.0
        %4921 = vmatmul.mubr.f32.gmra.mrb[0].mxu0 %v4845
        %v4922 = vpop.f32.mrb[0].mxu0
        %v4923 = vadd.f32 0.0, %v4922
        %v4924 = vpop.f32.mrb[0].mxu0
        %v4925 = vadd.f32 0.0, %v4924
        %4926 = vmatprep.mubr.f32.mxu0 0.0
        %4927 = vmatmul.mubr.f32.gmra.mrb[0].mxu0 %v4848
        %v4928 = vpop.f32.mrb[0].mxu0
        %v4929 = vadd.f32 0.0, %v4928
        %v4930 = vpop.f32.mrb[0].mxu0
        %v4931 = vadd.f32 0.0, %v4930
        %4932 = vmatprep.mubr.f32.mxu0 0.0
        %4933 = vmatmul.mubr.f32.gmra.mrb[0].mxu0 %v4851
        %v4934 = vpop.f32.mrb[0].mxu0
        %v4935 = vadd.f32 0.0, %v4934
        %v4936 = vpop.f32.mrb[0].mxu0
        %v4937 = vadd.f32 0.0, %v4936
        %4938 = vmatprep.mubr.f32.mxu0 0.0
        %4939 = vmatmul.mubr.f32.gmra.mrb[0].mxu0 %v4854
        %v4940 = vpop.f32.mrb[0].mxu0
        %v4941 = vadd.f32 0.0, %v4940
        %v4942 = vpop.f32.mrb[0].mxu0
        %v4943 = vadd.f32 0.0, %v4942
        %4944 = vdwg.mxu0
        %v4946 = vsel %vm277, %v254, 0
        %v4949 = vsel %vm277, %v255, 0
        %v4952 = vsel %vm277, %v256, 0
        %v4955 = vsel %vm277, %v257, 0
        %4957 = vmatprep.subr.mxu0 %v292
        %4958 = vmatpush1.msra.mxu0 %v290
        %4959 = vmatprep.subr.mxu0 0.0
        %4960 = vmatpush1.msra.mxu0 0.0
        %4961 = vmatprep.subr.mxu0 0.0
        %4962 = vmatpush1.msra.mxu0 0.0
        %4963 = vmatprep.subr.mxu0 0.0
        %4964 = vmatpush1.msra.mxu0 0.0
        %4965 = vmatprep.subr.mxu0 0.0
        %4966 = vmatpush1.msra.mxu0 0.0
        %4967 = vmatprep.subr.mxu0 0.0
        %4968 = vmatpush1.msra.mxu0 0.0
        %4969 = vmatprep.subr.mxu0 0.0
        %4970 = vmatpush1.msra.mxu0 0.0
        %4971 = vmatprep.subr.mxu0 0.0
        %4972 = vmatpush1.msra.mxu0 0.0
        %4973 = vmatprep.subr.mxu0 0.0
        %4974 = vmatpush1.msra.mxu0 0.0
        %4975 = vmatprep.subr.mxu0 0.0
        %4976 = vmatpush1.msra.mxu0 0.0
        %4977 = vmatprep.subr.mxu0 0.0
        %4978 = vmatpush1.msra.mxu0 0.0
        %4979 = vmatprep.subr.mxu0 0.0
        %4980 = vmatpush1.msra.mxu0 0.0
        %4981 = vmatprep.subr.mxu0 0.0
        %4982 = vmatpush1.msra.mxu0 0.0
        %4983 = vmatprep.subr.mxu0 0.0
        %4984 = vmatpush1.msra.mxu0 0.0
        %4985 = vmatprep.subr.mxu0 0.0
        %4986 = vmatpush1.msra.mxu0 0.0
        %4987 = vmatprep.subr.mxu0 0.0
        %4988 = vmatpush1.msra.mxu0 0.0
        %4989 = vmatprep.subr.mxu0 0.0
        %4990 = vmatpush1.msra.mxu0 0.0
        %4991 = vmatprep.subr.mxu0 0.0
        %4992 = vmatpush1.msra.mxu0 0.0
        %4993 = vmatprep.subr.mxu0 0.0
        %4994 = vmatpush1.msra.mxu0 0.0
        %4995 = vmatprep.subr.mxu0 0.0
        %4996 = vmatpush1.msra.mxu0 0.0
        %4997 = vmatprep.subr.mxu0 0.0
        %4998 = vmatpush1.msra.mxu0 0.0
        %4999 = vmatprep.subr.mxu0 0.0
        %5000 = vmatpush1.msra.mxu0 0.0
        %5001 = vmatprep.subr.mxu0 0.0
        %5002 = vmatpush1.msra.mxu0 0.0
        %5003 = vmatprep.subr.mxu0 0.0
        %5004 = vmatpush1.msra.mxu0 0.0
        %5005 = vmatprep.subr.mxu0 0.0
        %5006 = vmatpush1.msra.mxu0 0.0
        %5007 = vmatprep.subr.mxu0 0.0
        %5008 = vmatpush1.msra.mxu0 0.0
        %5009 = vmatprep.subr.mxu0 0.0
        %5010 = vmatpush1.msra.mxu0 0.0
        %5011 = vmatprep.subr.mxu0 0.0
        %5012 = vmatpush1.msra.mxu0 0.0
        %5013 = vmatprep.subr.mxu0 0.0
        %5014 = vmatpush1.msra.mxu0 0.0
        %5015 = vmatprep.subr.mxu0 0.0
        %5016 = vmatpush1.msra.mxu0 0.0
        %5017 = vmatprep.subr.mxu0 0.0
        %5018 = vmatpush1.msra.mxu0 0.0
        %5019 = vmatprep.subr.mxu0 0.0
        %5020 = vmatpush1.msra.mxu0 0.0
        %5021 = vmatprep.mubr.f32.mxu0 0.0
        %5022 = vmatmul.mubr.f32.gmra.mrb[0].mxu0 %v4946
        %v5023 = vpop.f32.mrb[0].mxu0
        %v5024 = vadd.f32 0.0, %v5023
        %v5025 = vpop.f32.mrb[0].mxu0
        %v5026 = vadd.f32 0.0, %v5025
        %5027 = vmatprep.mubr.f32.mxu0 0.0
        %5028 = vmatmul.mubr.f32.gmra.mrb[0].mxu0 %v4949
        %v5029 = vpop.f32.mrb[0].mxu0
        %v5030 = vadd.f32 0.0, %v5029
        %v5031 = vpop.f32.mrb[0].mxu0
        %v5032 = vadd.f32 0.0, %v5031
        %5033 = vmatprep.mubr.f32.mxu0 0.0
        %5034 = vmatmul.mubr.f32.gmra.mrb[0].mxu0 %v4952
        %v5035 = vpop.f32.mrb[0].mxu0
        %v5036 = vadd.f32 0.0, %v5035
        %v5037 = vpop.f32.mrb[0].mxu0
        %v5038 = vadd.f32 0.0, %v5037
        %5039 = vmatprep.mubr.f32.mxu0 0.0
        %5040 = vmatmul.mubr.f32.gmra.mrb[0].mxu0 %v4955
        %v5041 = vpop.f32.mrb[0].mxu0
        %v5042 = vadd.f32 0.0, %v5041
        %v5043 = vpop.f32.mrb[0].mxu0
        %v5044 = vadd.f32 0.0, %v5043
        %5045 = vdwg.mxu0
        %v5047 = vsel %vm277, %v270, 0
        %v5050 = vsel %vm277, %v271, 0
        %v5053 = vsel %vm277, %v272, 0
        %v5056 = vsel %vm277, %v273, 0
        %5058 = vmatprep.subr.mxu0 %v292
        %5059 = vmatpush1.msra.mxu0 %v290
        %5060 = vmatprep.subr.mxu0 0.0
        %5061 = vmatpush1.msra.mxu0 0.0
        %5062 = vmatprep.subr.mxu0 0.0
        %5063 = vmatpush1.msra.mxu0 0.0
        %5064 = vmatprep.subr.mxu0 0.0
        %5065 = vmatpush1.msra.mxu0 0.0
        %5066 = vmatprep.subr.mxu0 0.0
        %5067 = vmatpush1.msra.mxu0 0.0
        %5068 = vmatprep.subr.mxu0 0.0
        %5069 = vmatpush1.msra.mxu0 0.0
        %5070 = vmatprep.subr.mxu0 0.0
        %5071 = vmatpush1.msra.mxu0 0.0
        %5072 = vmatprep.subr.mxu0 0.0
        %5073 = vmatpush1.msra.mxu0 0.0
        %5074 = vmatprep.subr.mxu0 0.0
        %5075 = vmatpush1.msra.mxu0 0.0
        %5076 = vmatprep.subr.mxu0 0.0
        %5077 = vmatpush1.msra.mxu0 0.0
        %5078 = vmatprep.subr.mxu0 0.0
        %5079 = vmatpush1.msra.mxu0 0.0
        %5080 = vmatprep.subr.mxu0 0.0
        %5081 = vmatpush1.msra.mxu0 0.0
        %5082 = vmatprep.subr.mxu0 0.0
        %5083 = vmatpush1.msra.mxu0 0.0
        %5084 = vmatprep.subr.mxu0 0.0
        %5085 = vmatpush1.msra.mxu0 0.0
        %5086 = vmatprep.subr.mxu0 0.0
        %5087 = vmatpush1.msra.mxu0 0.0
        %5088 = vmatprep.subr.mxu0 0.0
        %5089 = vmatpush1.msra.mxu0 0.0
        %5090 = vmatprep.subr.mxu0 0.0
        %5091 = vmatpush1.msra.mxu0 0.0
        %5092 = vmatprep.subr.mxu0 0.0
        %5093 = vmatpush1.msra.mxu0 0.0
        %5094 = vmatprep.subr.mxu0 0.0
        %5095 = vmatpush1.msra.mxu0 0.0
        %5096 = vmatprep.subr.mxu0 0.0
        %5097 = vmatpush1.msra.mxu0 0.0
        %5098 = vmatprep.subr.mxu0 0.0
        %5099 = vmatpush1.msra.mxu0 0.0
        %5100 = vmatprep.subr.mxu0 0.0
        %5101 = vmatpush1.msra.mxu0 0.0
        %5102 = vmatprep.subr.mxu0 0.0
        %5103 = vmatpush1.msra.mxu0 0.0
        %5104 = vmatprep.subr.mxu0 0.0
        %5105 = vmatpush1.msra.mxu0 0.0
        %5106 = vmatprep.subr.mxu0 0.0
        %5107 = vmatpush1.msra.mxu0 0.0
        %5108 = vmatprep.subr.mxu0 0.0
        %5109 = vmatpush1.msra.mxu0 0.0
        %5110 = vmatprep.subr.mxu0 0.0
        %5111 = vmatpush1.msra.mxu0 0.0
        %5112 = vmatprep.subr.mxu0 0.0
        %5113 = vmatpush1.msra.mxu0 0.0
        %5114 = vmatprep.subr.mxu0 0.0
        %5115 = vmatpush1.msra.mxu0 0.0
        %5116 = vmatprep.subr.mxu0 0.0
        %5117 = vmatpush1.msra.mxu0 0.0
        %5118 = vmatprep.subr.mxu0 0.0
        %5119 = vmatpush1.msra.mxu0 0.0
        %5120 = vmatprep.subr.mxu0 0.0
        %5121 = vmatpush1.msra.mxu0 0.0
        %5122 = vmatprep.mubr.f32.mxu0 0.0
        %5123 = vmatmul.mubr.f32.gmra.mrb[0].mxu0 %v5047
        %v5124 = vpop.f32.mrb[0].mxu0
        %v5125 = vadd.f32 0.0, %v5124
        %v5126 = vpop.f32.mrb[0].mxu0
        %v5127 = vadd.f32 0.0, %v5126
        %5128 = vmatprep.mubr.f32.mxu0 0.0
        %5129 = vmatmul.mubr.f32.gmra.mrb[0].mxu0 %v5050
        %v5130 = vpop.f32.mrb[0].mxu0
        %v5131 = vadd.f32 0.0, %v5130
        %v5132 = vpop.f32.mrb[0].mxu0
        %v5133 = vadd.f32 0.0, %v5132
        %5134 = vmatprep.mubr.f32.mxu0 0.0
        %5135 = vmatmul.mubr.f32.gmra.mrb[0].mxu0 %v5053
        %v5136 = vpop.f32.mrb[0].mxu0
        %v5137 = vadd.f32 0.0, %v5136
        %v5138 = vpop.f32.mrb[0].mxu0
        %v5139 = vadd.f32 0.0, %v5138
        %5140 = vmatprep.mubr.f32.mxu0 0.0
        %5141 = vmatmul.mubr.f32.gmra.mrb[0].mxu0 %v5056
        %v5142 = vpop.f32.mrb[0].mxu0
        %v5143 = vadd.f32 0.0, %v5142
        %v5144 = vpop.f32.mrb[0].mxu0
        %v5145 = vadd.f32 0.0, %v5144
        %5146 = vdwg.mxu0
        %5147 = vxpose.xlu0.b32.start [1/16] %v4923, 128
        %5148 = vxpose.xlu0.b32.cont [2/16] %v4929, 128
        %5149 = vxpose.xlu0.b32.cont [3/16] %v4935, 128
        %5150 = vxpose.xlu0.b32.cont [4/16] %v4941, 128
        %5151 = vxpose.xlu0.b32.cont [5/16] 0.0, 128
        %5152 = vxpose.xlu0.b32.cont [6/16] 0.0, 128
        %5153 = vxpose.xlu0.b32.cont [7/16] 0.0, 128
        %5154 = vxpose.xlu0.b32.cont [8/16] 0.0, 128
        %5155 = vxpose.xlu0.b32.cont [9/16] 0.0, 128
        %5156 = vxpose.xlu0.b32.cont [10/16] 0.0, 128
        %5157 = vxpose.xlu0.b32.cont [11/16] 0.0, 128
        %5158 = vxpose.xlu0.b32.cont [12/16] 0.0, 128
        %5159 = vxpose.xlu0.b32.cont [13/16] 0.0, 128
        %5160 = vxpose.xlu0.b32.cont [14/16] 0.0, 128
        %5161 = vxpose.xlu0.b32.cont [15/16] 0.0, 128
        %5162 = vxpose.xlu0.b32.end [16/16] 0.0, 128
        %v5163 = vpop.trf.xlu0
        %v5164 = vpop.trf.xlu0
        %v5165 = vpop.trf.xlu0
        %v5166 = vpop.trf.xlu0
        %v5167 = vpop.trf.xlu0
        %v5168 = vpop.trf.xlu0
        %v5169 = vpop.trf.xlu0
        %v5170 = vpop.trf.xlu0
        %v5171 = vpop.trf.xlu0
        %v5172 = vpop.trf.xlu0
        %v5173 = vpop.trf.xlu0
        %v5174 = vpop.trf.xlu0
        %v5175 = vpop.trf.xlu0
        %v5176 = vpop.trf.xlu0
        %v5177 = vpop.trf.xlu0
        %v5178 = vpop.trf.xlu0
        %5179 = vxpose.xlu0.b32.start [1/16] %v4925, 128
        %5180 = vxpose.xlu0.b32.cont [2/16] %v4931, 128
        %5181 = vxpose.xlu0.b32.cont [3/16] %v4937, 128
        %5182 = vxpose.xlu0.b32.cont [4/16] %v4943, 128
        %5183 = vxpose.xlu0.b32.cont [5/16] 0.0, 128
        %5184 = vxpose.xlu0.b32.cont [6/16] 0.0, 128
        %5185 = vxpose.xlu0.b32.cont [7/16] 0.0, 128
        %5186 = vxpose.xlu0.b32.cont [8/16] 0.0, 128
        %5187 = vxpose.xlu0.b32.cont [9/16] 0.0, 128
        %5188 = vxpose.xlu0.b32.cont [10/16] 0.0, 128
        %5189 = vxpose.xlu0.b32.cont [11/16] 0.0, 128
        %5190 = vxpose.xlu0.b32.cont [12/16] 0.0, 128
        %5191 = vxpose.xlu0.b32.cont [13/16] 0.0, 128
        %5192 = vxpose.xlu0.b32.cont [14/16] 0.0, 128
        %5193 = vxpose.xlu0.b32.cont [15/16] 0.0, 128
        %5194 = vxpose.xlu0.b32.end [16/16] 0.0, 128
        %v5195 = vpop.trf.xlu0
        %v5196 = vpop.trf.xlu0
        %v5197 = vpop.trf.xlu0
        %v5198 = vpop.trf.xlu0
        %v5199 = vpop.trf.xlu0
        %v5200 = vpop.trf.xlu0
        %v5201 = vpop.trf.xlu0
        %v5202 = vpop.trf.xlu0
        %v5203 = vpop.trf.xlu0
        %v5204 = vpop.trf.xlu0
        %v5205 = vpop.trf.xlu0
        %v5206 = vpop.trf.xlu0
        %v5207 = vpop.trf.xlu0
        %v5208 = vpop.trf.xlu0
        %v5209 = vpop.trf.xlu0
        %v5210 = vpop.trf.xlu0
        %v5211 = vpack.c.bf16 %v5164, %v5163
        %v5212 = vpack.c.bf16 %v5166, %v5165
        %v5213 = vpack.c.bf16 %v5168, %v5167
        %v5214 = vpack.c.bf16 %v5170, %v5169
        %v5215 = vpack.c.bf16 %v5172, %v5171
        %v5216 = vpack.c.bf16 %v5174, %v5173
        %v5217 = vpack.c.bf16 %v5176, %v5175
        %v5218 = vpack.c.bf16 %v5178, %v5177
        %v5219 = vpack.c.bf16 %v5196, %v5195
        %v5220 = vpack.c.bf16 %v5198, %v5197
        %v5221 = vpack.c.bf16 %v5200, %v5199
        %v5222 = vpack.c.bf16 %v5202, %v5201
        %v5223 = vpack.c.bf16 %v5204, %v5203
        %v5224 = vpack.c.bf16 %v5206, %v5205
        %v5225 = vpack.c.bf16 %v5208, %v5207
        %v5226 = vpack.c.bf16 %v5210, %v5209
        %5227 = vxpose.xlu0.b32.start [1/16] %v5125, 128
        %5228 = vxpose.xlu0.b32.cont [2/16] %v5131, 128
        %5229 = vxpose.xlu0.b32.cont [3/16] %v5137, 128
        %5230 = vxpose.xlu0.b32.cont [4/16] %v5143, 128
        %5231 = vxpose.xlu0.b32.cont [5/16] 0.0, 128
        %5232 = vxpose.xlu0.b32.cont [6/16] 0.0, 128
        %5233 = vxpose.xlu0.b32.cont [7/16] 0.0, 128
        %5234 = vxpose.xlu0.b32.cont [8/16] 0.0, 128
        %5235 = vxpose.xlu0.b32.cont [9/16] 0.0, 128
        %5236 = vxpose.xlu0.b32.cont [10/16] 0.0, 128
        %5237 = vxpose.xlu0.b32.cont [11/16] 0.0, 128
        %5238 = vxpose.xlu0.b32.cont [12/16] 0.0, 128
        %5239 = vxpose.xlu0.b32.cont [13/16] 0.0, 128
        %5240 = vxpose.xlu0.b32.cont [14/16] 0.0, 128
        %5241 = vxpose.xlu0.b32.cont [15/16] 0.0, 128
        %5242 = vxpose.xlu0.b32.end [16/16] 0.0, 128
        %v5243 = vpop.trf.xlu0
        %v5244 = vpop.trf.xlu0
        %v5245 = vpop.trf.xlu0
        %v5246 = vpop.trf.xlu0
        %v5247 = vpop.trf.xlu0
        %v5248 = vpop.trf.xlu0
        %v5249 = vpop.trf.xlu0
        %v5250 = vpop.trf.xlu0
        %v5251 = vpop.trf.xlu0
        %v5252 = vpop.trf.xlu0
        %v5253 = vpop.trf.xlu0
        %v5254 = vpop.trf.xlu0
        %v5255 = vpop.trf.xlu0
        %v5256 = vpop.trf.xlu0
        %v5257 = vpop.trf.xlu0
        %v5258 = vpop.trf.xlu0
        %5259 = vxpose.xlu0.b32.start [1/16] %v5127, 128
        %5260 = vxpose.xlu0.b32.cont [2/16] %v5133, 128
        %5261 = vxpose.xlu0.b32.cont [3/16] %v5139, 128
        %5262 = vxpose.xlu0.b32.cont [4/16] %v5145, 128
        %5263 = vxpose.xlu0.b32.cont [5/16] 0.0, 128
        %5264 = vxpose.xlu0.b32.cont [6/16] 0.0, 128
        %5265 = vxpose.xlu0.b32.cont [7/16] 0.0, 128
        %5266 = vxpose.xlu0.b32.cont [8/16] 0.0, 128
        %5267 = vxpose.xlu0.b32.cont [9/16] 0.0, 128
        %5268 = vxpose.xlu0.b32.cont [10/16] 0.0, 128
        %5269 = vxpose.xlu0.b32.cont [11/16] 0.0, 128
        %5270 = vxpose.xlu0.b32.cont [12/16] 0.0, 128
        %5271 = vxpose.xlu0.b32.cont [13/16] 0.0, 128
        %5272 = vxpose.xlu0.b32.cont [14/16] 0.0, 128
        %5273 = vxpose.xlu0.b32.cont [15/16] 0.0, 128
        %5274 = vxpose.xlu0.b32.end [16/16] 0.0, 128
        %v5275 = vpop.trf.xlu0
        %v5276 = vpop.trf.xlu0
        %v5277 = vpop.trf.xlu0
        %v5278 = vpop.trf.xlu0
        %v5279 = vpop.trf.xlu0
        %v5280 = vpop.trf.xlu0
        %v5281 = vpop.trf.xlu0
        %v5282 = vpop.trf.xlu0
        %v5283 = vpop.trf.xlu0
        %v5284 = vpop.trf.xlu0
        %v5285 = vpop.trf.xlu0
        %v5286 = vpop.trf.xlu0
        %v5287 = vpop.trf.xlu0
        %v5288 = vpop.trf.xlu0
        %v5289 = vpop.trf.xlu0
        %v5290 = vpop.trf.xlu0
        %v5291 = vpack.c.bf16 %v5244, %v5243
        %v5292 = vpack.c.bf16 %v5246, %v5245
        %v5293 = vpack.c.bf16 %v5248, %v5247
        %v5294 = vpack.c.bf16 %v5250, %v5249
        %v5295 = vpack.c.bf16 %v5252, %v5251
        %v5296 = vpack.c.bf16 %v5254, %v5253
        %v5297 = vpack.c.bf16 %v5256, %v5255
        %v5298 = vpack.c.bf16 %v5258, %v5257
        %v5299 = vpack.c.bf16 %v5276, %v5275
        %v5300 = vpack.c.bf16 %v5278, %v5277
        %v5301 = vpack.c.bf16 %v5280, %v5279
        %v5302 = vpack.c.bf16 %v5282, %v5281
        %v5303 = vpack.c.bf16 %v5284, %v5283
        %v5304 = vpack.c.bf16 %v5286, %v5285
        %v5305 = vpack.c.bf16 %v5288, %v5287
        %v5306 = vpack.c.bf16 %v5290, %v5289
        %v5307 = vpack.c.bf16 %v5030, %v5024
        %v5308 = vpack.c.bf16 %v5032, %v5026
        %v5309 = vpack.c.bf16 %v5042, %v5036
        %v5310 = vpack.c.bf16 %v5044, %v5038
        %v5312 = vsel %vm749, %v5211, 0
        %v5315 = vsel %vm749, %v5212, 0
        %v5318 = vsel %vm749, %v5213, 0
        %v5321 = vsel %vm749, %v5214, 0
        %v5324 = vsel %vm749, %v5215, 0
        %v5327 = vsel %vm749, %v5216, 0
        %v5330 = vsel %vm749, %v5217, 0
        %v5333 = vsel %vm749, %v5218, 0
        %v5336 = vsel %vm749, %v5219, 0
        %v5339 = vsel %vm749, %v5220, 0
        %v5342 = vsel %vm749, %v5221, 0
        %v5345 = vsel %vm749, %v5222, 0
        %v5348 = vsel %vm749, %v5223, 0
        %v5351 = vsel %vm749, %v5224, 0
        %v5354 = vsel %vm749, %v5225, 0
        %v5357 = vsel %vm749, %v5226, 0
        %5359 = vmatprep.subr.bf16.mxu0 %v5308
        %5360 = vmatpush1.bf16.msra.mxu0 %v5307
        %5361 = vmatprep.subr.bf16.mxu0 %v5310
        %5362 = vmatpush1.bf16.msra.mxu0 %v5309
        %5363 = vmatprep.subr.bf16.mxu0 0
        %5364 = vmatpush1.bf16.msra.mxu0 0
        %5365 = vmatprep.subr.bf16.mxu0 0
        %5366 = vmatpush1.bf16.msra.mxu0 0
        %5367 = vmatprep.subr.bf16.mxu0 0
        %5368 = vmatpush1.bf16.msra.mxu0 0
        %5369 = vmatprep.subr.bf16.mxu0 0
        %5370 = vmatpush1.bf16.msra.mxu0 0
        %5371 = vmatprep.subr.bf16.mxu0 0
        %5372 = vmatpush1.bf16.msra.mxu0 0
        %5373 = vmatprep.subr.bf16.mxu0 0
        %5374 = vmatpush1.bf16.msra.mxu0 0
        %5375 = vmatprep.subr.bf16.mxu0 0
        %5376 = vmatpush1.bf16.msra.mxu0 0
        %5377 = vmatprep.subr.bf16.mxu0 0
        %5378 = vmatpush1.bf16.msra.mxu0 0
        %5379 = vmatprep.subr.bf16.mxu0 0
        %5380 = vmatpush1.bf16.msra.mxu0 0
        %5381 = vmatprep.subr.bf16.mxu0 0
        %5382 = vmatpush1.bf16.msra.mxu0 0
        %5383 = vmatprep.subr.bf16.mxu0 0
        %5384 = vmatpush1.bf16.msra.mxu0 0
        %5385 = vmatprep.subr.bf16.mxu0 0
        %5386 = vmatpush1.bf16.msra.mxu0 0
        %5387 = vmatprep.subr.bf16.mxu0 0
        %5388 = vmatpush1.bf16.msra.mxu0 0
        %5389 = vmatprep.subr.bf16.mxu0 0
        %5390 = vmatpush1.bf16.msra.mxu0 0
        %5391 = vmatprep.mubr.bf16.mxu0 0
        %5392 = vmatmul.mubr.bf16.gmra.mrb[0].mxu0 %v5312
        %v5393 = vpop.f32.mrb[0].mxu0
        %v5394 = vadd.f32 0.0, %v5393
        %v5395 = vpop.f32.mrb[0].mxu0
        %v5396 = vadd.f32 0.0, %v5395
        %v5397 = vpop.f32.mrb[0].mxu0
        %v5398 = vadd.f32 0.0, %v5397
        %v5399 = vpop.f32.mrb[0].mxu0
        %v5400 = vadd.f32 0.0, %v5399
        %5401 = vmatprep.mubr.bf16.mxu0 0
        %5402 = vmatmul.mubr.bf16.gmra.mrb[0].mxu0 %v5315
        %v5403 = vpop.f32.mrb[0].mxu0
        %v5404 = vadd.f32 0.0, %v5403
        %v5405 = vpop.f32.mrb[0].mxu0
        %v5406 = vadd.f32 0.0, %v5405
        %v5407 = vpop.f32.mrb[0].mxu0
        %v5408 = vadd.f32 0.0, %v5407
        %v5409 = vpop.f32.mrb[0].mxu0
        %v5410 = vadd.f32 0.0, %v5409
        %5411 = vmatprep.mubr.bf16.mxu0 0
        %5412 = vmatmul.mubr.bf16.gmra.mrb[0].mxu0 %v5318
        %v5413 = vpop.f32.mrb[0].mxu0
        %v5414 = vadd.f32 0.0, %v5413
        %v5415 = vpop.f32.mrb[0].mxu0
        %v5416 = vadd.f32 0.0, %v5415
        %v5417 = vpop.f32.mrb[0].mxu0
        %v5418 = vadd.f32 0.0, %v5417
        %v5419 = vpop.f32.mrb[0].mxu0
        %v5420 = vadd.f32 0.0, %v5419
        %5421 = vmatprep.mubr.bf16.mxu0 0
        %5422 = vmatmul.mubr.bf16.gmra.mrb[0].mxu0 %v5321
        %v5423 = vpop.f32.mrb[0].mxu0
        %v5424 = vadd.f32 0.0, %v5423
        %v5425 = vpop.f32.mrb[0].mxu0
        %v5426 = vadd.f32 0.0, %v5425
        %v5427 = vpop.f32.mrb[0].mxu0
        %v5428 = vadd.f32 0.0, %v5427
        %v5429 = vpop.f32.mrb[0].mxu0
        %v5430 = vadd.f32 0.0, %v5429
        %5431 = vmatprep.mubr.bf16.mxu0 0
        %5432 = vmatmul.mubr.bf16.gmra.mrb[0].mxu0 %v5324
        %v5433 = vpop.f32.mrb[0].mxu0
        %v5434 = vadd.f32 0.0, %v5433
        %v5435 = vpop.f32.mrb[0].mxu0
        %v5436 = vadd.f32 0.0, %v5435
        %v5437 = vpop.f32.mrb[0].mxu0
        %v5438 = vadd.f32 0.0, %v5437
        %v5439 = vpop.f32.mrb[0].mxu0
        %v5440 = vadd.f32 0.0, %v5439
        %5441 = vmatprep.mubr.bf16.mxu0 0
        %5442 = vmatmul.mubr.bf16.gmra.mrb[0].mxu0 %v5327
        %v5443 = vpop.f32.mrb[0].mxu0
        %v5444 = vadd.f32 0.0, %v5443
        %v5445 = vpop.f32.mrb[0].mxu0
        %v5446 = vadd.f32 0.0, %v5445
        %v5447 = vpop.f32.mrb[0].mxu0
        %v5448 = vadd.f32 0.0, %v5447
        %v5449 = vpop.f32.mrb[0].mxu0
        %v5450 = vadd.f32 0.0, %v5449
        %5451 = vmatprep.mubr.bf16.mxu0 0
        %5452 = vmatmul.mubr.bf16.gmra.mrb[0].mxu0 %v5330
        %v5453 = vpop.f32.mrb[0].mxu0
        %v5454 = vadd.f32 0.0, %v5453
        %v5455 = vpop.f32.mrb[0].mxu0
        %v5456 = vadd.f32 0.0, %v5455
        %v5457 = vpop.f32.mrb[0].mxu0
        %v5458 = vadd.f32 0.0, %v5457
        %v5459 = vpop.f32.mrb[0].mxu0
        %v5460 = vadd.f32 0.0, %v5459
        %5461 = vmatprep.mubr.bf16.mxu0 0
        %5462 = vmatmul.mubr.bf16.gmra.mrb[0].mxu0 %v5333
        %v5463 = vpop.f32.mrb[0].mxu0
        %v5464 = vadd.f32 0.0, %v5463
        %v5465 = vpop.f32.mrb[0].mxu0
        %v5466 = vadd.f32 0.0, %v5465
        %v5467 = vpop.f32.mrb[0].mxu0
        %v5468 = vadd.f32 0.0, %v5467
        %v5469 = vpop.f32.mrb[0].mxu0
        %v5470 = vadd.f32 0.0, %v5469
        %5471 = vmatprep.mubr.bf16.mxu0 0
        %5472 = vmatmul.mubr.bf16.gmra.mrb[0].mxu0 %v5336
        %v5473 = vpop.f32.mrb[0].mxu0
        %v5474 = vadd.f32 0.0, %v5473
        %v5475 = vpop.f32.mrb[0].mxu0
        %v5476 = vadd.f32 0.0, %v5475
        %v5477 = vpop.f32.mrb[0].mxu0
        %v5478 = vadd.f32 0.0, %v5477
        %v5479 = vpop.f32.mrb[0].mxu0
        %v5480 = vadd.f32 0.0, %v5479
        %5481 = vmatprep.mubr.bf16.mxu0 0
        %5482 = vmatmul.mubr.bf16.gmra.mrb[0].mxu0 %v5339
        %v5483 = vpop.f32.mrb[0].mxu0
        %v5484 = vadd.f32 0.0, %v5483
        %v5485 = vpop.f32.mrb[0].mxu0
        %v5486 = vadd.f32 0.0, %v5485
        %v5487 = vpop.f32.mrb[0].mxu0
        %v5488 = vadd.f32 0.0, %v5487
        %v5489 = vpop.f32.mrb[0].mxu0
        %v5490 = vadd.f32 0.0, %v5489
        %5491 = vmatprep.mubr.bf16.mxu0 0
        %5492 = vmatmul.mubr.bf16.gmra.mrb[0].mxu0 %v5342
        %v5493 = vpop.f32.mrb[0].mxu0
        %v5494 = vadd.f32 0.0, %v5493
        %v5495 = vpop.f32.mrb[0].mxu0
        %v5496 = vadd.f32 0.0, %v5495
        %v5497 = vpop.f32.mrb[0].mxu0
        %v5498 = vadd.f32 0.0, %v5497
        %v5499 = vpop.f32.mrb[0].mxu0
        %v5500 = vadd.f32 0.0, %v5499
        %5501 = vmatprep.mubr.bf16.mxu0 0
        %5502 = vmatmul.mubr.bf16.gmra.mrb[0].mxu0 %v5345
        %v5503 = vpop.f32.mrb[0].mxu0
        %v5504 = vadd.f32 0.0, %v5503
        %v5505 = vpop.f32.mrb[0].mxu0
        %v5506 = vadd.f32 0.0, %v5505
        %v5507 = vpop.f32.mrb[0].mxu0
        %v5508 = vadd.f32 0.0, %v5507
        %v5509 = vpop.f32.mrb[0].mxu0
        %v5510 = vadd.f32 0.0, %v5509
        %5511 = vmatprep.mubr.bf16.mxu0 0
        %5512 = vmatmul.mubr.bf16.gmra.mrb[0].mxu0 %v5348
        %v5513 = vpop.f32.mrb[0].mxu0
        %v5514 = vadd.f32 0.0, %v5513
        %v5515 = vpop.f32.mrb[0].mxu0
        %v5516 = vadd.f32 0.0, %v5515
        %v5517 = vpop.f32.mrb[0].mxu0
        %v5518 = vadd.f32 0.0, %v5517
        %v5519 = vpop.f32.mrb[0].mxu0
        %v5520 = vadd.f32 0.0, %v5519
        %5521 = vmatprep.mubr.bf16.mxu0 0
        %5522 = vmatmul.mubr.bf16.gmra.mrb[0].mxu0 %v5351
        %v5523 = vpop.f32.mrb[0].mxu0
        %v5524 = vadd.f32 0.0, %v5523
        %v5525 = vpop.f32.mrb[0].mxu0
        %v5526 = vadd.f32 0.0, %v5525
        %v5527 = vpop.f32.mrb[0].mxu0
        %v5528 = vadd.f32 0.0, %v5527
        %v5529 = vpop.f32.mrb[0].mxu0
        %v5530 = vadd.f32 0.0, %v5529
        %5531 = vmatprep.mubr.bf16.mxu0 0
        %5532 = vmatmul.mubr.bf16.gmra.mrb[0].mxu0 %v5354
        %v5533 = vpop.f32.mrb[0].mxu0
        %v5534 = vadd.f32 0.0, %v5533
        %v5535 = vpop.f32.mrb[0].mxu0
        %v5536 = vadd.f32 0.0, %v5535
        %v5537 = vpop.f32.mrb[0].mxu0
        %v5538 = vadd.f32 0.0, %v5537
        %v5539 = vpop.f32.mrb[0].mxu0
        %v5540 = vadd.f32 0.0, %v5539
        %5541 = vmatprep.mubr.bf16.mxu0 0
        %5542 = vmatmul.mubr.bf16.gmra.mrb[0].mxu0 %v5357
        %v5543 = vpop.f32.mrb[0].mxu0
        %v5544 = vadd.f32 0.0, %v5543
        %v5545 = vpop.f32.mrb[0].mxu0
        %v5546 = vadd.f32 0.0, %v5545
        %v5547 = vpop.f32.mrb[0].mxu0
        %v5548 = vadd.f32 0.0, %v5547
        %v5549 = vpop.f32.mrb[0].mxu0
        %v5550 = vadd.f32 0.0, %v5549
        %5551 = vdwg.mxu0
        %v5552 = vmax.f32 %v5394, %v5396
        %5553 = vmax.xlane.f32.xlu0 %v5552
        %v5554 = vpop.xlane.xlu0 %5553
        %v5555 = vmax.f32 %v5398, %v5400
        %5556 = vmax.xlane.f32.xlu0 %v5555
        %v5557 = vpop.xlane.xlu0 %5556
        %v5558 = vmax.f32 %v5404, %v5406
        %5559 = vmax.xlane.f32.xlu0 %v5558
        %v5560 = vpop.xlane.xlu0 %5559
        %v5561 = vmax.f32 %v5408, %v5410
        %5562 = vmax.xlane.f32.xlu0 %v5561
        %v5563 = vpop.xlane.xlu0 %5562
        %v5564 = vmax.f32 %v5414, %v5416
        %5565 = vmax.xlane.f32.xlu0 %v5564
        %v5566 = vpop.xlane.xlu0 %5565
        %v5567 = vmax.f32 %v5418, %v5420
        %5568 = vmax.xlane.f32.xlu0 %v5567
        %v5569 = vpop.xlane.xlu0 %5568
        %v5570 = vmax.f32 %v5424, %v5426
        %5571 = vmax.xlane.f32.xlu0 %v5570
        %v5572 = vpop.xlane.xlu0 %5571
        %v5573 = vmax.f32 %v5428, %v5430
        %5574 = vmax.xlane.f32.xlu0 %v5573
        %v5575 = vpop.xlane.xlu0 %5574
        %v5576 = vmax.f32 %v5434, %v5436
        %5577 = vmax.xlane.f32.xlu0 %v5576
        %v5578 = vpop.xlane.xlu0 %5577
        %v5579 = vmax.f32 %v5438, %v5440
        %5580 = vmax.xlane.f32.xlu0 %v5579
        %v5581 = vpop.xlane.xlu0 %5580
        %v5582 = vmax.f32 %v5444, %v5446
        %5583 = vmax.xlane.f32.xlu0 %v5582
        %v5584 = vpop.xlane.xlu0 %5583
        %v5585 = vmax.f32 %v5448, %v5450
        %5586 = vmax.xlane.f32.xlu0 %v5585
        %v5587 = vpop.xlane.xlu0 %5586
        %v5588 = vmax.f32 %v5454, %v5456
        %5589 = vmax.xlane.f32.xlu0 %v5588
        %v5590 = vpop.xlane.xlu0 %5589
        %v5591 = vmax.f32 %v5458, %v5460
        %5592 = vmax.xlane.f32.xlu0 %v5591
        %v5593 = vpop.xlane.xlu0 %5592
        %v5594 = vmax.f32 %v5464, %v5466
        %5595 = vmax.xlane.f32.xlu0 %v5594
        %v5596 = vpop.xlane.xlu0 %5595
        %v5597 = vmax.f32 %v5468, %v5470
        %5598 = vmax.xlane.f32.xlu0 %v5597
        %v5599 = vpop.xlane.xlu0 %5598
        %v5600 = vmax.f32 %v5474, %v5476
        %5601 = vmax.xlane.f32.xlu0 %v5600
        %v5602 = vpop.xlane.xlu0 %5601
        %v5603 = vmax.f32 %v5478, %v5480
        %5604 = vmax.xlane.f32.xlu0 %v5603
        %v5605 = vpop.xlane.xlu0 %5604
        %v5606 = vmax.f32 %v5484, %v5486
        %5607 = vmax.xlane.f32.xlu0 %v5606
        %v5608 = vpop.xlane.xlu0 %5607
        %v5609 = vmax.f32 %v5488, %v5490
        %5610 = vmax.xlane.f32.xlu0 %v5609
        %v5611 = vpop.xlane.xlu0 %5610
        %v5612 = vmax.f32 %v5494, %v5496
        %5613 = vmax.xlane.f32.xlu0 %v5612
        %v5614 = vpop.xlane.xlu0 %5613
        %v5615 = vmax.f32 %v5498, %v5500
        %5616 = vmax.xlane.f32.xlu0 %v5615
        %v5617 = vpop.xlane.xlu0 %5616
        %v5618 = vmax.f32 %v5504, %v5506
        %5619 = vmax.xlane.f32.xlu0 %v5618
        %v5620 = vpop.xlane.xlu0 %5619
        %v5621 = vmax.f32 %v5508, %v5510
        %5622 = vmax.xlane.f32.xlu0 %v5621
        %v5623 = vpop.xlane.xlu0 %5622
        %v5624 = vmax.f32 %v5514, %v5516
        %5625 = vmax.xlane.f32.xlu0 %v5624
        %v5626 = vpop.xlane.xlu0 %5625
        %v5627 = vmax.f32 %v5518, %v5520
        %5628 = vmax.xlane.f32.xlu0 %v5627
        %v5629 = vpop.xlane.xlu0 %5628
        %v5630 = vmax.f32 %v5524, %v5526
        %5631 = vmax.xlane.f32.xlu0 %v5630
        %v5632 = vpop.xlane.xlu0 %5631
        %v5633 = vmax.f32 %v5528, %v5530
        %5634 = vmax.xlane.f32.xlu0 %v5633
        %v5635 = vpop.xlane.xlu0 %5634
        %v5636 = vmax.f32 %v5534, %v5536
        %5637 = vmax.xlane.f32.xlu0 %v5636
        %v5638 = vpop.xlane.xlu0 %5637
        %v5639 = vmax.f32 %v5538, %v5540
        %5640 = vmax.xlane.f32.xlu0 %v5639
        %v5641 = vpop.xlane.xlu0 %5640
        %v5642 = vmax.f32 %v5544, %v5546
        %5643 = vmax.xlane.f32.xlu0 %v5642
        %v5644 = vpop.xlane.xlu0 %5643
        %v5645 = vmax.f32 %v5548, %v5550
        %5646 = vmax.xlane.f32.xlu0 %v5645
        %v5647 = vpop.xlane.xlu0 %5646
        %v5648 = vsub.f32 %v5394, %v5554
        %v5649 = vsub.f32 %v5396, %v5554
        %v5650 = vsub.f32 %v5398, %v5557
        %v5651 = vsub.f32 %v5400, %v5557
        %v5652 = vsub.f32 %v5404, %v5560
        %v5653 = vsub.f32 %v5406, %v5560
        %v5654 = vsub.f32 %v5408, %v5563
        %v5655 = vsub.f32 %v5410, %v5563
        %v5656 = vsub.f32 %v5414, %v5566
        %v5657 = vsub.f32 %v5416, %v5566
        %v5658 = vsub.f32 %v5418, %v5569
        %v5659 = vsub.f32 %v5420, %v5569
        %v5660 = vsub.f32 %v5424, %v5572
        %v5661 = vsub.f32 %v5426, %v5572
        %v5662 = vsub.f32 %v5428, %v5575
        %v5663 = vsub.f32 %v5430, %v5575
        %v5664 = vsub.f32 %v5434, %v5578
        %v5665 = vsub.f32 %v5436, %v5578
        %v5666 = vsub.f32 %v5438, %v5581
        %v5667 = vsub.f32 %v5440, %v5581
        %v5668 = vsub.f32 %v5444, %v5584
        %v5669 = vsub.f32 %v5446, %v5584
        %v5670 = vsub.f32 %v5448, %v5587
        %v5671 = vsub.f32 %v5450, %v5587
        %v5672 = vsub.f32 %v5454, %v5590
        %v5673 = vsub.f32 %v5456, %v5590
        %v5674 = vsub.f32 %v5458, %v5593
        %v5675 = vsub.f32 %v5460, %v5593
        %v5676 = vsub.f32 %v5464, %v5596
        %v5677 = vsub.f32 %v5466, %v5596
        %v5678 = vsub.f32 %v5468, %v5599
        %v5679 = vsub.f32 %v5470, %v5599
        %v5680 = vsub.f32 %v5474, %v5602
        %v5681 = vsub.f32 %v5476, %v5602
        %v5682 = vsub.f32 %v5478, %v5605
        %v5683 = vsub.f32 %v5480, %v5605
        %v5684 = vsub.f32 %v5484, %v5608
        %v5685 = vsub.f32 %v5486, %v5608
        %v5686 = vsub.f32 %v5488, %v5611
        %v5687 = vsub.f32 %v5490, %v5611
        %v5688 = vsub.f32 %v5494, %v5614
        %v5689 = vsub.f32 %v5496, %v5614
        %v5690 = vsub.f32 %v5498, %v5617
        %v5691 = vsub.f32 %v5500, %v5617
        %v5692 = vsub.f32 %v5504, %v5620
        %v5693 = vsub.f32 %v5506, %v5620
        %v5694 = vsub.f32 %v5508, %v5623
        %v5695 = vsub.f32 %v5510, %v5623
        %v5696 = vsub.f32 %v5514, %v5626
        %v5697 = vsub.f32 %v5516, %v5626
        %v5698 = vsub.f32 %v5518, %v5629
        %v5699 = vsub.f32 %v5520, %v5629
        %v5700 = vsub.f32 %v5524, %v5632
        %v5701 = vsub.f32 %v5526, %v5632
        %v5702 = vsub.f32 %v5528, %v5635
        %v5703 = vsub.f32 %v5530, %v5635
        %v5704 = vsub.f32 %v5534, %v5638
        %v5705 = vsub.f32 %v5536, %v5638
        %v5706 = vsub.f32 %v5538, %v5641
        %v5707 = vsub.f32 %v5540, %v5641
        %v5708 = vsub.f32 %v5544, %v5644
        %v5709 = vsub.f32 %v5546, %v5644
        %v5710 = vsub.f32 %v5548, %v5647
        %v5711 = vsub.f32 %v5550, %v5647
        %v5712 = vmul.f32 %v5648, 1.442695
        %v5713 = vpow.pop %v5712
        %v5714 = vmul.f32 %v5649, 1.442695
        %v5715 = vpow.pop %v5714
        %v5716 = vmul.f32 %v5650, 1.442695
        %v5717 = vpow.pop %v5716
        %v5718 = vmul.f32 %v5651, 1.442695
        %v5719 = vpow.pop %v5718
        %v5720 = vmul.f32 %v5652, 1.442695
        %v5721 = vpow.pop %v5720
        %v5722 = vmul.f32 %v5653, 1.442695
        %v5723 = vpow.pop %v5722
        %v5724 = vmul.f32 %v5654, 1.442695
        %v5725 = vpow.pop %v5724
        %v5726 = vmul.f32 %v5655, 1.442695
        %v5727 = vpow.pop %v5726
        %v5728 = vmul.f32 %v5656, 1.442695
        %v5729 = vpow.pop %v5728
        %v5730 = vmul.f32 %v5657, 1.442695
        %v5731 = vpow.pop %v5730
        %v5732 = vmul.f32 %v5658, 1.442695
        %v5733 = vpow.pop %v5732
        %v5734 = vmul.f32 %v5659, 1.442695
        %v5735 = vpow.pop %v5734
        %v5736 = vmul.f32 %v5660, 1.442695
        %v5737 = vpow.pop %v5736
        %v5738 = vmul.f32 %v5661, 1.442695
        %v5739 = vpow.pop %v5738
        %v5740 = vmul.f32 %v5662, 1.442695
        %v5741 = vpow.pop %v5740
        %v5742 = vmul.f32 %v5663, 1.442695
        %v5743 = vpow.pop %v5742
        %v5744 = vmul.f32 %v5664, 1.442695
        %v5745 = vpow.pop %v5744
        %v5746 = vmul.f32 %v5665, 1.442695
        %v5747 = vpow.pop %v5746
        %v5748 = vmul.f32 %v5666, 1.442695
        %v5749 = vpow.pop %v5748
        %v5750 = vmul.f32 %v5667, 1.442695
        %v5751 = vpow.pop %v5750
        %v5752 = vmul.f32 %v5668, 1.442695
        %v5753 = vpow.pop %v5752
        %v5754 = vmul.f32 %v5669, 1.442695
        %v5755 = vpow.pop %v5754
        %v5756 = vmul.f32 %v5670, 1.442695
        %v5757 = vpow.pop %v5756
        %v5758 = vmul.f32 %v5671, 1.442695
        %v5759 = vpow.pop %v5758
        %v5760 = vmul.f32 %v5672, 1.442695
        %v5761 = vpow.pop %v5760
        %v5762 = vmul.f32 %v5673, 1.442695
        %v5763 = vpow.pop %v5762
        %v5764 = vmul.f32 %v5674, 1.442695
        %v5765 = vpow.pop %v5764
        %v5766 = vmul.f32 %v5675, 1.442695
        %v5767 = vpow.pop %v5766
        %v5768 = vmul.f32 %v5676, 1.442695
        %v5769 = vpow.pop %v5768
        %v5770 = vmul.f32 %v5677, 1.442695
        %v5771 = vpow.pop %v5770
        %v5772 = vmul.f32 %v5678, 1.442695
        %v5773 = vpow.pop %v5772
        %v5774 = vmul.f32 %v5679, 1.442695
        %v5775 = vpow.pop %v5774
        %v5776 = vmul.f32 %v5680, 1.442695
        %v5777 = vpow.pop %v5776
        %v5778 = vmul.f32 %v5681, 1.442695
        %v5779 = vpow.pop %v5778
        %v5780 = vmul.f32 %v5682, 1.442695
        %v5781 = vpow.pop %v5780
        %v5782 = vmul.f32 %v5683, 1.442695
        %v5783 = vpow.pop %v5782
        %v5784 = vmul.f32 %v5684, 1.442695
        %v5785 = vpow.pop %v5784
        %v5786 = vmul.f32 %v5685, 1.442695
        %v5787 = vpow.pop %v5786
        %v5788 = vmul.f32 %v5686, 1.442695
        %v5789 = vpow.pop %v5788
        %v5790 = vmul.f32 %v5687, 1.442695
        %v5791 = vpow.pop %v5790
        %v5792 = vmul.f32 %v5688, 1.442695
        %v5793 = vpow.pop %v5792
        %v5794 = vmul.f32 %v5689, 1.442695
        %v5795 = vpow.pop %v5794
        %v5796 = vmul.f32 %v5690, 1.442695
        %v5797 = vpow.pop %v5796
        %v5798 = vmul.f32 %v5691, 1.442695
        %v5799 = vpow.pop %v5798
        %v5800 = vmul.f32 %v5692, 1.442695
        %v5801 = vpow.pop %v5800
        %v5802 = vmul.f32 %v5693, 1.442695
        %v5803 = vpow.pop %v5802
        %v5804 = vmul.f32 %v5694, 1.442695
        %v5805 = vpow.pop %v5804
        %v5806 = vmul.f32 %v5695, 1.442695
        %v5807 = vpow.pop %v5806
        %v5808 = vmul.f32 %v5696, 1.442695
        %v5809 = vpow.pop %v5808
        %v5810 = vmul.f32 %v5697, 1.442695
        %v5811 = vpow.pop %v5810
        %v5812 = vmul.f32 %v5698, 1.442695
        %v5813 = vpow.pop %v5812
        %v5814 = vmul.f32 %v5699, 1.442695
        %v5815 = vpow.pop %v5814
        %v5816 = vmul.f32 %v5700, 1.442695
        %v5817 = vpow.pop %v5816
        %v5818 = vmul.f32 %v5701, 1.442695
        %v5819 = vpow.pop %v5818
        %v5820 = vmul.f32 %v5702, 1.442695
        %v5821 = vpow.pop %v5820
        %v5822 = vmul.f32 %v5703, 1.442695
        %v5823 = vpow.pop %v5822
        %v5824 = vmul.f32 %v5704, 1.442695
        %v5825 = vpow.pop %v5824
        %v5826 = vmul.f32 %v5705, 1.442695
        %v5827 = vpow.pop %v5826
        %v5828 = vmul.f32 %v5706, 1.442695
        %v5829 = vpow.pop %v5828
        %v5830 = vmul.f32 %v5707, 1.442695
        %v5831 = vpow.pop %v5830
        %v5832 = vmul.f32 %v5708, 1.442695
        %v5833 = vpow.pop %v5832
        %v5834 = vmul.f32 %v5709, 1.442695
        %v5835 = vpow.pop %v5834
        %v5836 = vmul.f32 %v5710, 1.442695
        %v5837 = vpow.pop %v5836
        %v5838 = vmul.f32 %v5711, 1.442695
        %v5839 = vpow.pop %v5838
        %v5840 = vadd.f32 %v5713, %v5715
        %5841 = vadd.xlane.f32.xlu0 %v5840
        %v5842 = vpop.xlane.xlu0 %5841
        %v5843 = vadd.f32 %v5717, %v5719
        %5844 = vadd.xlane.f32.xlu0 %v5843
        %v5845 = vpop.xlane.xlu0 %5844
        %v5846 = vadd.f32 %v5721, %v5723
        %5847 = vadd.xlane.f32.xlu0 %v5846
        %v5848 = vpop.xlane.xlu0 %5847
        %v5849 = vadd.f32 %v5725, %v5727
        %5850 = vadd.xlane.f32.xlu0 %v5849
        %v5851 = vpop.xlane.xlu0 %5850
        %v5852 = vadd.f32 %v5729, %v5731
        %5853 = vadd.xlane.f32.xlu0 %v5852
        %v5854 = vpop.xlane.xlu0 %5853
        %v5855 = vadd.f32 %v5733, %v5735
        %5856 = vadd.xlane.f32.xlu0 %v5855
        %v5857 = vpop.xlane.xlu0 %5856
        %v5858 = vadd.f32 %v5737, %v5739
        %5859 = vadd.xlane.f32.xlu0 %v5858
        %v5860 = vpop.xlane.xlu0 %5859
        %v5861 = vadd.f32 %v5741, %v5743
        %5862 = vadd.xlane.f32.xlu0 %v5861
        %v5863 = vpop.xlane.xlu0 %5862
        %v5864 = vadd.f32 %v5745, %v5747
        %5865 = vadd.xlane.f32.xlu0 %v5864
        %v5866 = vpop.xlane.xlu0 %5865
        %v5867 = vadd.f32 %v5749, %v5751
        %5868 = vadd.xlane.f32.xlu0 %v5867
        %v5869 = vpop.xlane.xlu0 %5868
        %v5870 = vadd.f32 %v5753, %v5755
        %5871 = vadd.xlane.f32.xlu0 %v5870
        %v5872 = vpop.xlane.xlu0 %5871
        %v5873 = vadd.f32 %v5757, %v5759
        %5874 = vadd.xlane.f32.xlu0 %v5873
        %v5875 = vpop.xlane.xlu0 %5874
        %v5876 = vadd.f32 %v5761, %v5763
        %5877 = vadd.xlane.f32.xlu0 %v5876
        %v5878 = vpop.xlane.xlu0 %5877
        %v5879 = vadd.f32 %v5765, %v5767
        %5880 = vadd.xlane.f32.xlu0 %v5879
        %v5881 = vpop.xlane.xlu0 %5880
        %v5882 = vadd.f32 %v5769, %v5771
        %5883 = vadd.xlane.f32.xlu0 %v5882
        %v5884 = vpop.xlane.xlu0 %5883
        %v5885 = vadd.f32 %v5773, %v5775
        %5886 = vadd.xlane.f32.xlu0 %v5885
        %v5887 = vpop.xlane.xlu0 %5886
        %v5888 = vadd.f32 %v5777, %v5779
        %5889 = vadd.xlane.f32.xlu0 %v5888
        %v5890 = vpop.xlane.xlu0 %5889
        %v5891 = vadd.f32 %v5781, %v5783
        %5892 = vadd.xlane.f32.xlu0 %v5891
        %v5893 = vpop.xlane.xlu0 %5892
        %v5894 = vadd.f32 %v5785, %v5787
        %5895 = vadd.xlane.f32.xlu0 %v5894
        %v5896 = vpop.xlane.xlu0 %5895
        %v5897 = vadd.f32 %v5789, %v5791
        %5898 = vadd.xlane.f32.xlu0 %v5897
        %v5899 = vpop.xlane.xlu0 %5898
        %v5900 = vadd.f32 %v5793, %v5795
        %5901 = vadd.xlane.f32.xlu0 %v5900
        %v5902 = vpop.xlane.xlu0 %5901
        %v5903 = vadd.f32 %v5797, %v5799
        %5904 = vadd.xlane.f32.xlu0 %v5903
        %v5905 = vpop.xlane.xlu0 %5904
        %v5906 = vadd.f32 %v5801, %v5803
        %5907 = vadd.xlane.f32.xlu0 %v5906
        %v5908 = vpop.xlane.xlu0 %5907
        %v5909 = vadd.f32 %v5805, %v5807
        %5910 = vadd.xlane.f32.xlu0 %v5909
        %v5911 = vpop.xlane.xlu0 %5910
        %v5912 = vadd.f32 %v5809, %v5811
        %5913 = vadd.xlane.f32.xlu0 %v5912
        %v5914 = vpop.xlane.xlu0 %5913
        %v5915 = vadd.f32 %v5813, %v5815
        %5916 = vadd.xlane.f32.xlu0 %v5915
        %v5917 = vpop.xlane.xlu0 %5916
        %v5918 = vadd.f32 %v5817, %v5819
        %5919 = vadd.xlane.f32.xlu0 %v5918
        %v5920 = vpop.xlane.xlu0 %5919
        %v5921 = vadd.f32 %v5821, %v5823
        %5922 = vadd.xlane.f32.xlu0 %v5921
        %v5923 = vpop.xlane.xlu0 %5922
        %v5924 = vadd.f32 %v5825, %v5827
        %5925 = vadd.xlane.f32.xlu0 %v5924
        %v5926 = vpop.xlane.xlu0 %5925
        %v5927 = vadd.f32 %v5829, %v5831
        %5928 = vadd.xlane.f32.xlu0 %v5927
        %v5929 = vpop.xlane.xlu0 %5928
        %v5930 = vadd.f32 %v5833, %v5835
        %5931 = vadd.xlane.f32.xlu0 %v5930
        %v5932 = vpop.xlane.xlu0 %5931
        %v5933 = vadd.f32 %v5837, %v5839
        %5934 = vadd.xlane.f32.xlu0 %v5933
        %v5935 = vpop.xlane.xlu0 %5934
        %v5936 = vrcp.pop %v5842
        %v5937 = vrcp.pop %v5845
        %v5938 = vrcp.pop %v5848
        %v5939 = vrcp.pop %v5851
        %v5940 = vrcp.pop %v5854
        %v5941 = vrcp.pop %v5857
        %v5942 = vrcp.pop %v5860
        %v5943 = vrcp.pop %v5863
        %v5944 = vrcp.pop %v5866
        %v5945 = vrcp.pop %v5869
        %v5946 = vrcp.pop %v5872
        %v5947 = vrcp.pop %v5875
        %v5948 = vrcp.pop %v5878
        %v5949 = vrcp.pop %v5881
        %v5950 = vrcp.pop %v5884
        %v5951 = vrcp.pop %v5887
        %v5952 = vrcp.pop %v5890
        %v5953 = vrcp.pop %v5893
        %v5954 = vrcp.pop %v5896
        %v5955 = vrcp.pop %v5899
        %v5956 = vrcp.pop %v5902
        %v5957 = vrcp.pop %v5905
        %v5958 = vrcp.pop %v5908
        %v5959 = vrcp.pop %v5911
        %v5960 = vrcp.pop %v5914
        %v5961 = vrcp.pop %v5917
        %v5962 = vrcp.pop %v5920
        %v5963 = vrcp.pop %v5923
        %v5964 = vrcp.pop %v5926
        %v5965 = vrcp.pop %v5929
        %v5966 = vrcp.pop %v5932
        %v5967 = vrcp.pop %v5935
        %v5968 = vpack.c.bf16 %v5717, %v5713
        %v5969 = vpack.c.bf16 %v5719, %v5715
        %v5970 = vpack.c.bf16 %v5725, %v5721
        %v5971 = vpack.c.bf16 %v5727, %v5723
        %v5972 = vpack.c.bf16 %v5733, %v5729
        %v5973 = vpack.c.bf16 %v5735, %v5731
        %v5974 = vpack.c.bf16 %v5741, %v5737
        %v5975 = vpack.c.bf16 %v5743, %v5739
        %v5976 = vpack.c.bf16 %v5749, %v5745
        %v5977 = vpack.c.bf16 %v5751, %v5747
        %v5978 = vpack.c.bf16 %v5757, %v5753
        %v5979 = vpack.c.bf16 %v5759, %v5755
        %v5980 = vpack.c.bf16 %v5765, %v5761
        %v5981 = vpack.c.bf16 %v5767, %v5763
        %v5982 = vpack.c.bf16 %v5773, %v5769
        %v5983 = vpack.c.bf16 %v5775, %v5771
        %v5984 = vpack.c.bf16 %v5781, %v5777
        %v5985 = vpack.c.bf16 %v5783, %v5779
        %v5986 = vpack.c.bf16 %v5789, %v5785
        %v5987 = vpack.c.bf16 %v5791, %v5787
        %v5988 = vpack.c.bf16 %v5797, %v5793
        %v5989 = vpack.c.bf16 %v5799, %v5795
        %v5990 = vpack.c.bf16 %v5805, %v5801
        %v5991 = vpack.c.bf16 %v5807, %v5803
        %v5992 = vpack.c.bf16 %v5813, %v5809
        %v5993 = vpack.c.bf16 %v5815, %v5811
        %v5994 = vpack.c.bf16 %v5821, %v5817
        %v5995 = vpack.c.bf16 %v5823, %v5819
        %v5996 = vpack.c.bf16 %v5829, %v5825
        %v5997 = vpack.c.bf16 %v5831, %v5827
        %v5998 = vpack.c.bf16 %v5837, %v5833
        %v5999 = vpack.c.bf16 %v5839, %v5835
        %6000 = vmatprep.subr.bf16.mxu0 0
        %6001 = vmatpush1.bf16.msra.mxu0 %v5291
        %6002 = vmatprep.subr.bf16.mxu0 0
        %6003 = vmatpush1.bf16.msra.mxu0 %v5292
        %6004 = vmatprep.subr.bf16.mxu0 0
        %6005 = vmatpush1.bf16.msra.mxu0 %v5293
        %6006 = vmatprep.subr.bf16.mxu0 0
        %6007 = vmatpush1.bf16.msra.mxu0 %v5294
        %6008 = vmatprep.subr.bf16.mxu0 0
        %6009 = vmatpush1.bf16.msra.mxu0 %v5295
        %6010 = vmatprep.subr.bf16.mxu0 0
        %6011 = vmatpush1.bf16.msra.mxu0 %v5296
        %6012 = vmatprep.subr.bf16.mxu0 0
        %6013 = vmatpush1.bf16.msra.mxu0 %v5297
        %6014 = vmatprep.subr.bf16.mxu0 0
        %6015 = vmatpush1.bf16.msra.mxu0 %v5298
        %6016 = vmatprep.subr.bf16.mxu0 0
        %6017 = vmatpush1.bf16.msra.mxu0 %v5299
        %6018 = vmatprep.subr.bf16.mxu0 0
        %6019 = vmatpush1.bf16.msra.mxu0 %v5300
        %6020 = vmatprep.subr.bf16.mxu0 0
        %6021 = vmatpush1.bf16.msra.mxu0 %v5301
        %6022 = vmatprep.subr.bf16.mxu0 0
        %6023 = vmatpush1.bf16.msra.mxu0 %v5302
        %6024 = vmatprep.subr.bf16.mxu0 0
        %6025 = vmatpush1.bf16.msra.mxu0 %v5303
        %6026 = vmatprep.subr.bf16.mxu0 0
        %6027 = vmatpush1.bf16.msra.mxu0 %v5304
        %6028 = vmatprep.subr.bf16.mxu0 0
        %6029 = vmatpush1.bf16.msra.mxu0 %v5305
        %6030 = vmatprep.subr.bf16.mxu0 0
        %6031 = vmatpush1.bf16.msra.mxu0 %v5306
        %6032 = vmatprep.mubr.bf16.mxu0 %v5969
        %6033 = vmatmul.mubr.bf16.gmra.mrb[0].mxu0 %v5968
        %v6034 = vpop.f32.mrb[0].mxu0
        %v6035 = vadd.f32 0.0, %v6034
        %v6036 = vpop.f32.mrb[0].mxu0
        %v6037 = vpop.f32.mrb[0].mxu0
        %v6038 = vadd.f32 0.0, %v6037
        %v6039 = vpop.f32.mrb[0].mxu0
        %6040 = vmatprep.mubr.bf16.mxu0 %v5971
        %6041 = vmatmul.mubr.bf16.gmra.mrb[0].mxu0 %v5970
        %v6042 = vpop.f32.mrb[0].mxu0
        %v6043 = vadd.f32 0.0, %v6042
        %v6044 = vpop.f32.mrb[0].mxu0
        %v6045 = vpop.f32.mrb[0].mxu0
        %v6046 = vadd.f32 0.0, %v6045
        %v6047 = vpop.f32.mrb[0].mxu0
        %6048 = vmatprep.mubr.bf16.mxu0 %v5973
        %6049 = vmatmul.mubr.bf16.gmra.mrb[0].mxu0 %v5972
        %v6050 = vpop.f32.mrb[0].mxu0
        %v6051 = vadd.f32 0.0, %v6050
        %v6052 = vpop.f32.mrb[0].mxu0
        %v6053 = vpop.f32.mrb[0].mxu0
        %v6054 = vadd.f32 0.0, %v6053
        %v6055 = vpop.f32.mrb[0].mxu0
        %6056 = vmatprep.mubr.bf16.mxu0 %v5975
        %6057 = vmatmul.mubr.bf16.gmra.mrb[0].mxu0 %v5974
        %v6058 = vpop.f32.mrb[0].mxu0
        %v6059 = vadd.f32 0.0, %v6058
        %v6060 = vpop.f32.mrb[0].mxu0
        %v6061 = vpop.f32.mrb[0].mxu0
        %v6062 = vadd.f32 0.0, %v6061
        %v6063 = vpop.f32.mrb[0].mxu0
        %6064 = vmatprep.mubr.bf16.mxu0 %v5977
        %6065 = vmatmul.mubr.bf16.gmra.mrb[0].mxu0 %v5976
        %v6066 = vpop.f32.mrb[0].mxu0
        %v6067 = vadd.f32 0.0, %v6066
        %v6068 = vpop.f32.mrb[0].mxu0
        %v6069 = vpop.f32.mrb[0].mxu0
        %v6070 = vadd.f32 0.0, %v6069
        %v6071 = vpop.f32.mrb[0].mxu0
        %6072 = vmatprep.mubr.bf16.mxu0 %v5979
        %6073 = vmatmul.mubr.bf16.gmra.mrb[0].mxu0 %v5978
        %v6074 = vpop.f32.mrb[0].mxu0
        %v6075 = vadd.f32 0.0, %v6074
        %v6076 = vpop.f32.mrb[0].mxu0
        %v6077 = vpop.f32.mrb[0].mxu0
        %v6078 = vadd.f32 0.0, %v6077
        %v6079 = vpop.f32.mrb[0].mxu0
        %6080 = vmatprep.mubr.bf16.mxu0 %v5981
        %6081 = vmatmul.mubr.bf16.gmra.mrb[0].mxu0 %v5980
        %v6082 = vpop.f32.mrb[0].mxu0
        %v6083 = vadd.f32 0.0, %v6082
        %v6084 = vpop.f32.mrb[0].mxu0
        %v6085 = vpop.f32.mrb[0].mxu0
        %v6086 = vadd.f32 0.0, %v6085
        %v6087 = vpop.f32.mrb[0].mxu0
        %6088 = vmatprep.mubr.bf16.mxu0 %v5983
        %6089 = vmatmul.mubr.bf16.gmra.mrb[0].mxu0 %v5982
        %v6090 = vpop.f32.mrb[0].mxu0
        %v6091 = vadd.f32 0.0, %v6090
        %v6092 = vpop.f32.mrb[0].mxu0
        %v6093 = vpop.f32.mrb[0].mxu0
        %v6094 = vadd.f32 0.0, %v6093
        %v6095 = vpop.f32.mrb[0].mxu0
        %6096 = vmatprep.mubr.bf16.mxu0 %v5985
        %6097 = vmatmul.mubr.bf16.gmra.mrb[0].mxu0 %v5984
        %v6098 = vpop.f32.mrb[0].mxu0
        %v6099 = vadd.f32 0.0, %v6098
        %v6100 = vpop.f32.mrb[0].mxu0
        %v6101 = vpop.f32.mrb[0].mxu0
        %v6102 = vadd.f32 0.0, %v6101
        %v6103 = vpop.f32.mrb[0].mxu0
        %6104 = vmatprep.mubr.bf16.mxu0 %v5987
        %6105 = vmatmul.mubr.bf16.gmra.mrb[0].mxu0 %v5986
        %v6106 = vpop.f32.mrb[0].mxu0
        %v6107 = vadd.f32 0.0, %v6106
        %v6108 = vpop.f32.mrb[0].mxu0
        %v6109 = vpop.f32.mrb[0].mxu0
        %v6110 = vadd.f32 0.0, %v6109
        %v6111 = vpop.f32.mrb[0].mxu0
        %6112 = vmatprep.mubr.bf16.mxu0 %v5989
        %6113 = vmatmul.mubr.bf16.gmra.mrb[0].mxu0 %v5988
        %v6114 = vpop.f32.mrb[0].mxu0
        %v6115 = vadd.f32 0.0, %v6114
        %v6116 = vpop.f32.mrb[0].mxu0
        %v6117 = vpop.f32.mrb[0].mxu0
        %v6118 = vadd.f32 0.0, %v6117
        %v6119 = vpop.f32.mrb[0].mxu0
        %6120 = vmatprep.mubr.bf16.mxu0 %v5991
        %6121 = vmatmul.mubr.bf16.gmra.mrb[0].mxu0 %v5990
        %v6122 = vpop.f32.mrb[0].mxu0
        %v6123 = vadd.f32 0.0, %v6122
        %v6124 = vpop.f32.mrb[0].mxu0
        %v6125 = vpop.f32.mrb[0].mxu0
        %v6126 = vadd.f32 0.0, %v6125
        %v6127 = vpop.f32.mrb[0].mxu0
        %6128 = vmatprep.mubr.bf16.mxu0 %v5993
        %6129 = vmatmul.mubr.bf16.gmra.mrb[0].mxu0 %v5992
        %v6130 = vpop.f32.mrb[0].mxu0
        %v6131 = vadd.f32 0.0, %v6130
        %v6132 = vpop.f32.mrb[0].mxu0
        %v6133 = vpop.f32.mrb[0].mxu0
        %v6134 = vadd.f32 0.0, %v6133
        %v6135 = vpop.f32.mrb[0].mxu0
        %6136 = vmatprep.mubr.bf16.mxu0 %v5995
        %6137 = vmatmul.mubr.bf16.gmra.mrb[0].mxu0 %v5994
        %v6138 = vpop.f32.mrb[0].mxu0
        %v6139 = vadd.f32 0.0, %v6138
        %v6140 = vpop.f32.mrb[0].mxu0
        %v6141 = vpop.f32.mrb[0].mxu0
        %v6142 = vadd.f32 0.0, %v6141
        %v6143 = vpop.f32.mrb[0].mxu0
        %6144 = vmatprep.mubr.bf16.mxu0 %v5997
        %6145 = vmatmul.mubr.bf16.gmra.mrb[0].mxu0 %v5996
        %v6146 = vpop.f32.mrb[0].mxu0
        %v6147 = vadd.f32 0.0, %v6146
        %v6148 = vpop.f32.mrb[0].mxu0
        %v6149 = vpop.f32.mrb[0].mxu0
        %v6150 = vadd.f32 0.0, %v6149
        %v6151 = vpop.f32.mrb[0].mxu0
        %6152 = vmatprep.mubr.bf16.mxu0 %v5999
        %6153 = vmatmul.mubr.bf16.gmra.mrb[0].mxu0 %v5998
        %v6154 = vpop.f32.mrb[0].mxu0
        %v6155 = vadd.f32 0.0, %v6154
        %v6156 = vpop.f32.mrb[0].mxu0
        %v6157 = vpop.f32.mrb[0].mxu0
        %v6158 = vadd.f32 0.0, %v6157
        %v6159 = vpop.f32.mrb[0].mxu0
        %6160 = vdwg.mxu0
        %v6161 = vmul.f32 %v6035, %v5936
        %v6162 = vmul.f32 %v6038, %v5937
        %v6163 = vmul.f32 %v6043, %v5938
        %v6164 = vmul.f32 %v6046, %v5939
        %v6165 = vmul.f32 %v6051, %v5940
        %v6166 = vmul.f32 %v6054, %v5941
        %v6167 = vmul.f32 %v6059, %v5942
        %v6168 = vmul.f32 %v6062, %v5943
        %v6169 = vmul.f32 %v6067, %v5944
        %v6170 = vmul.f32 %v6070, %v5945
        %v6171 = vmul.f32 %v6075, %v5946
        %v6172 = vmul.f32 %v6078, %v5947
        %v6173 = vmul.f32 %v6083, %v5948
        %v6174 = vmul.f32 %v6086, %v5949
        %v6175 = vmul.f32 %v6091, %v5950
        %v6176 = vmul.f32 %v6094, %v5951
        %v6177 = vmul.f32 %v6099, %v5952
        %v6178 = vmul.f32 %v6102, %v5953
        %v6179 = vmul.f32 %v6107, %v5954
        %v6180 = vmul.f32 %v6110, %v5955
        %v6181 = vmul.f32 %v6115, %v5956
        %v6182 = vmul.f32 %v6118, %v5957
        %v6183 = vmul.f32 %v6123, %v5958
        %v6184 = vmul.f32 %v6126, %v5959
        %v6185 = vmul.f32 %v6131, %v5960
        %v6186 = vmul.f32 %v6134, %v5961
        %v6187 = vmul.f32 %v6139, %v5962
        %v6188 = vmul.f32 %v6142, %v5963
        %v6189 = vmul.f32 %v6147, %v5964
        %v6190 = vmul.f32 %v6150, %v5965
        %v6191 = vmul.f32 %v6155, %v5966
        %v6192 = vmul.f32 %v6158, %v5967
        %6193 = vrot.lane.b32.xlu0 %v274, 32
        %v6194 = vpop.permute.xlu0 %6193
        %v6195 = vsel %vm749, %v6194, 0
        %v6198 = vsel %vm749, %v6161, 0
        %v6201 = vsel %vm749, %v6162, 0
        %v6204 = vsel %vm749, %v6163, 0
        %v6207 = vsel %vm749, %v6164, 0
        %v6210 = vsel %vm749, %v6165, 0
        %v6213 = vsel %vm749, %v6166, 0
        %v6216 = vsel %vm749, %v6167, 0
        %v6219 = vsel %vm749, %v6168, 0
        %v6222 = vsel %vm749, %v6169, 0
        %v6225 = vsel %vm749, %v6170, 0
        %v6228 = vsel %vm749, %v6171, 0
        %v6231 = vsel %vm749, %v6172, 0
        %v6234 = vsel %vm749, %v6173, 0
        %v6237 = vsel %vm749, %v6174, 0
        %v6240 = vsel %vm749, %v6175, 0
        %v6243 = vsel %vm749, %v6176, 0
        %v6246 = vsel %vm749, %v6177, 0
        %v6249 = vsel %vm749, %v6178, 0
        %v6252 = vsel %vm749, %v6179, 0
        %v6255 = vsel %vm749, %v6180, 0
        %v6258 = vsel %vm749, %v6181, 0
        %v6261 = vsel %vm749, %v6182, 0
        %v6264 = vsel %vm749, %v6183, 0
        %v6267 = vsel %vm749, %v6184, 0
        %v6270 = vsel %vm749, %v6185, 0
        %v6273 = vsel %vm749, %v6186, 0
        %v6276 = vsel %vm749, %v6187, 0
        %v6279 = vsel %vm749, %v6188, 0
        %v6282 = vsel %vm749, %v6189, 0
        %v6285 = vsel %vm749, %v6190, 0
        %v6288 = vsel %vm749, %v6191, 0
        %v6291 = vsel %vm749, %v6192, 0
        %6293 = vmatprep.subr.mxu0 0.0
        %6294 = vmatpush1.xpose.msra.mxu0 %v6198
        %6295 = vmatprep.subr.mxu0 0.0
        %6296 = vmatpush1.xpose.msra.mxu0 %v6201
        %6297 = vmatprep.subr.mxu0 0.0
        %6298 = vmatpush1.xpose.msra.mxu0 %v6204
        %6299 = vmatprep.subr.mxu0 0.0
        %6300 = vmatpush1.xpose.msra.mxu0 %v6207
        %6301 = vmatprep.subr.mxu0 0.0
        %6302 = vmatpush1.xpose.msra.mxu0 %v6210
        %6303 = vmatprep.subr.mxu0 0.0
        %6304 = vmatpush1.xpose.msra.mxu0 %v6213
        %6305 = vmatprep.subr.mxu0 0.0
        %6306 = vmatpush1.xpose.msra.mxu0 %v6216
        %6307 = vmatprep.subr.mxu0 0.0
        %6308 = vmatpush1.xpose.msra.mxu0 %v6219
        %6309 = vmatprep.subr.mxu0 0.0
        %6310 = vmatpush1.xpose.msra.mxu0 %v6222
        %6311 = vmatprep.subr.mxu0 0.0
        %6312 = vmatpush1.xpose.msra.mxu0 %v6225
        %6313 = vmatprep.subr.mxu0 0.0
        %6314 = vmatpush1.xpose.msra.mxu0 %v6228
        %6315 = vmatprep.subr.mxu0 0.0
        %6316 = vmatpush1.xpose.msra.mxu0 %v6231
        %6317 = vmatprep.subr.mxu0 0.0
        %6318 = vmatpush1.xpose.msra.mxu0 %v6234
        %6319 = vmatprep.subr.mxu0 0.0
        %6320 = vmatpush1.xpose.msra.mxu0 %v6237
        %6321 = vmatprep.subr.mxu0 0.0
        %6322 = vmatpush1.xpose.msra.mxu0 %v6240
        %6323 = vmatprep.subr.mxu0 0.0
        %6324 = vmatpush1.xpose.msra.mxu0 %v6243
        %6325 = vmatprep.subr.mxu0 0.0
        %6326 = vmatpush1.xpose.msra.mxu0 %v6246
        %6327 = vmatprep.subr.mxu0 0.0
        %6328 = vmatpush1.xpose.msra.mxu0 %v6249
        %6329 = vmatprep.subr.mxu0 0.0
        %6330 = vmatpush1.xpose.msra.mxu0 %v6252
        %6331 = vmatprep.subr.mxu0 0.0
        %6332 = vmatpush1.xpose.msra.mxu0 %v6255
        %6333 = vmatprep.subr.mxu0 0.0
        %6334 = vmatpush1.xpose.msra.mxu0 %v6258
        %6335 = vmatprep.subr.mxu0 0.0
        %6336 = vmatpush1.xpose.msra.mxu0 %v6261
        %6337 = vmatprep.subr.mxu0 0.0
        %6338 = vmatpush1.xpose.msra.mxu0 %v6264
        %6339 = vmatprep.subr.mxu0 0.0
        %6340 = vmatpush1.xpose.msra.mxu0 %v6267
        %6341 = vmatprep.subr.mxu0 0.0
        %6342 = vmatpush1.xpose.msra.mxu0 %v6270
        %6343 = vmatprep.subr.mxu0 0.0
        %6344 = vmatpush1.xpose.msra.mxu0 %v6273
        %6345 = vmatprep.subr.mxu0 0.0
        %6346 = vmatpush1.xpose.msra.mxu0 %v6276
        %6347 = vmatprep.subr.mxu0 0.0
        %6348 = vmatpush1.xpose.msra.mxu0 %v6279
        %6349 = vmatprep.subr.mxu0 0.0
        %6350 = vmatpush1.xpose.msra.mxu0 %v6282
        %6351 = vmatprep.subr.mxu0 0.0
        %6352 = vmatpush1.xpose.msra.mxu0 %v6285
        %6353 = vmatprep.subr.mxu0 0.0
        %6354 = vmatpush1.xpose.msra.mxu0 %v6288
        %6355 = vmatprep.subr.mxu0 0.0
        %6356 = vmatpush1.xpose.msra.mxu0 %v6291
        %6357 = vmatprep.mubr.f32.mxu0 0.0
        %6358 = vmatmul.mubr.f32.gmra.mrb[0].mxu0 %v6195
        %v6359 = vpop.f32.mrb[0].mxu0
        %v6360 = vadd.f32 0.0, %v6359
        %v6361 = vpop.f32.mrb[0].mxu0
        %v6362 = vadd.f32 0.0, %v6361
        %6363 = vdwg.mxu0
        %v6364 = vadd.f32 %v4842, %v6360
        %v6365 = vadd.f32 %v4843, %v6362
        %v6366 = vld [vmem:[%s3] sm:$0xf]
        %6368 = vset.pattern.permute.xlu0 0
        %6369 = vperm.xlu0 %6368, %v6366
        %v6370 = vpop.permute.xlu0 %6369
        %v6372 = vadd.f32 %v6364, %v6370
        %v6373 = vadd.f32 %v6365, %v6370
        %v6376 = vcombine.low %v6372, %v6373
        %6378 = vst [vmem:[%s190] sm:$0xff] %v6376
        %s6379 = sand.u32 %s115, 1
        %s6380 = scalar_lea.sflag [#allocation3], %s6379
        %s6381 = sand.u32 %s115, 1
        %s6382 = smul.addr %s6381, 8
        %s6383 = scalar_lea.vmem [#allocation2], %s6382
        // Predicated region
        $region37: #{tpu_custom_call.1} parent=35 // pred_check
          %p6384 = pneg %p125
        $region38: #{tpu_custom_call.1} parent=35 // pred_check_branch
          %6386 = sbr.rel (%p6384) target = $region40
        $region39: #{tpu_custom_call.1} parent=35 // pred_region
          %s6388 = ssub.s32 128, 128
          %6389 = vsyncadd %s6380, %s6388
          %s6390 = smul.addr %s18, 2
          %s6391 = smul.addr %s6390, 64
          %s6392 = scalar_lea.hbm %s4, %s6391
          %s6394 = sshll.u32 %s6383, 4
          %s6395 = int_to_ptr.vmem [resolvable:$true] %s6394
          %6397 = dma.vmem_to_hbm [thread:$0]  %s6395, 128, %s6392, %s6380
        $region40: #{tpu_custom_call.1} parent=35 // pred_fallthru
          _
      $region36: #{tpu_custom_call.1} parent=5 // pred_fallthru
        _
      %p6398 = scmp.le.s32.totalorder 2, %s13
      // Predicated region
      $region41: #{tpu_custom_call.1} parent=5 // pred_check
        %p6399 = pneg %p6398
      $region42: #{tpu_custom_call.1} parent=5 // pred_check_branch
        %6401 = sbr.rel (%p6399) target = $region44
      $region43: #{tpu_custom_call.1} parent=5 // pred_region
        %s6402 = ssub.s32 %s13, 2
        // Predicated region
        $region45: #{tpu_custom_call.1} parent=43 // pred_check
          %p6403 = pneg %p131
        $region46: #{tpu_custom_call.1} parent=43 // pred_check_branch
          %6405 = sbr.rel (%p6403) target = $region48
        $region47: #{tpu_custom_call.1} parent=43 // pred_region
          %s6406 = sand.u32 %s116, 1
          %s6407 = scalar_lea.sflag [#allocation3], %s6406
          %s6408 = sand.u32 %s116, 1
          %s6409 = smul.addr %s6408, 8
          %s6410 = scalar_lea.vmem [#allocation2], %s6409
          %6411 = dma.done %s6407, 128
        $region48: #{tpu_custom_call.1} parent=43 // pred_fallthru
          _
      $region44: #{tpu_custom_call.1} parent=5 // pred_fallthru
        _
    $region6: #{tpu_custom_call.1} parent=1 // loop_footer
      %s17 = sadd.s32 1, %s13
    $region7: #{tpu_custom_call.1} parent=1 // loop_footer_branch
      %12 = sbr.rel target = $region3
    $region8: #{tpu_custom_call.1} parent=1 // loop_exit
      _
    %6412 = vsyncpa [#allocation3], 1
    %s6413 = scalar_lea.sflag [#allocation3], 1
    %6414 = vsyncpa %s6413, 1

</llo_original>
